<compile_context>
chip_gen: v7x
topology: tpu7x:2x2x1
jax: 0.10.0
libtpu: 0.0.40
codegen_flags: <defaults>
</compile_context>

<pallas_src>
import math

import jax
import jax.numpy as jnp
import numpy as np
from jax import lax
from jax.experimental import pallas as pl
from jax.experimental.pallas import tpu as pltpu


def _layernorm(v, g, b, eps=1e-5):
    mu = jnp.mean(v, axis=-1, keepdims=True)
    var = jnp.mean((v - mu) ** 2, axis=-1, keepdims=True)
    return (v - mu) * lax.rsqrt(var + eps) * g + b


# row indices inside the packed (15, D) bias / layernorm parameter array
_PACK_NAMES = ['bq1', 'bk1', 'bv1', 'bo1', 'bq2', 'bk2', 'bv2', 'bo2',
               'b2', 'g1', 'be1', 'g2', 'be2', 'g3', 'be3']
_PACK_IDX = {n: i for i, n in enumerate(_PACK_NAMES)}
_MAT_NAMES = ['wq1', 'wk1', 'wv1', 'wo1', 'wq2', 'wk2', 'wv2', 'wo2', 'w1', 'w2']


def make_decoder_kernel(B, T, S, D, Di, H):
    assert D % H == 0, "dim_model must be divisible by nr_heads"
    dh = D // H
    scale = 1.0 / math.sqrt(dh)
    bf16 = jnp.bfloat16
    f32 = jnp.float32

    def kernel(tgt_ref, enc_ref,
               wq1, wk1, wv1, wo1,
               wq2, wk2, wv2, wo2,
               w1, w2, bias_ref, b1_ref,
               out_ref, self_attn_ref, cross_attn_ref,
               ctx_ref):
        x = tgt_ref[...]                       # (B*T, D) f32
        enc = enc_ref[...]                     # (B*S, D) f32
        biases = bias_ref[...]                 # (15, D)  f32

        def bvec(name):
            i = _PACK_IDX[name]
            return biases[i:i + 1, :]          # (1, D) f32

        # causal mask built once (reused for every batch element / head)
        row = lax.broadcasted_iota(jnp.int32, (T, T), 0)
        col = lax.broadcasted_iota(jnp.int32, (T, T), 1)
        causal_keep = col <= row

        def mha(q_in, kv_in, Lq, Lk, wq, wk, wv, wo, bq, bk, bv, bo,
                attn_ref, keep_mask):
            # Projections with the batch folded into the row dim (B*L rows);
            # bf16 MXU operands, f32 accumulation, biases added in f32.
            q = jnp.dot(q_in.astype(bf16), wq[...],
                        preferred_element_type=f32) + bq
            k = jnp.dot(kv_in.astype(bf16), wk[...],
                        preferred_element_type=f32) + bk
            v = jnp.dot(kv_in.astype(bf16), wv[...],
                        preferred_element_type=f32) + bv
            # fold 1/sqrt(dh) into q: B*L*D mults instead of B*H*Lq*Lk
            qb = (q * scale).astype(bf16)
            kb = k.astype(bf16)
            vb = v.astype(bf16)
            wo_b = wo[...]                     # (D, D) bf16

            for b in range(B):                 # tiny static loops (B, H small)
                qbb = qb[b * Lq:(b + 1) * Lq, :]   # (Lq, D)
                kbb = kb[b * Lk:(b + 1) * Lk, :]   # (Lk, D)
                vbb = vb[b * Lk:(b + 1) * Lk, :]
                acc = jnp.zeros((Lq, D), f32)
                for h in range(H):
                    qh = qbb[:, h * dh:(h + 1) * dh]
                    kh = kbb[:, h * dh:(h + 1) * dh]
                    vh = vbb[:, h * dh:(h + 1) * dh]
                    # contract last dims directly -> no explicit k transpose
                    s = lax.dot_general(qh, kh, (((1,), (1,)), ((), ())),
                                        preferred_element_type=f32)  # (Lq, Lk)
                    if keep_mask is not None:
                        s = jnp.where(keep_mask, s, -1e30)           # f32 mask
                    m = jnp.max(s, axis=-1, keepdims=True)
                    e = jnp.exp(s - m)
                    a = e * pl.reciprocal(jnp.sum(e, axis=-1, keepdims=True),
                                          approx=True)
                    attn_ref[b, h, :, :] = a
                    o_h = jnp.dot(a.astype(bf16), vh,
                                  preferred_element_type=f32)        # (Lq, dh)
                    # fold output projection per head -> no lane-axis concat
                    acc = acc + jnp.dot(o_h.astype(bf16),
                                        wo_b[h * dh:(h + 1) * dh, :],
                                        preferred_element_type=f32)
                ctx_ref[b * Lq:(b + 1) * Lq, :] = acc
            return ctx_ref[...] + bo

        # 1) masked self-attention (dropout = identity), residual + layernorm
        self_reps = mha(x, x, T, T, wq1, wk1, wv1, wo1,
                        bvec('bq1'), bvec('bk1'), bvec('bv1'), bvec('bo1'),
                        self_attn_ref, causal_keep)
        y1 = _layernorm(x + self_reps, bvec('g1'), bvec('be1'))

        # 2) cross-attention, residual + layernorm
        cross_reps = mha(y1, enc, T, S, wq2, wk2, wv2, wo2,
                         bvec('bq2'), bvec('bk2'), bvec('bv2'), bvec('bo2'),
                         cross_attn_ref, None)
        y2 = _layernorm(cross_reps + y1, bvec('g2'), bvec('be2'))

        # 3) feed-forward: Linear -> ReLU -> Linear, residual + layernorm
        h1 = jnp.maximum(
            jnp.dot(y2.astype(bf16), w1[...], preferred_element_type=f32)
            + b1_ref[...], 0.0)
        ffn = jnp.dot(h1.astype(bf16), w2[...], preferred_element_type=f32) \
            + bvec('b2')
        out_ref[...] = _layernorm(y2 + ffn, bvec('g3'), bvec('be3'))

    return kernel


def decoder_layer(target, encoder_reps, params, nr_heads=1):
    B, T, D = target.shape
    _, S, _ = encoder_reps.shape
    Di = params['w1'].shape[1]
    H = nr_heads

    kernel = make_decoder_kernel(B, T, S, D, Di, H)

    # fold batch into the matmul row dimension (free reshape at the XLA level)
    tgt2d = target.reshape(B * T, D)
    enc2d = encoder_reps.reshape(B * S, D)

    # matrix weights fed to the MXU in bf16 (halves weight VMEM too)
    mats = [params[n].astype(jnp.bfloat16) for n in _MAT_NAMES]
    # all (1, D) bias / layernorm params packed into a single (15, D) f32 array
    bias_pack = jnp.concatenate(
        [params[n].reshape(1, D) for n in _PACK_NAMES], axis=0)
    b1 = params['b1'].reshape(1, Di)

    out_shapes = (
        jax.ShapeDtypeStruct((B * T, D), jnp.float32),
        jax.ShapeDtypeStruct((B, H, T, T), jnp.float32),
        jax.ShapeDtypeStruct((B, H, T, S), jnp.float32),
    )
    out2d, self_attn, cross_attn = pl.pallas_call(
        kernel,
        out_shape=out_shapes,
        scratch_shapes=[pltpu.VMEM((B * T, D), jnp.float32)],
        compiler_params=pltpu.CompilerParams(vmem_limit_bytes=32 * 1024 * 1024),
    )(tgt2d, enc2d, *mats, bias_pack, b1)
    return out2d.reshape(B, T, D), self_attn, cross_attn


def init_params(key, dim_model, dim_inter=None):
    D = dim_model
    Di = D if dim_inter is None else dim_inter
    shapes = {
        'wq1': (D, D), 'bq1': (1, D), 'wk1': (D, D), 'bk1': (1, D),
        'wv1': (D, D), 'bv1': (1, D), 'wo1': (D, D), 'bo1': (1, D),
        'wq2': (D, D), 'bq2': (1, D), 'wk2': (D, D), 'bk2': (1, D),
        'wv2': (D, D), 'bv2': (1, D), 'wo2': (D, D), 'bo2': (1, D),
        'w1': (D, Di), 'b1': (1, Di), 'w2': (Di, D), 'b2': (1, D),
    }
    params = {}
    keys = jax.random.split(key, len(shapes))
    for (name, shp), k in zip(shapes.items(), keys):
        params[name] = jax.random.normal(k, shp, jnp.float32) * 0.1
    for g, b in [('g1', 'be1'), ('g2', 'be2'), ('g3', 'be3')]:
        params[g] = jnp.ones((1, D), jnp.float32)
        params[b] = jnp.zeros((1, D), jnp.float32)
    return params


def reference(target, enc, p, H):
    """NumPy float64 reference of the same forward pass (eval mode)."""
    t = np.asarray(target, np.float64)
    e = np.asarray(enc, np.float64)
    pp = {k: np.asarray(v, np.float64) for k, v in p.items()}

    def ln(v, g, b, eps=1e-5):
        mu = v.mean(-1, keepdims=True)
        var = ((v - mu) ** 2).mean(-1, keepdims=True)
        return (v - mu) / np.sqrt(var + eps) * g + b

    def mha(qi, kvi, wq, bq, wk, bk, wv, bv, wo, bo, causal):
        B, Lq, D = qi.shape
        Lk = kvi.shape[1]
        dh = D // H
        q = qi @ wq + bq
        k = kvi @ wk + bk
        v = kvi @ wv + bv
        qh = q.reshape(B, Lq, H, dh).transpose(0, 2, 1, 3)
        kh = k.reshape(B, Lk, H, dh).transpose(0, 2, 1, 3)
        vh = v.reshape(B, Lk, H, dh).transpose(0, 2, 1, 3)
        s = np.einsum('bhqd,bhkd->bhqk', qh, kh) / math.sqrt(dh)
        if causal:
            mask = np.tril(np.ones((Lq, Lk), bool))
            s = np.where(mask, s, -1e30)
        s = s - s.max(-1, keepdims=True)
        a = np.exp(s)
        a = a / a.sum(-1, keepdims=True)
        o = np.einsum('bhqk,bhkd->bhqd', a, vh)
        o = o.transpose(0, 2, 1, 3).reshape(B, Lq, D)
        return o @ wo + bo, a

    sr, sa = mha(t, t, pp['wq1'], pp['bq1'], pp['wk1'], pp['bk1'],
                 pp['wv1'], pp['bv1'], pp['wo1'], pp['bo1'], causal=True)
    y1 = ln(t + sr, pp['g1'], pp['be1'])
    cr, ca = mha(y1, e, pp['wq2'], pp['bq2'], pp['wk2'], pp['bk2'],
                 pp['wv2'], pp['bv2'], pp['wo2'], pp['bo2'], causal=False)
    y2 = ln(cr + y1, pp['g2'], pp['be2'])
    ffn = np.maximum(y2 @ pp['w1'] + pp['b1'], 0.0) @ pp['w2'] + pp['b2']
    out = ln(y2 + ffn, pp['g3'], pp['be3'])
    return out, sa, ca


if __name__ == "__main__":
    # batch, target len, source len, dim_model, dim_inter (all lane/sublane friendly)
    B, T, S, D, Di = 2, 8, 16, 128, 256
    key = jax.random.PRNGKey(0)
    k_tgt, k_enc, k_par = jax.random.split(key, 3)
    target = jax.random.normal(k_tgt, (B, T, D), jnp.float32)
    encoder_reps = jax.random.normal(k_enc, (B, S, D), jnp.float32)
    params = init_params(k_par, dim_model=D, dim_inter=Di)

    for H in (4, 1):  # multi-head and the module's default single head
        out, self_attn, cross_attn = decoder_layer(
            target, encoder_reps, params, nr_heads=H)
        jax.block_until_ready((out, self_attn, cross_attn))

        ref_out, ref_sa, ref_ca = reference(target, encoder_reps, params, H)
        assert out.shape == (B, T, D)
        assert self_attn.shape == (B, H, T, T)
        assert cross_attn.shape == (B, H, T, S)
        # bf16 MXU operands -> bf16-appropriate tolerances vs f64 reference
        np.testing.assert_allclose(np.asarray(out), ref_out,
                                   atol=3e-2, rtol=3e-2)
        np.testing.assert_allclose(np.asarray(self_attn), ref_sa,
                                   atol=2e-2, rtol=2e-2)
        np.testing.assert_allclose(np.asarray(cross_attn), ref_ca,
                                   atol=2e-2, rtol=2e-2)

    print("KERNEL_OK")
</pallas_src>

<mosaic_0001>
module attributes {stable_mosaic.version = 11 : i64} {
  func.func @kernel(%arg0: memref<16x128xf32, #tpu.memory_space<vmem>>, %arg1: memref<32x128xf32, #tpu.memory_space<vmem>>, %arg2: memref<128x128xbf16, #tpu.memory_space<vmem>>, %arg3: memref<128x128xbf16, #tpu.memory_space<vmem>>, %arg4: memref<128x128xbf16, #tpu.memory_space<vmem>>, %arg5: memref<128x128xbf16, #tpu.memory_space<vmem>>, %arg6: memref<128x128xbf16, #tpu.memory_space<vmem>>, %arg7: memref<128x128xbf16, #tpu.memory_space<vmem>>, %arg8: memref<128x128xbf16, #tpu.memory_space<vmem>>, %arg9: memref<128x128xbf16, #tpu.memory_space<vmem>>, %arg10: memref<128x256xbf16, #tpu.memory_space<vmem>>, %arg11: memref<256x128xbf16, #tpu.memory_space<vmem>>, %arg12: memref<15x128xf32, #tpu.memory_space<vmem>>, %arg13: memref<1x256xf32, #tpu.memory_space<vmem>>, %arg14: memref<16x128xf32, #tpu.memory_space<vmem>>, %arg15: memref<2x4x8x8xf32, #tpu.memory_space<vmem>>, %arg16: memref<2x4x8x16xf32, #tpu.memory_space<vmem>>, %arg17: memref<16x128xf32, #tpu.memory_space<vmem>>) attributes {dimension_semantics = [], scalar_prefetch = 0 : i64, scratch_operands = 1 : i64, tpu.core_type = #tpu.core_type<tc>} {
    %c0 = arith.constant 0 : index
    %c0_0 = arith.constant 0 : index
    %0 = vector.load %arg0[%c0, %c0_0] : memref<16x128xf32, #tpu.memory_space<vmem>>, vector<16x128xf32>
    %c0_1 = arith.constant 0 : index
    %c0_2 = arith.constant 0 : index
    %1 = vector.load %arg1[%c0_1, %c0_2] : memref<32x128xf32, #tpu.memory_space<vmem>>, vector<32x128xf32>
    %c0_3 = arith.constant 0 : index
    %c0_4 = arith.constant 0 : index
    %2 = vector.load %arg12[%c0_3, %c0_4] : memref<15x128xf32, #tpu.memory_space<vmem>>, vector<15x128xf32>
    %3 = tpu.iota {dimensions = array<i32: 0>} : vector<8x8xi32>
    %4 = tpu.iota {dimensions = array<i32: 1>} : vector<8x8xi32>
    %5 = arith.cmpi sle, %4, %3 : vector<8x8xi32>
    %6 = vector.extract_strided_slice %2 {offsets = [0, 0], sizes = [1, 128], strides = [1, 1]} : vector<15x128xf32> to vector<1x128xf32>
    %7 = vector.extract_strided_slice %2 {offsets = [1, 0], sizes = [1, 128], strides = [1, 1]} : vector<15x128xf32> to vector<1x128xf32>
    %8 = vector.extract_strided_slice %2 {offsets = [2, 0], sizes = [1, 128], strides = [1, 1]} : vector<15x128xf32> to vector<1x128xf32>
    %9 = vector.extract_strided_slice %2 {offsets = [3, 0], sizes = [1, 128], strides = [1, 1]} : vector<15x128xf32> to vector<1x128xf32>
    %10 = arith.truncf %0 : vector<16x128xf32> to vector<16x128xbf16>
    %c0_5 = arith.constant 0 : index
    %c0_6 = arith.constant 0 : index
    %11 = vector.load %arg2[%c0_5, %c0_6] : memref<128x128xbf16, #tpu.memory_space<vmem>>, vector<128x128xbf16>
    %cst = arith.constant dense<0.000000e+00> : vector<16x128xf32>
    %12 = tpu.matmul %10, %11, %cst {dimension_numbers = #tpu.dot_dimension_numbers<[1], [0], [0], [1], [0, 0, 1, 1], [], []>} : vector<16x128xbf16>, vector<128x128xbf16>, vector<16x128xf32> -> vector<16x128xf32>
    %13 = vector.broadcast %6 : vector<1x128xf32> to vector<16x128xf32>
    %14 = arith.addf %12, %13 : vector<16x128xf32>
    %15 = arith.truncf %0 : vector<16x128xf32> to vector<16x128xbf16>
    %c0_7 = arith.constant 0 : index
    %c0_8 = arith.constant 0 : index
    %16 = vector.load %arg3[%c0_7, %c0_8] : memref<128x128xbf16, #tpu.memory_space<vmem>>, vector<128x128xbf16>
    %cst_9 = arith.constant dense<0.000000e+00> : vector<16x128xf32>
    %17 = tpu.matmul %15, %16, %cst_9 {dimension_numbers = #tpu.dot_dimension_numbers<[1], [0], [0], [1], [0, 0, 1, 1], [], []>} : vector<16x128xbf16>, vector<128x128xbf16>, vector<16x128xf32> -> vector<16x128xf32>
    %18 = vector.broadcast %7 : vector<1x128xf32> to vector<16x128xf32>
    %19 = arith.addf %17, %18 : vector<16x128xf32>
    %20 = arith.truncf %0 : vector<16x128xf32> to vector<16x128xbf16>
    %c0_10 = arith.constant 0 : index
    %c0_11 = arith.constant 0 : index
    %21 = vector.load %arg4[%c0_10, %c0_11] : memref<128x128xbf16, #tpu.memory_space<vmem>>, vector<128x128xbf16>
    %cst_12 = arith.constant dense<0.000000e+00> : vector<16x128xf32>
    %22 = tpu.matmul %20, %21, %cst_12 {dimension_numbers = #tpu.dot_dimension_numbers<[1], [0], [0], [1], [0, 0, 1, 1], [], []>} : vector<16x128xbf16>, vector<128x128xbf16>, vector<16x128xf32> -> vector<16x128xf32>
    %23 = vector.broadcast %8 : vector<1x128xf32> to vector<16x128xf32>
    %24 = arith.addf %22, %23 : vector<16x128xf32>
    %cst_13 = arith.constant 0.176776692 : f32
    %25 = vector.broadcast %cst_13 : f32 to vector<16x128xf32>
    %26 = arith.mulf %14, %25 : vector<16x128xf32>
    %27 = arith.truncf %26 : vector<16x128xf32> to vector<16x128xbf16>
    %28 = arith.truncf %19 : vector<16x128xf32> to vector<16x128xbf16>
    %29 = arith.truncf %24 : vector<16x128xf32> to vector<16x128xbf16>
    %c0_14 = arith.constant 0 : index
    %c0_15 = arith.constant 0 : index
    %30 = vector.load %arg5[%c0_14, %c0_15] : memref<128x128xbf16, #tpu.memory_space<vmem>>, vector<128x128xbf16>
    %31 = vector.extract_strided_slice %27 {offsets = [0, 0], sizes = [8, 128], strides = [1, 1]} : vector<16x128xbf16> to vector<8x128xbf16>
    %32 = vector.extract_strided_slice %28 {offsets = [0, 0], sizes = [8, 128], strides = [1, 1]} : vector<16x128xbf16> to vector<8x128xbf16>
    %33 = vector.extract_strided_slice %29 {offsets = [0, 0], sizes = [8, 128], strides = [1, 1]} : vector<16x128xbf16> to vector<8x128xbf16>
    %cst_16 = arith.constant 0.000000e+00 : f32
    %34 = vector.broadcast %cst_16 : f32 to vector<8x128xf32>
    %35 = vector.extract_strided_slice %31 {offsets = [0, 0], sizes = [8, 32], strides = [1, 1]} : vector<8x128xbf16> to vector<8x32xbf16>
    %36 = vector.extract_strided_slice %32 {offsets = [0, 0], sizes = [8, 32], strides = [1, 1]} : vector<8x128xbf16> to vector<8x32xbf16>
    %37 = vector.extract_strided_slice %33 {offsets = [0, 0], sizes = [8, 32], strides = [1, 1]} : vector<8x128xbf16> to vector<8x32xbf16>
    %cst_17 = arith.constant dense<0.000000e+00> : vector<8x8xf32>
    %38 = tpu.matmul %35, %36, %cst_17 {dimension_numbers = #tpu.dot_dimension_numbers<[1], [1], [0], [0], [0, 0, 1, 0], [], []>} : vector<8x32xbf16>, vector<8x32xbf16>, vector<8x8xf32> -> vector<8x8xf32>
    %cst_18 = arith.constant -1.000000e+30 : f32
    %39 = vector.broadcast %cst_18 : f32 to vector<8x8xf32>
    %40 = arith.select %5, %38, %39 : vector<8x8xi1>, vector<8x8xf32>
    %cst_19 = arith.constant dense<0xFF800000> : vector<8xf32>
    %41 = vector.multi_reduction <maximumf>, %40, %cst_19 [1] : vector<8x8xf32> to vector<8xf32>
    %42 = vector.shape_cast %41 : vector<8xf32> to vector<8x1xf32>
    %43 = vector.broadcast %42 : vector<8x1xf32> to vector<8x8xf32>
    %44 = arith.subf %40, %43 : vector<8x8xf32>
    %45 = math.exp %44 : vector<8x8xf32>
    %cst_20 = arith.constant dense<0.000000e+00> : vector<8xf32>
    %46 = vector.multi_reduction <add>, %45, %cst_20 [1] : vector<8x8xf32> to vector<8xf32>
    %47 = vector.shape_cast %46 : vector<8xf32> to vector<8x1xf32>
    %48 = tpu.reciprocal %47 {approx = true} : vector<8x1xf32> -> vector<8x1xf32>
    %49 = vector.broadcast %48 : vector<8x1xf32> to vector<8x8xf32>
    %50 = arith.mulf %45, %49 : vector<8x8xf32>
    %c0_21 = arith.constant 0 : index
    %c0_22 = arith.constant 0 : index
    %c0_23 = arith.constant 0 : index
    %c0_24 = arith.constant 0 : index
    %51 = vector.load %arg15[%c0_21, %c0_22, %c0_23, %c0_24] : memref<2x4x8x8xf32, #tpu.memory_space<vmem>>, vector<1x1x8x8xf32>
    %52 = vector.shape_cast %51 : vector<1x1x8x8xf32> to vector<8x8xf32>
    %53 = vector.shape_cast %50 : vector<8x8xf32> to vector<1x1x8x8xf32>
    tpu.vector_store %arg15[%c0_21, %c0_22, %c0_23, %c0_24], %53 {strides = array<i32>} : memref<2x4x8x8xf32, #tpu.memory_space<vmem>>, vector<1x1x8x8xf32>,
    %54 = arith.truncf %50 : vector<8x8xf32> to vector<8x8xbf16>
    %cst_25 = arith.constant dense<0.000000e+00> : vector<8x32xf32>
    %55 = tpu.matmul %54, %37, %cst_25 {dimension_numbers = #tpu.dot_dimension_numbers<[1], [0], [0], [1], [0, 0, 1, 1], [], []>} : vector<8x8xbf16>, vector<8x32xbf16>, vector<8x32xf32> -> vector<8x32xf32>
    %56 = arith.truncf %55 : vector<8x32xf32> to vector<8x32xbf16>
    %57 = vector.extract_strided_slice %30 {offsets = [0, 0], sizes = [32, 128], strides = [1, 1]} : vector<128x128xbf16> to vector<32x128xbf16>
    %cst_26 = arith.constant dense<0.000000e+00> : vector<8x128xf32>
    %58 = tpu.matmul %56, %57, %cst_26 {dimension_numbers = #tpu.dot_dimension_numbers<[1], [0], [0], [1], [0, 0, 1, 1], [], []>} : vector<8x32xbf16>, vector<32x128xbf16>, vector<8x128xf32> -> vector<8x128xf32>
    %59 = arith.addf %34, %58 : vector<8x128xf32>
    %60 = vector.extract_strided_slice %31 {offsets = [0, 32], sizes = [8, 32], strides = [1, 1]} : vector<8x128xbf16> to vector<8x32xbf16>
    %61 = vector.extract_strided_slice %32 {offsets = [0, 32], sizes = [8, 32], strides = [1, 1]} : vector<8x128xbf16> to vector<8x32xbf16>
    %62 = vector.extract_strided_slice %33 {offsets = [0, 32], sizes = [8, 32], strides = [1, 1]} : vector<8x128xbf16> to vector<8x32xbf16>
    %cst_27 = arith.constant dense<0.000000e+00> : vector<8x8xf32>
    %63 = tpu.matmul %60, %61, %cst_27 {dimension_numbers = #tpu.dot_dimension_numbers<[1], [1], [0], [0], [0, 0, 1, 0], [], []>} : vector<8x32xbf16>, vector<8x32xbf16>, vector<8x8xf32> -> vector<8x8xf32>
    %cst_28 = arith.constant -1.000000e+30 : f32
    %64 = vector.broadcast %cst_28 : f32 to vector<8x8xf32>
    %65 = arith.select %5, %63, %64 : vector<8x8xi1>, vector<8x8xf32>
    %cst_29 = arith.constant dense<0xFF800000> : vector<8xf32>
    %66 = vector.multi_reduction <maximumf>, %65, %cst_29 [1] : vector<8x8xf32> to vector<8xf32>
    %67 = vector.shape_cast %66 : vector<8xf32> to vector<8x1xf32>
    %68 = vector.broadcast %67 : vector<8x1xf32> to vector<8x8xf32>
    %69 = arith.subf %65, %68 : vector<8x8xf32>
    %70 = math.exp %69 : vector<8x8xf32>
    %cst_30 = arith.constant dense<0.000000e+00> : vector<8xf32>
    %71 = vector.multi_reduction <add>, %70, %cst_30 [1] : vector<8x8xf32> to vector<8xf32>
    %72 = vector.shape_cast %71 : vector<8xf32> to vector<8x1xf32>
    %73 = tpu.reciprocal %72 {approx = true} : vector<8x1xf32> -> vector<8x1xf32>
    %74 = vector.broadcast %73 : vector<8x1xf32> to vector<8x8xf32>
    %75 = arith.mulf %70, %74 : vector<8x8xf32>
    %c0_31 = arith.constant 0 : index
    %c1 = arith.constant 1 : index
    %c0_32 = arith.constant 0 : index
    %c0_33 = arith.constant 0 : index
    %76 = vector.load %arg15[%c0_31, %c1, %c0_32, %c0_33] : memref<2x4x8x8xf32, #tpu.memory_space<vmem>>, vector<1x1x8x8xf32>
    %77 = vector.shape_cast %76 : vector<1x1x8x8xf32> to vector<8x8xf32>
    %78 = vector.shape_cast %75 : vector<8x8xf32> to vector<1x1x8x8xf32>
    tpu.vector_store %arg15[%c0_31, %c1, %c0_32, %c0_33], %78 {strides = array<i32>} : memref<2x4x8x8xf32, #tpu.memory_space<vmem>>, vector<1x1x8x8xf32>,
    %79 = arith.truncf %75 : vector<8x8xf32> to vector<8x8xbf16>
    %cst_34 = arith.constant dense<0.000000e+00> : vector<8x32xf32>
    %80 = tpu.matmul %79, %62, %cst_34 {dimension_numbers = #tpu.dot_dimension_numbers<[1], [0], [0], [1], [0, 0, 1, 1], [], []>} : vector<8x8xbf16>, vector<8x32xbf16>, vector<8x32xf32> -> vector<8x32xf32>
    %81 = arith.truncf %80 : vector<8x32xf32> to vector<8x32xbf16>
    %82 = vector.extract_strided_slice %30 {offsets = [32, 0], sizes = [32, 128], strides = [1, 1]} : vector<128x128xbf16> to vector<32x128xbf16>
    %cst_35 = arith.constant dense<0.000000e+00> : vector<8x128xf32>
    %83 = tpu.matmul %81, %82, %cst_35 {dimension_numbers = #tpu.dot_dimension_numbers<[1], [0], [0], [1], [0, 0, 1, 1], [], []>} : vector<8x32xbf16>, vector<32x128xbf16>, vector<8x128xf32> -> vector<8x128xf32>
    %84 = arith.addf %59, %83 : vector<8x128xf32>
    %85 = vector.extract_strided_slice %31 {offsets = [0, 64], sizes = [8, 32], strides = [1, 1]} : vector<8x128xbf16> to vector<8x32xbf16>
    %86 = vector.extract_strided_slice %32 {offsets = [0, 64], sizes = [8, 32], strides = [1, 1]} : vector<8x128xbf16> to vector<8x32xbf16>
    %87 = vector.extract_strided_slice %33 {offsets = [0, 64], sizes = [8, 32], strides = [1, 1]} : vector<8x128xbf16> to vector<8x32xbf16>
    %cst_36 = arith.constant dense<0.000000e+00> : vector<8x8xf32>
    %88 = tpu.matmul %85, %86, %cst_36 {dimension_numbers = #tpu.dot_dimension_numbers<[1], [1], [0], [0], [0, 0, 1, 0], [], []>} : vector<8x32xbf16>, vector<8x32xbf16>, vector<8x8xf32> -> vector<8x8xf32>
    %cst_37 = arith.constant -1.000000e+30 : f32
    %89 = vector.broadcast %cst_37 : f32 to vector<8x8xf32>
    %90 = arith.select %5, %88, %89 : vector<8x8xi1>, vector<8x8xf32>
    %cst_38 = arith.constant dense<0xFF800000> : vector<8xf32>
    %91 = vector.multi_reduction <maximumf>, %90, %cst_38 [1] : vector<8x8xf32> to vector<8xf32>
    %92 = vector.shape_cast %91 : vector<8xf32> to vector<8x1xf32>
    %93 = vector.broadcast %92 : vector<8x1xf32> to vector<8x8xf32>
    %94 = arith.subf %90, %93 : vector<8x8xf32>
    %95 = math.exp %94 : vector<8x8xf32>
    %cst_39 = arith.constant dense<0.000000e+00> : vector<8xf32>
    %96 = vector.multi_reduction <add>, %95, %cst_39 [1] : vector<8x8xf32> to vector<8xf32>
    %97 = vector.shape_cast %96 : vector<8xf32> to vector<8x1xf32>
    %98 = tpu.reciprocal %97 {approx = true} : vector<8x1xf32> -> vector<8x1xf32>
    %99 = vector.broadcast %98 : vector<8x1xf32> to vector<8x8xf32>
    %100 = arith.mulf %95, %99 : vector<8x8xf32>
    %c0_40 = arith.constant 0 : index
    %c2 = arith.constant 2 : index
    %c0_41 = arith.constant 0 : index
    %c0_42 = arith.constant 0 : index
    %101 = vector.load %arg15[%c0_40, %c2, %c0_41, %c0_42] : memref<2x4x8x8xf32, #tpu.memory_space<vmem>>, vector<1x1x8x8xf32>
    %102 = vector.shape_cast %101 : vector<1x1x8x8xf32> to vector<8x8xf32>
    %103 = vector.shape_cast %100 : vector<8x8xf32> to vector<1x1x8x8xf32>
    tpu.vector_store %arg15[%c0_40, %c2, %c0_41, %c0_42], %103 {strides = array<i32>} : memref<2x4x8x8xf32, #tpu.memory_space<vmem>>, vector<1x1x8x8xf32>,
    %104 = arith.truncf %100 : vector<8x8xf32> to vector<8x8xbf16>
    %cst_43 = arith.constant dense<0.000000e+00> : vector<8x32xf32>
    %105 = tpu.matmul %104, %87, %cst_43 {dimension_numbers = #tpu.dot_dimension_numbers<[1], [0], [0], [1], [0, 0, 1, 1], [], []>} : vector<8x8xbf16>, vector<8x32xbf16>, vector<8x32xf32> -> vector<8x32xf32>
    %106 = arith.truncf %105 : vector<8x32xf32> to vector<8x32xbf16>
    %107 = vector.extract_strided_slice %30 {offsets = [64, 0], sizes = [32, 128], strides = [1, 1]} : vector<128x128xbf16> to vector<32x128xbf16>
    %cst_44 = arith.constant dense<0.000000e+00> : vector<8x128xf32>
    %108 = tpu.matmul %106, %107, %cst_44 {dimension_numbers = #tpu.dot_dimension_numbers<[1], [0], [0], [1], [0, 0, 1, 1], [], []>} : vector<8x32xbf16>, vector<32x128xbf16>, vector<8x128xf32> -> vector<8x128xf32>
    %109 = arith.addf %84, %108 : vector<8x128xf32>
    %110 = vector.extract_strided_slice %31 {offsets = [0, 96], sizes = [8, 32], strides = [1, 1]} : vector<8x128xbf16> to vector<8x32xbf16>
    %111 = vector.extract_strided_slice %32 {offsets = [0, 96], sizes = [8, 32], strides = [1, 1]} : vector<8x128xbf16> to vector<8x32xbf16>
    %112 = vector.extract_strided_slice %33 {offsets = [0, 96], sizes = [8, 32], strides = [1, 1]} : vector<8x128xbf16> to vector<8x32xbf16>
    %cst_45 = arith.constant dense<0.000000e+00> : vector<8x8xf32>
    %113 = tpu.matmul %110, %111, %cst_45 {dimension_numbers = #tpu.dot_dimension_numbers<[1], [1], [0], [0], [0, 0, 1, 0], [], []>} : vector<8x32xbf16>, vector<8x32xbf16>, vector<8x8xf32> -> vector<8x8xf32>
    %cst_46 = arith.constant -1.000000e+30 : f32
    %114 = vector.broadcast %cst_46 : f32 to vector<8x8xf32>
    %115 = arith.select %5, %113, %114 : vector<8x8xi1>, vector<8x8xf32>
    %cst_47 = arith.constant dense<0xFF800000> : vector<8xf32>
    %116 = vector.multi_reduction <maximumf>, %115, %cst_47 [1] : vector<8x8xf32> to vector<8xf32>
    %117 = vector.shape_cast %116 : vector<8xf32> to vector<8x1xf32>
    %118 = vector.broadcast %117 : vector<8x1xf32> to vector<8x8xf32>
    %119 = arith.subf %115, %118 : vector<8x8xf32>
    %120 = math.exp %119 : vector<8x8xf32>
    %cst_48 = arith.constant dense<0.000000e+00> : vector<8xf32>
    %121 = vector.multi_reduction <add>, %120, %cst_48 [1] : vector<8x8xf32> to vector<8xf32>
    %122 = vector.shape_cast %121 : vector<8xf32> to vector<8x1xf32>
    %123 = tpu.reciprocal %122 {approx = true} : vector<8x1xf32> -> vector<8x1xf32>
    %124 = vector.broadcast %123 : vector<8x1xf32> to vector<8x8xf32>
    %125 = arith.mulf %120, %124 : vector<8x8xf32>
    %c0_49 = arith.constant 0 : index
    %c3 = arith.constant 3 : index
    %c0_50 = arith.constant 0 : index
    %c0_51 = arith.constant 0 : index
    %126 = vector.load %arg15[%c0_49, %c3, %c0_50, %c0_51] : memref<2x4x8x8xf32, #tpu.memory_space<vmem>>, vector<1x1x8x8xf32>
    %127 = vector.shape_cast %126 : vector<1x1x8x8xf32> to vector<8x8xf32>
    %128 = vector.shape_cast %125 : vector<8x8xf32> to vector<1x1x8x8xf32>
    tpu.vector_store %arg15[%c0_49, %c3, %c0_50, %c0_51], %128 {strides = array<i32>} : memref<2x4x8x8xf32, #tpu.memory_space<vmem>>, vector<1x1x8x8xf32>,
    %129 = arith.truncf %125 : vector<8x8xf32> to vector<8x8xbf16>
    %cst_52 = arith.constant dense<0.000000e+00> : vector<8x32xf32>
    %130 = tpu.matmul %129, %112, %cst_52 {dimension_numbers = #tpu.dot_dimension_numbers<[1], [0], [0], [1], [0, 0, 1, 1], [], []>} : vector<8x8xbf16>, vector<8x32xbf16>, vector<8x32xf32> -> vector<8x32xf32>
    %131 = arith.truncf %130 : vector<8x32xf32> to vector<8x32xbf16>
    %132 = vector.extract_strided_slice %30 {offsets = [96, 0], sizes = [32, 128], strides = [1, 1]} : vector<128x128xbf16> to vector<32x128xbf16>
    %cst_53 = arith.constant dense<0.000000e+00> : vector<8x128xf32>
    %133 = tpu.matmul %131, %132, %cst_53 {dimension_numbers = #tpu.dot_dimension_numbers<[1], [0], [0], [1], [0, 0, 1, 1], [], []>} : vector<8x32xbf16>, vector<32x128xbf16>, vector<8x128xf32> -> vector<8x128xf32>
    %134 = arith.addf %109, %133 : vector<8x128xf32>
    %c0_54 = arith.constant 0 : index
    %c0_55 = arith.constant 0 : index
    %135 = vector.load %arg17[%c0_54, %c0_55] : memref<16x128xf32, #tpu.memory_space<vmem>>, vector<8x128xf32>
    tpu.vector_store %arg17[%c0_54, %c0_55], %134 {strides = array<i32>} : memref<16x128xf32, #tpu.memory_space<vmem>>, vector<8x128xf32>,
    %136 = vector.extract_strided_slice %27 {offsets = [8, 0], sizes = [8, 128], strides = [1, 1]} : vector<16x128xbf16> to vector<8x128xbf16>
    %137 = vector.extract_strided_slice %28 {offsets = [8, 0], sizes = [8, 128], strides = [1, 1]} : vector<16x128xbf16> to vector<8x128xbf16>
    %138 = vector.extract_strided_slice %29 {offsets = [8, 0], sizes = [8, 128], strides = [1, 1]} : vector<16x128xbf16> to vector<8x128xbf16>
    %cst_56 = arith.constant 0.000000e+00 : f32
    %139 = vector.broadcast %cst_56 : f32 to vector<8x128xf32>
    %140 = vector.extract_strided_slice %136 {offsets = [0, 0], sizes = [8, 32], strides = [1, 1]} : vector<8x128xbf16> to vector<8x32xbf16>
    %141 = vector.extract_strided_slice %137 {offsets = [0, 0], sizes = [8, 32], strides = [1, 1]} : vector<8x128xbf16> to vector<8x32xbf16>
    %142 = vector.extract_strided_slice %138 {offsets = [0, 0], sizes = [8, 32], strides = [1, 1]} : vector<8x128xbf16> to vector<8x32xbf16>
    %cst_57 = arith.constant dense<0.000000e+00> : vector<8x8xf32>
    %143 = tpu.matmul %140, %141, %cst_57 {dimension_numbers = #tpu.dot_dimension_numbers<[1], [1], [0], [0], [0, 0, 1, 0], [], []>} : vector<8x32xbf16>, vector<8x32xbf16>, vector<8x8xf32> -> vector<8x8xf32>
    %cst_58 = arith.constant -1.000000e+30 : f32
    %144 = vector.broadcast %cst_58 : f32 to vector<8x8xf32>
    %145 = arith.select %5, %143, %144 : vector<8x8xi1>, vector<8x8xf32>
    %cst_59 = arith.constant dense<0xFF800000> : vector<8xf32>
    %146 = vector.multi_reduction <maximumf>, %145, %cst_59 [1] : vector<8x8xf32> to vector<8xf32>
    %147 = vector.shape_cast %146 : vector<8xf32> to vector<8x1xf32>
    %148 = vector.broadcast %147 : vector<8x1xf32> to vector<8x8xf32>
    %149 = arith.subf %145, %148 : vector<8x8xf32>
    %150 = math.exp %149 : vector<8x8xf32>
    %cst_60 = arith.constant dense<0.000000e+00> : vector<8xf32>
    %151 = vector.multi_reduction <add>, %150, %cst_60 [1] : vector<8x8xf32> to vector<8xf32>
    %152 = vector.shape_cast %151 : vector<8xf32> to vector<8x1xf32>
    %153 = tpu.reciprocal %152 {approx = true} : vector<8x1xf32> -> vector<8x1xf32>
    %154 = vector.broadcast %153 : vector<8x1xf32> to vector<8x8xf32>
    %155 = arith.mulf %150, %154 : vector<8x8xf32>
    %c1_61 = arith.constant 1 : index
    %c0_62 = arith.constant 0 : index
    %c0_63 = arith.constant 0 : index
    %c0_64 = arith.constant 0 : index
    %156 = vector.load %arg15[%c1_61, %c0_62, %c0_63, %c0_64] : memref<2x4x8x8xf32, #tpu.memory_space<vmem>>, vector<1x1x8x8xf32>
    %157 = vector.shape_cast %156 : vector<1x1x8x8xf32> to vector<8x8xf32>
    %158 = vector.shape_cast %155 : vector<8x8xf32> to vector<1x1x8x8xf32>
    tpu.vector_store %arg15[%c1_61, %c0_62, %c0_63, %c0_64], %158 {strides = array<i32>} : memref<2x4x8x8xf32, #tpu.memory_space<vmem>>, vector<1x1x8x8xf32>,
    %159 = arith.truncf %155 : vector<8x8xf32> to vector<8x8xbf16>
    %cst_65 = arith.constant dense<0.000000e+00> : vector<8x32xf32>
    %160 = tpu.matmul %159, %142, %cst_65 {dimension_numbers = #tpu.dot_dimension_numbers<[1], [0], [0], [1], [0, 0, 1, 1], [], []>} : vector<8x8xbf16>, vector<8x32xbf16>, vector<8x32xf32> -> vector<8x32xf32>
    %161 = arith.truncf %160 : vector<8x32xf32> to vector<8x32xbf16>
    %162 = vector.extract_strided_slice %30 {offsets = [0, 0], sizes = [32, 128], strides = [1, 1]} : vector<128x128xbf16> to vector<32x128xbf16>
    %cst_66 = arith.constant dense<0.000000e+00> : vector<8x128xf32>
    %163 = tpu.matmul %161, %162, %cst_66 {dimension_numbers = #tpu.dot_dimension_numbers<[1], [0], [0], [1], [0, 0, 1, 1], [], []>} : vector<8x32xbf16>, vector<32x128xbf16>, vector<8x128xf32> -> vector<8x128xf32>
    %164 = arith.addf %139, %163 : vector<8x128xf32>
    %165 = vector.extract_strided_slice %136 {offsets = [0, 32], sizes = [8, 32], strides = [1, 1]} : vector<8x128xbf16> to vector<8x32xbf16>
    %166 = vector.extract_strided_slice %137 {offsets = [0, 32], sizes = [8, 32], strides = [1, 1]} : vector<8x128xbf16> to vector<8x32xbf16>
    %167 = vector.extract_strided_slice %138 {offsets = [0, 32], sizes = [8, 32], strides = [1, 1]} : vector<8x128xbf16> to vector<8x32xbf16>
    %cst_67 = arith.constant dense<0.000000e+00> : vector<8x8xf32>
    %168 = tpu.matmul %165, %166, %cst_67 {dimension_numbers = #tpu.dot_dimension_numbers<[1], [1], [0], [0], [0, 0, 1, 0], [], []>} : vector<8x32xbf16>, vector<8x32xbf16>, vector<8x8xf32> -> vector<8x8xf32>
    %cst_68 = arith.constant -1.000000e+30 : f32
    %169 = vector.broadcast %cst_68 : f32 to vector<8x8xf32>
    %170 = arith.select %5, %168, %169 : vector<8x8xi1>, vector<8x8xf32>
    %cst_69 = arith.constant dense<0xFF800000> : vector<8xf32>
    %171 = vector.multi_reduction <maximumf>, %170, %cst_69 [1] : vector<8x8xf32> to vector<8xf32>
    %172 = vector.shape_cast %171 : vector<8xf32> to vector<8x1xf32>
    %173 = vector.broadcast %172 : vector<8x1xf32> to vector<8x8xf32>
    %174 = arith.subf %170, %173 : vector<8x8xf32>
    %175 = math.exp %174 : vector<8x8xf32>
    %cst_70 = arith.constant dense<0.000000e+00> : vector<8xf32>
    %176 = vector.multi_reduction <add>, %175, %cst_70 [1] : vector<8x8xf32> to vector<8xf32>
    %177 = vector.shape_cast %176 : vector<8xf32> to vector<8x1xf32>
    %178 = tpu.reciprocal %177 {approx = true} : vector<8x1xf32> -> vector<8x1xf32>
    %179 = vector.broadcast %178 : vector<8x1xf32> to vector<8x8xf32>
    %180 = arith.mulf %175, %179 : vector<8x8xf32>
    %c1_71 = arith.constant 1 : index
    %c1_72 = arith.constant 1 : index
    %c0_73 = arith.constant 0 : index
    %c0_74 = arith.constant 0 : index
    %181 = vector.load %arg15[%c1_71, %c1_72, %c0_73, %c0_74] : memref<2x4x8x8xf32, #tpu.memory_space<vmem>>, vector<1x1x8x8xf32>
    %182 = vector.shape_cast %181 : vector<1x1x8x8xf32> to vector<8x8xf32>
    %183 = vector.shape_cast %180 : vector<8x8xf32> to vector<1x1x8x8xf32>
    tpu.vector_store %arg15[%c1_71, %c1_72, %c0_73, %c0_74], %183 {strides = array<i32>} : memref<2x4x8x8xf32, #tpu.memory_space<vmem>>, vector<1x1x8x8xf32>,
    %184 = arith.truncf %180 : vector<8x8xf32> to vector<8x8xbf16>
    %cst_75 = arith.constant dense<0.000000e+00> : vector<8x32xf32>
    %185 = tpu.matmul %184, %167, %cst_75 {dimension_numbers = #tpu.dot_dimension_numbers<[1], [0], [0], [1], [0, 0, 1, 1], [], []>} : vector<8x8xbf16>, vector<8x32xbf16>, vector<8x32xf32> -> vector<8x32xf32>
    %186 = arith.truncf %185 : vector<8x32xf32> to vector<8x32xbf16>
    %187 = vector.extract_strided_slice %30 {offsets = [32, 0], sizes = [32, 128], strides = [1, 1]} : vector<128x128xbf16> to vector<32x128xbf16>
    %cst_76 = arith.constant dense<0.000000e+00> : vector<8x128xf32>
    %188 = tpu.matmul %186, %187, %cst_76 {dimension_numbers = #tpu.dot_dimension_numbers<[1], [0], [0], [1], [0, 0, 1, 1], [], []>} : vector<8x32xbf16>, vector<32x128xbf16>, vector<8x128xf32> -> vector<8x128xf32>
    %189 = arith.addf %164, %188 : vector<8x128xf32>
    %190 = vector.extract_strided_slice %136 {offsets = [0, 64], sizes = [8, 32], strides = [1, 1]} : vector<8x128xbf16> to vector<8x32xbf16>
    %191 = vector.extract_strided_slice %137 {offsets = [0, 64], sizes = [8, 32], strides = [1, 1]} : vector<8x128xbf16> to vector<8x32xbf16>
    %192 = vector.extract_strided_slice %138 {offsets = [0, 64], sizes = [8, 32], strides = [1, 1]} : vector<8x128xbf16> to vector<8x32xbf16>
    %cst_77 = arith.constant dense<0.000000e+00> : vector<8x8xf32>
    %193 = tpu.matmul %190, %191, %cst_77 {dimension_numbers = #tpu.dot_dimension_numbers<[1], [1], [0], [0], [0, 0, 1, 0], [], []>} : vector<8x32xbf16>, vector<8x32xbf16>, vector<8x8xf32> -> vector<8x8xf32>
    %cst_78 = arith.constant -1.000000e+30 : f32
    %194 = vector.broadcast %cst_78 : f32 to vector<8x8xf32>
    %195 = arith.select %5, %193, %194 : vector<8x8xi1>, vector<8x8xf32>
    %cst_79 = arith.constant dense<0xFF800000> : vector<8xf32>
    %196 = vector.multi_reduction <maximumf>, %195, %cst_79 [1] : vector<8x8xf32> to vector<8xf32>
    %197 = vector.shape_cast %196 : vector<8xf32> to vector<8x1xf32>
    %198 = vector.broadcast %197 : vector<8x1xf32> to vector<8x8xf32>
    %199 = arith.subf %195, %198 : vector<8x8xf32>
    %200 = math.exp %199 : vector<8x8xf32>
    %cst_80 = arith.constant dense<0.000000e+00> : vector<8xf32>
    %201 = vector.multi_reduction <add>, %200, %cst_80 [1] : vector<8x8xf32> to vector<8xf32>
    %202 = vector.shape_cast %201 : vector<8xf32> to vector<8x1xf32>
    %203 = tpu.reciprocal %202 {approx = true} : vector<8x1xf32> -> vector<8x1xf32>
    %204 = vector.broadcast %203 : vector<8x1xf32> to vector<8x8xf32>
    %205 = arith.mulf %200, %204 : vector<8x8xf32>
    %c1_81 = arith.constant 1 : index
    %c2_82 = arith.constant 2 : index
    %c0_83 = arith.constant 0 : index
    %c0_84 = arith.constant 0 : index
    %206 = vector.load %arg15[%c1_81, %c2_82, %c0_83, %c0_84] : memref<2x4x8x8xf32, #tpu.memory_space<vmem>>, vector<1x1x8x8xf32>
    %207 = vector.shape_cast %206 : vector<1x1x8x8xf32> to vector<8x8xf32>
    %208 = vector.shape_cast %205 : vector<8x8xf32> to vector<1x1x8x8xf32>
    tpu.vector_store %arg15[%c1_81, %c2_82, %c0_83, %c0_84], %208 {strides = array<i32>} : memref<2x4x8x8xf32, #tpu.memory_space<vmem>>, vector<1x1x8x8xf32>,
    %209 = arith.truncf %205 : vector<8x8xf32> to vector<8x8xbf16>
    %cst_85 = arith.constant dense<0.000000e+00> : vector<8x32xf32>
    %210 = tpu.matmul %209, %192, %cst_85 {dimension_numbers = #tpu.dot_dimension_numbers<[1], [0], [0], [1], [0, 0, 1, 1], [], []>} : vector<8x8xbf16>, vector<8x32xbf16>, vector<8x32xf32> -> vector<8x32xf32>
    %211 = arith.truncf %210 : vector<8x32xf32> to vector<8x32xbf16>
    %212 = vector.extract_strided_slice %30 {offsets = [64, 0], sizes = [32, 128], strides = [1, 1]} : vector<128x128xbf16> to vector<32x128xbf16>
    %cst_86 = arith.constant dense<0.000000e+00> : vector<8x128xf32>
    %213 = tpu.matmul %211, %212, %cst_86 {dimension_numbers = #tpu.dot_dimension_numbers<[1], [0], [0], [1], [0, 0, 1, 1], [], []>} : vector<8x32xbf16>, vector<32x128xbf16>, vector<8x128xf32> -> vector<8x128xf32>
    %214 = arith.addf %189, %213 : vector<8x128xf32>
    %215 = vector.extract_strided_slice %136 {offsets = [0, 96], sizes = [8, 32], strides = [1, 1]} : vector<8x128xbf16> to vector<8x32xbf16>
    %216 = vector.extract_strided_slice %137 {offsets = [0, 96], sizes = [8, 32], strides = [1, 1]} : vector<8x128xbf16> to vector<8x32xbf16>
    %217 = vector.extract_strided_slice %138 {offsets = [0, 96], sizes = [8, 32], strides = [1, 1]} : vector<8x128xbf16> to vector<8x32xbf16>
    %cst_87 = arith.constant dense<0.000000e+00> : vector<8x8xf32>
    %218 = tpu.matmul %215, %216, %cst_87 {dimension_numbers = #tpu.dot_dimension_numbers<[1], [1], [0], [0], [0, 0, 1, 0], [], []>} : vector<8x32xbf16>, vector<8x32xbf16>, vector<8x8xf32> -> vector<8x8xf32>
    %cst_88 = arith.constant -1.000000e+30 : f32
    %219 = vector.broadcast %cst_88 : f32 to vector<8x8xf32>
    %220 = arith.select %5, %218, %219 : vector<8x8xi1>, vector<8x8xf32>
    %cst_89 = arith.constant dense<0xFF800000> : vector<8xf32>
    %221 = vector.multi_reduction <maximumf>, %220, %cst_89 [1] : vector<8x8xf32> to vector<8xf32>
    %222 = vector.shape_cast %221 : vector<8xf32> to vector<8x1xf32>
    %223 = vector.broadcast %222 : vector<8x1xf32> to vector<8x8xf32>
    %224 = arith.subf %220, %223 : vector<8x8xf32>
    %225 = math.exp %224 : vector<8x8xf32>
    %cst_90 = arith.constant dense<0.000000e+00> : vector<8xf32>
    %226 = vector.multi_reduction <add>, %225, %cst_90 [1] : vector<8x8xf32> to vector<8xf32>
    %227 = vector.shape_cast %226 : vector<8xf32> to vector<8x1xf32>
    %228 = tpu.reciprocal %227 {approx = true} : vector<8x1xf32> -> vector<8x1xf32>
    %229 = vector.broadcast %228 : vector<8x1xf32> to vector<8x8xf32>
    %230 = arith.mulf %225, %229 : vector<8x8xf32>
    %c1_91 = arith.constant 1 : index
    %c3_92 = arith.constant 3 : index
    %c0_93 = arith.constant 0 : index
    %c0_94 = arith.constant 0 : index
    %231 = vector.load %arg15[%c1_91, %c3_92, %c0_93, %c0_94] : memref<2x4x8x8xf32, #tpu.memory_space<vmem>>, vector<1x1x8x8xf32>
    %232 = vector.shape_cast %231 : vector<1x1x8x8xf32> to vector<8x8xf32>
    %233 = vector.shape_cast %230 : vector<8x8xf32> to vector<1x1x8x8xf32>
    tpu.vector_store %arg15[%c1_91, %c3_92, %c0_93, %c0_94], %233 {strides = array<i32>} : memref<2x4x8x8xf32, #tpu.memory_space<vmem>>, vector<1x1x8x8xf32>,
    %234 = arith.truncf %230 : vector<8x8xf32> to vector<8x8xbf16>
    %cst_95 = arith.constant dense<0.000000e+00> : vector<8x32xf32>
    %235 = tpu.matmul %234, %217, %cst_95 {dimension_numbers = #tpu.dot_dimension_numbers<[1], [0], [0], [1], [0, 0, 1, 1], [], []>} : vector<8x8xbf16>, vector<8x32xbf16>, vector<8x32xf32> -> vector<8x32xf32>
    %236 = arith.truncf %235 : vector<8x32xf32> to vector<8x32xbf16>
    %237 = vector.extract_strided_slice %30 {offsets = [96, 0], sizes = [32, 128], strides = [1, 1]} : vector<128x128xbf16> to vector<32x128xbf16>
    %cst_96 = arith.constant dense<0.000000e+00> : vector<8x128xf32>
    %238 = tpu.matmul %236, %237, %cst_96 {dimension_numbers = #tpu.dot_dimension_numbers<[1], [0], [0], [1], [0, 0, 1, 1], [], []>} : vector<8x32xbf16>, vector<32x128xbf16>, vector<8x128xf32> -> vector<8x128xf32>
    %239 = arith.addf %214, %238 : vector<8x128xf32>
    %c8 = arith.constant 8 : index
    %c0_97 = arith.constant 0 : index
    %240 = vector.load %arg17[%c8, %c0_97] : memref<16x128xf32, #tpu.memory_space<vmem>>, vector<8x128xf32>
    tpu.vector_store %arg17[%c8, %c0_97], %239 {strides = array<i32>} : memref<16x128xf32, #tpu.memory_space<vmem>>, vector<8x128xf32>,
    %c0_98 = arith.constant 0 : index
    %c0_99 = arith.constant 0 : index
    %241 = vector.load %arg17[%c0_98, %c0_99] : memref<16x128xf32, #tpu.memory_space<vmem>>, vector<16x128xf32>
    %242 = vector.broadcast %9 : vector<1x128xf32> to vector<16x128xf32>
    %243 = arith.addf %241, %242 : vector<16x128xf32>
    %244 = arith.addf %0, %243 : vector<16x128xf32>
    %245 = vector.extract_strided_slice %2 {offsets = [9, 0], sizes = [1, 128], strides = [1, 1]} : vector<15x128xf32> to vector<1x128xf32>
    %246 = vector.extract_strided_slice %2 {offsets = [10, 0], sizes = [1, 128], strides = [1, 1]} : vector<15x128xf32> to vector<1x128xf32>
    %cst_100 = arith.constant dense<0.000000e+00> : vector<16xf32>
    %247 = vector.multi_reduction <add>, %244, %cst_100 [1] : vector<16x128xf32> to vector<16xf32>
    %248 = vector.shape_cast %247 : vector<16xf32> to vector<16x1xf32>
    %cst_101 = arith.constant 1.280000e+02 : f32
    %249 = vector.broadcast %cst_101 : f32 to vector<16x1xf32>
    %250 = arith.divf %248, %249 : vector<16x1xf32>
    %251 = vector.broadcast %250 : vector<16x1xf32> to vector<16x128xf32>
    %252 = arith.subf %244, %251 : vector<16x128xf32>
    %253 = arith.mulf %252, %252 : vector<16x128xf32>
    %cst_102 = arith.constant dense<0.000000e+00> : vector<16xf32>
    %254 = vector.multi_reduction <add>, %253, %cst_102 [1] : vector<16x128xf32> to vector<16xf32>
    %255 = vector.shape_cast %254 : vector<16xf32> to vector<16x1xf32>
    %cst_103 = arith.constant 1.280000e+02 : f32
    %256 = vector.broadcast %cst_103 : f32 to vector<16x1xf32>
    %257 = arith.divf %255, %256 : vector<16x1xf32>
    %258 = vector.broadcast %250 : vector<16x1xf32> to vector<16x128xf32>
    %259 = arith.subf %244, %258 : vector<16x128xf32>
    %cst_104 = arith.constant 9.99999974E-6 : f32
    %260 = vector.broadcast %cst_104 : f32 to vector<16x1xf32>
    %261 = arith.addf %257, %260 : vector<16x1xf32>
    %262 = math.rsqrt %261 : vector<16x1xf32>
    %263 = vector.broadcast %262 : vector<16x1xf32> to vector<16x128xf32>
    %264 = arith.mulf %259, %263 : vector<16x128xf32>
    %265 = vector.broadcast %245 : vector<1x128xf32> to vector<16x128xf32>
    %266 = arith.mulf %264, %265 : vector<16x128xf32>
    %267 = vector.broadcast %246 : vector<1x128xf32> to vector<16x128xf32>
    %268 = arith.addf %266, %267 : vector<16x128xf32>
    %269 = vector.extract_strided_slice %2 {offsets = [4, 0], sizes = [1, 128], strides = [1, 1]} : vector<15x128xf32> to vector<1x128xf32>
    %270 = vector.extract_strided_slice %2 {offsets = [5, 0], sizes = [1, 128], strides = [1, 1]} : vector<15x128xf32> to vector<1x128xf32>
    %271 = vector.extract_strided_slice %2 {offsets = [6, 0], sizes = [1, 128], strides = [1, 1]} : vector<15x128xf32> to vector<1x128xf32>
    %272 = vector.extract_strided_slice %2 {offsets = [7, 0], sizes = [1, 128], strides = [1, 1]} : vector<15x128xf32> to vector<1x128xf32>
    %273 = arith.truncf %268 : vector<16x128xf32> to vector<16x128xbf16>
    %c0_105 = arith.constant 0 : index
    %c0_106 = arith.constant 0 : index
    %274 = vector.load %arg6[%c0_105, %c0_106] : memref<128x128xbf16, #tpu.memory_space<vmem>>, vector<128x128xbf16>
    %cst_107 = arith.constant dense<0.000000e+00> : vector<16x128xf32>
    %275 = tpu.matmul %273, %274, %cst_107 {dimension_numbers = #tpu.dot_dimension_numbers<[1], [0], [0], [1], [0, 0, 1, 1], [], []>} : vector<16x128xbf16>, vector<128x128xbf16>, vector<16x128xf32> -> vector<16x128xf32>
    %276 = vector.broadcast %269 : vector<1x128xf32> to vector<16x128xf32>
    %277 = arith.addf %275, %276 : vector<16x128xf32>
    %278 = arith.truncf %1 : vector<32x128xf32> to vector<32x128xbf16>
    %c0_108 = arith.constant 0 : index
    %c0_109 = arith.constant 0 : index
    %279 = vector.load %arg7[%c0_108, %c0_109] : memref<128x128xbf16, #tpu.memory_space<vmem>>, vector<128x128xbf16>
    %cst_110 = arith.constant dense<0.000000e+00> : vector<32x128xf32>
    %280 = tpu.matmul %278, %279, %cst_110 {dimension_numbers = #tpu.dot_dimension_numbers<[1], [0], [0], [1], [0, 0, 1, 1], [], []>} : vector<32x128xbf16>, vector<128x128xbf16>, vector<32x128xf32> -> vector<32x128xf32>
    %281 = vector.broadcast %270 : vector<1x128xf32> to vector<32x128xf32>
    %282 = arith.addf %280, %281 : vector<32x128xf32>
    %283 = arith.truncf %1 : vector<32x128xf32> to vector<32x128xbf16>
    %c0_111 = arith.constant 0 : index
    %c0_112 = arith.constant 0 : index
    %284 = vector.load %arg8[%c0_111, %c0_112] : memref<128x128xbf16, #tpu.memory_space<vmem>>, vector<128x128xbf16>
    %cst_113 = arith.constant dense<0.000000e+00> : vector<32x128xf32>
    %285 = tpu.matmul %283, %284, %cst_113 {dimension_numbers = #tpu.dot_dimension_numbers<[1], [0], [0], [1], [0, 0, 1, 1], [], []>} : vector<32x128xbf16>, vector<128x128xbf16>, vector<32x128xf32> -> vector<32x128xf32>
    %286 = vector.broadcast %271 : vector<1x128xf32> to vector<32x128xf32>
    %287 = arith.addf %285, %286 : vector<32x128xf32>
    %cst_114 = arith.constant 0.176776692 : f32
    %288 = vector.broadcast %cst_114 : f32 to vector<16x128xf32>
    %289 = arith.mulf %277, %288 : vector<16x128xf32>
    %290 = arith.truncf %289 : vector<16x128xf32> to vector<16x128xbf16>
    %291 = arith.truncf %282 : vector<32x128xf32> to vector<32x128xbf16>
    %292 = arith.truncf %287 : vector<32x128xf32> to vector<32x128xbf16>
    %c0_115 = arith.constant 0 : index
    %c0_116 = arith.constant 0 : index
    %293 = vector.load %arg9[%c0_115, %c0_116] : memref<128x128xbf16, #tpu.memory_space<vmem>>, vector<128x128xbf16>
    %294 = vector.extract_strided_slice %290 {offsets = [0, 0], sizes = [8, 128], strides = [1, 1]} : vector<16x128xbf16> to vector<8x128xbf16>
    %295 = vector.extract_strided_slice %291 {offsets = [0, 0], sizes = [16, 128], strides = [1, 1]} : vector<32x128xbf16> to vector<16x128xbf16>
    %296 = vector.extract_strided_slice %292 {offsets = [0, 0], sizes = [16, 128], strides = [1, 1]} : vector<32x128xbf16> to vector<16x128xbf16>
    %cst_117 = arith.constant 0.000000e+00 : f32
    %297 = vector.broadcast %cst_117 : f32 to vector<8x128xf32>
    %298 = vector.extract_strided_slice %294 {offsets = [0, 0], sizes = [8, 32], strides = [1, 1]} : vector<8x128xbf16> to vector<8x32xbf16>
    %299 = vector.extract_strided_slice %295 {offsets = [0, 0], sizes = [16, 32], strides = [1, 1]} : vector<16x128xbf16> to vector<16x32xbf16>
    %300 = vector.extract_strided_slice %296 {offsets = [0, 0], sizes = [16, 32], strides = [1, 1]} : vector<16x128xbf16> to vector<16x32xbf16>
    %cst_118 = arith.constant dense<0.000000e+00> : vector<8x16xf32>
    %301 = tpu.matmul %298, %299, %cst_118 {dimension_numbers = #tpu.dot_dimension_numbers<[1], [1], [0], [0], [0, 0, 1, 0], [], []>} : vector<8x32xbf16>, vector<16x32xbf16>, vector<8x16xf32> -> vector<8x16xf32>
    %cst_119 = arith.constant dense<0xFF800000> : vector<8xf32>
    %302 = vector.multi_reduction <maximumf>, %301, %cst_119 [1] : vector<8x16xf32> to vector<8xf32>
    %303 = vector.shape_cast %302 : vector<8xf32> to vector<8x1xf32>
    %304 = vector.broadcast %303 : vector<8x1xf32> to vector<8x16xf32>
    %305 = arith.subf %301, %304 : vector<8x16xf32>
    %306 = math.exp %305 : vector<8x16xf32>
    %cst_120 = arith.constant dense<0.000000e+00> : vector<8xf32>
    %307 = vector.multi_reduction <add>, %306, %cst_120 [1] : vector<8x16xf32> to vector<8xf32>
    %308 = vector.shape_cast %307 : vector<8xf32> to vector<8x1xf32>
    %309 = tpu.reciprocal %308 {approx = true} : vector<8x1xf32> -> vector<8x1xf32>
    %310 = vector.broadcast %309 : vector<8x1xf32> to vector<8x16xf32>
    %311 = arith.mulf %306, %310 : vector<8x16xf32>
    %c0_121 = arith.constant 0 : index
    %c0_122 = arith.constant 0 : index
    %c0_123 = arith.constant 0 : index
    %c0_124 = arith.constant 0 : index
    %312 = vector.load %arg16[%c0_121, %c0_122, %c0_123, %c0_124] : memref<2x4x8x16xf32, #tpu.memory_space<vmem>>, vector<1x1x8x16xf32>
    %313 = vector.shape_cast %312 : vector<1x1x8x16xf32> to vector<8x16xf32>
    %314 = vector.shape_cast %311 : vector<8x16xf32> to vector<1x1x8x16xf32>
    tpu.vector_store %arg16[%c0_121, %c0_122, %c0_123, %c0_124], %314 {strides = array<i32>} : memref<2x4x8x16xf32, #tpu.memory_space<vmem>>, vector<1x1x8x16xf32>,
    %315 = arith.truncf %311 : vector<8x16xf32> to vector<8x16xbf16>
    %cst_125 = arith.constant dense<0.000000e+00> : vector<8x32xf32>
    %316 = tpu.matmul %315, %300, %cst_125 {dimension_numbers = #tpu.dot_dimension_numbers<[1], [0], [0], [1], [0, 0, 1, 1], [], []>} : vector<8x16xbf16>, vector<16x32xbf16>, vector<8x32xf32> -> vector<8x32xf32>
    %317 = arith.truncf %316 : vector<8x32xf32> to vector<8x32xbf16>
    %318 = vector.extract_strided_slice %293 {offsets = [0, 0], sizes = [32, 128], strides = [1, 1]} : vector<128x128xbf16> to vector<32x128xbf16>
    %cst_126 = arith.constant dense<0.000000e+00> : vector<8x128xf32>
    %319 = tpu.matmul %317, %318, %cst_126 {dimension_numbers = #tpu.dot_dimension_numbers<[1], [0], [0], [1], [0, 0, 1, 1], [], []>} : vector<8x32xbf16>, vector<32x128xbf16>, vector<8x128xf32> -> vector<8x128xf32>
    %320 = arith.addf %297, %319 : vector<8x128xf32>
    %321 = vector.extract_strided_slice %294 {offsets = [0, 32], sizes = [8, 32], strides = [1, 1]} : vector<8x128xbf16> to vector<8x32xbf16>
    %322 = vector.extract_strided_slice %295 {offsets = [0, 32], sizes = [16, 32], strides = [1, 1]} : vector<16x128xbf16> to vector<16x32xbf16>
    %323 = vector.extract_strided_slice %296 {offsets = [0, 32], sizes = [16, 32], strides = [1, 1]} : vector<16x128xbf16> to vector<16x32xbf16>
    %cst_127 = arith.constant dense<0.000000e+00> : vector<8x16xf32>
    %324 = tpu.matmul %321, %322, %cst_127 {dimension_numbers = #tpu.dot_dimension_numbers<[1], [1], [0], [0], [0, 0, 1, 0], [], []>} : vector<8x32xbf16>, vector<16x32xbf16>, vector<8x16xf32> -> vector<8x16xf32>
    %cst_128 = arith.constant dense<0xFF800000> : vector<8xf32>
    %325 = vector.multi_reduction <maximumf>, %324, %cst_128 [1] : vector<8x16xf32> to vector<8xf32>
    %326 = vector.shape_cast %325 : vector<8xf32> to vector<8x1xf32>
    %327 = vector.broadcast %326 : vector<8x1xf32> to vector<8x16xf32>
    %328 = arith.subf %324, %327 : vector<8x16xf32>
    %329 = math.exp %328 : vector<8x16xf32>
    %cst_129 = arith.constant dense<0.000000e+00> : vector<8xf32>
    %330 = vector.multi_reduction <add>, %329, %cst_129 [1] : vector<8x16xf32> to vector<8xf32>
    %331 = vector.shape_cast %330 : vector<8xf32> to vector<8x1xf32>
    %332 = tpu.reciprocal %331 {approx = true} : vector<8x1xf32> -> vector<8x1xf32>
    %333 = vector.broadcast %332 : vector<8x1xf32> to vector<8x16xf32>
    %334 = arith.mulf %329, %333 : vector<8x16xf32>
    %c0_130 = arith.constant 0 : index
    %c1_131 = arith.constant 1 : index
    %c0_132 = arith.constant 0 : index
    %c0_133 = arith.constant 0 : index
    %335 = vector.load %arg16[%c0_130, %c1_131, %c0_132, %c0_133] : memref<2x4x8x16xf32, #tpu.memory_space<vmem>>, vector<1x1x8x16xf32>
    %336 = vector.shape_cast %335 : vector<1x1x8x16xf32> to vector<8x16xf32>
    %337 = vector.shape_cast %334 : vector<8x16xf32> to vector<1x1x8x16xf32>
    tpu.vector_store %arg16[%c0_130, %c1_131, %c0_132, %c0_133], %337 {strides = array<i32>} : memref<2x4x8x16xf32, #tpu.memory_space<vmem>>, vector<1x1x8x16xf32>,
    %338 = arith.truncf %334 : vector<8x16xf32> to vector<8x16xbf16>
    %cst_134 = arith.constant dense<0.000000e+00> : vector<8x32xf32>
    %339 = tpu.matmul %338, %323, %cst_134 {dimension_numbers = #tpu.dot_dimension_numbers<[1], [0], [0], [1], [0, 0, 1, 1], [], []>} : vector<8x16xbf16>, vector<16x32xbf16>, vector<8x32xf32> -> vector<8x32xf32>
    %340 = arith.truncf %339 : vector<8x32xf32> to vector<8x32xbf16>
    %341 = vector.extract_strided_slice %293 {offsets = [32, 0], sizes = [32, 128], strides = [1, 1]} : vector<128x128xbf16> to vector<32x128xbf16>
    %cst_135 = arith.constant dense<0.000000e+00> : vector<8x128xf32>
    %342 = tpu.matmul %340, %341, %cst_135 {dimension_numbers = #tpu.dot_dimension_numbers<[1], [0], [0], [1], [0, 0, 1, 1], [], []>} : vector<8x32xbf16>, vector<32x128xbf16>, vector<8x128xf32> -> vector<8x128xf32>
    %343 = arith.addf %320, %342 : vector<8x128xf32>
    %344 = vector.extract_strided_slice %294 {offsets = [0, 64], sizes = [8, 32], strides = [1, 1]} : vector<8x128xbf16> to vector<8x32xbf16>
    %345 = vector.extract_strided_slice %295 {offsets = [0, 64], sizes = [16, 32], strides = [1, 1]} : vector<16x128xbf16> to vector<16x32xbf16>
    %346 = vector.extract_strided_slice %296 {offsets = [0, 64], sizes = [16, 32], strides = [1, 1]} : vector<16x128xbf16> to vector<16x32xbf16>
    %cst_136 = arith.constant dense<0.000000e+00> : vector<8x16xf32>
    %347 = tpu.matmul %344, %345, %cst_136 {dimension_numbers = #tpu.dot_dimension_numbers<[1], [1], [0], [0], [0, 0, 1, 0], [], []>} : vector<8x32xbf16>, vector<16x32xbf16>, vector<8x16xf32> -> vector<8x16xf32>
    %cst_137 = arith.constant dense<0xFF800000> : vector<8xf32>
    %348 = vector.multi_reduction <maximumf>, %347, %cst_137 [1] : vector<8x16xf32> to vector<8xf32>
    %349 = vector.shape_cast %348 : vector<8xf32> to vector<8x1xf32>
    %350 = vector.broadcast %349 : vector<8x1xf32> to vector<8x16xf32>
    %351 = arith.subf %347, %350 : vector<8x16xf32>
    %352 = math.exp %351 : vector<8x16xf32>
    %cst_138 = arith.constant dense<0.000000e+00> : vector<8xf32>
    %353 = vector.multi_reduction <add>, %352, %cst_138 [1] : vector<8x16xf32> to vector<8xf32>
    %354 = vector.shape_cast %353 : vector<8xf32> to vector<8x1xf32>
    %355 = tpu.reciprocal %354 {approx = true} : vector<8x1xf32> -> vector<8x1xf32>
    %356 = vector.broadcast %355 : vector<8x1xf32> to vector<8x16xf32>
    %357 = arith.mulf %352, %356 : vector<8x16xf32>
    %c0_139 = arith.constant 0 : index
    %c2_140 = arith.constant 2 : index
    %c0_141 = arith.constant 0 : index
    %c0_142 = arith.constant 0 : index
    %358 = vector.load %arg16[%c0_139, %c2_140, %c0_141, %c0_142] : memref<2x4x8x16xf32, #tpu.memory_space<vmem>>, vector<1x1x8x16xf32>
    %359 = vector.shape_cast %358 : vector<1x1x8x16xf32> to vector<8x16xf32>
    %360 = vector.shape_cast %357 : vector<8x16xf32> to vector<1x1x8x16xf32>
    tpu.vector_store %arg16[%c0_139, %c2_140, %c0_141, %c0_142], %360 {strides = array<i32>} : memref<2x4x8x16xf32, #tpu.memory_space<vmem>>, vector<1x1x8x16xf32>,
    %361 = arith.truncf %357 : vector<8x16xf32> to vector<8x16xbf16>
    %cst_143 = arith.constant dense<0.000000e+00> : vector<8x32xf32>
    %362 = tpu.matmul %361, %346, %cst_143 {dimension_numbers = #tpu.dot_dimension_numbers<[1], [0], [0], [1], [0, 0, 1, 1], [], []>} : vector<8x16xbf16>, vector<16x32xbf16>, vector<8x32xf32> -> vector<8x32xf32>
    %363 = arith.truncf %362 : vector<8x32xf32> to vector<8x32xbf16>
    %364 = vector.extract_strided_slice %293 {offsets = [64, 0], sizes = [32, 128], strides = [1, 1]} : vector<128x128xbf16> to vector<32x128xbf16>
    %cst_144 = arith.constant dense<0.000000e+00> : vector<8x128xf32>
    %365 = tpu.matmul %363, %364, %cst_144 {dimension_numbers = #tpu.dot_dimension_numbers<[1], [0], [0], [1], [0, 0, 1, 1], [], []>} : vector<8x32xbf16>, vector<32x128xbf16>, vector<8x128xf32> -> vector<8x128xf32>
    %366 = arith.addf %343, %365 : vector<8x128xf32>
    %367 = vector.extract_strided_slice %294 {offsets = [0, 96], sizes = [8, 32], strides = [1, 1]} : vector<8x128xbf16> to vector<8x32xbf16>
    %368 = vector.extract_strided_slice %295 {offsets = [0, 96], sizes = [16, 32], strides = [1, 1]} : vector<16x128xbf16> to vector<16x32xbf16>
    %369 = vector.extract_strided_slice %296 {offsets = [0, 96], sizes = [16, 32], strides = [1, 1]} : vector<16x128xbf16> to vector<16x32xbf16>
    %cst_145 = arith.constant dense<0.000000e+00> : vector<8x16xf32>
    %370 = tpu.matmul %367, %368, %cst_145 {dimension_numbers = #tpu.dot_dimension_numbers<[1], [1], [0], [0], [0, 0, 1, 0], [], []>} : vector<8x32xbf16>, vector<16x32xbf16>, vector<8x16xf32> -> vector<8x16xf32>
    %cst_146 = arith.constant dense<0xFF800000> : vector<8xf32>
    %371 = vector.multi_reduction <maximumf>, %370, %cst_146 [1] : vector<8x16xf32> to vector<8xf32>
    %372 = vector.shape_cast %371 : vector<8xf32> to vector<8x1xf32>
    %373 = vector.broadcast %372 : vector<8x1xf32> to vector<8x16xf32>
    %374 = arith.subf %370, %373 : vector<8x16xf32>
    %375 = math.exp %374 : vector<8x16xf32>
    %cst_147 = arith.constant dense<0.000000e+00> : vector<8xf32>
    %376 = vector.multi_reduction <add>, %375, %cst_147 [1] : vector<8x16xf32> to vector<8xf32>
    %377 = vector.shape_cast %376 : vector<8xf32> to vector<8x1xf32>
    %378 = tpu.reciprocal %377 {approx = true} : vector<8x1xf32> -> vector<8x1xf32>
    %379 = vector.broadcast %378 : vector<8x1xf32> to vector<8x16xf32>
    %380 = arith.mulf %375, %379 : vector<8x16xf32>
    %c0_148 = arith.constant 0 : index
    %c3_149 = arith.constant 3 : index
    %c0_150 = arith.constant 0 : index
    %c0_151 = arith.constant 0 : index
    %381 = vector.load %arg16[%c0_148, %c3_149, %c0_150, %c0_151] : memref<2x4x8x16xf32, #tpu.memory_space<vmem>>, vector<1x1x8x16xf32>
    %382 = vector.shape_cast %381 : vector<1x1x8x16xf32> to vector<8x16xf32>
    %383 = vector.shape_cast %380 : vector<8x16xf32> to vector<1x1x8x16xf32>
    tpu.vector_store %arg16[%c0_148, %c3_149, %c0_150, %c0_151], %383 {strides = array<i32>} : memref<2x4x8x16xf32, #tpu.memory_space<vmem>>, vector<1x1x8x16xf32>,
    %384 = arith.truncf %380 : vector<8x16xf32> to vector<8x16xbf16>
    %cst_152 = arith.constant dense<0.000000e+00> : vector<8x32xf32>
    %385 = tpu.matmul %384, %369, %cst_152 {dimension_numbers = #tpu.dot_dimension_numbers<[1], [0], [0], [1], [0, 0, 1, 1], [], []>} : vector<8x16xbf16>, vector<16x32xbf16>, vector<8x32xf32> -> vector<8x32xf32>
    %386 = arith.truncf %385 : vector<8x32xf32> to vector<8x32xbf16>
    %387 = vector.extract_strided_slice %293 {offsets = [96, 0], sizes = [32, 128], strides = [1, 1]} : vector<128x128xbf16> to vector<32x128xbf16>
    %cst_153 = arith.constant dense<0.000000e+00> : vector<8x128xf32>
    %388 = tpu.matmul %386, %387, %cst_153 {dimension_numbers = #tpu.dot_dimension_numbers<[1], [0], [0], [1], [0, 0, 1, 1], [], []>} : vector<8x32xbf16>, vector<32x128xbf16>, vector<8x128xf32> -> vector<8x128xf32>
    %389 = arith.addf %366, %388 : vector<8x128xf32>
    %c0_154 = arith.constant 0 : index
    %c0_155 = arith.constant 0 : index
    %390 = vector.load %arg17[%c0_154, %c0_155] : memref<16x128xf32, #tpu.memory_space<vmem>>, vector<8x128xf32>
    tpu.vector_store %arg17[%c0_154, %c0_155], %389 {strides = array<i32>} : memref<16x128xf32, #tpu.memory_space<vmem>>, vector<8x128xf32>,
    %391 = vector.extract_strided_slice %290 {offsets = [8, 0], sizes = [8, 128], strides = [1, 1]} : vector<16x128xbf16> to vector<8x128xbf16>
    %392 = vector.extract_strided_slice %291 {offsets = [16, 0], sizes = [16, 128], strides = [1, 1]} : vector<32x128xbf16> to vector<16x128xbf16>
    %393 = vector.extract_strided_slice %292 {offsets = [16, 0], sizes = [16, 128], strides = [1, 1]} : vector<32x128xbf16> to vector<16x128xbf16>
    %cst_156 = arith.constant 0.000000e+00 : f32
    %394 = vector.broadcast %cst_156 : f32 to vector<8x128xf32>
    %395 = vector.extract_strided_slice %391 {offsets = [0, 0], sizes = [8, 32], strides = [1, 1]} : vector<8x128xbf16> to vector<8x32xbf16>
    %396 = vector.extract_strided_slice %392 {offsets = [0, 0], sizes = [16, 32], strides = [1, 1]} : vector<16x128xbf16> to vector<16x32xbf16>
    %397 = vector.extract_strided_slice %393 {offsets = [0, 0], sizes = [16, 32], strides = [1, 1]} : vector<16x128xbf16> to vector<16x32xbf16>
    %cst_157 = arith.constant dense<0.000000e+00> : vector<8x16xf32>
    %398 = tpu.matmul %395, %396, %cst_157 {dimension_numbers = #tpu.dot_dimension_numbers<[1], [1], [0], [0], [0, 0, 1, 0], [], []>} : vector<8x32xbf16>, vector<16x32xbf16>, vector<8x16xf32> -> vector<8x16xf32>
    %cst_158 = arith.constant dense<0xFF800000> : vector<8xf32>
    %399 = vector.multi_reduction <maximumf>, %398, %cst_158 [1] : vector<8x16xf32> to vector<8xf32>
    %400 = vector.shape_cast %399 : vector<8xf32> to vector<8x1xf32>
    %401 = vector.broadcast %400 : vector<8x1xf32> to vector<8x16xf32>
    %402 = arith.subf %398, %401 : vector<8x16xf32>
    %403 = math.exp %402 : vector<8x16xf32>
    %cst_159 = arith.constant dense<0.000000e+00> : vector<8xf32>
    %404 = vector.multi_reduction <add>, %403, %cst_159 [1] : vector<8x16xf32> to vector<8xf32>
    %405 = vector.shape_cast %404 : vector<8xf32> to vector<8x1xf32>
    %406 = tpu.reciprocal %405 {approx = true} : vector<8x1xf32> -> vector<8x1xf32>
    %407 = vector.broadcast %406 : vector<8x1xf32> to vector<8x16xf32>
    %408 = arith.mulf %403, %407 : vector<8x16xf32>
    %c1_160 = arith.constant 1 : index
    %c0_161 = arith.constant 0 : index
    %c0_162 = arith.constant 0 : index
    %c0_163 = arith.constant 0 : index
    %409 = vector.load %arg16[%c1_160, %c0_161, %c0_162, %c0_163] : memref<2x4x8x16xf32, #tpu.memory_space<vmem>>, vector<1x1x8x16xf32>
    %410 = vector.shape_cast %409 : vector<1x1x8x16xf32> to vector<8x16xf32>
    %411 = vector.shape_cast %408 : vector<8x16xf32> to vector<1x1x8x16xf32>
    tpu.vector_store %arg16[%c1_160, %c0_161, %c0_162, %c0_163], %411 {strides = array<i32>} : memref<2x4x8x16xf32, #tpu.memory_space<vmem>>, vector<1x1x8x16xf32>,
    %412 = arith.truncf %408 : vector<8x16xf32> to vector<8x16xbf16>
    %cst_164 = arith.constant dense<0.000000e+00> : vector<8x32xf32>
    %413 = tpu.matmul %412, %397, %cst_164 {dimension_numbers = #tpu.dot_dimension_numbers<[1], [0], [0], [1], [0, 0, 1, 1], [], []>} : vector<8x16xbf16>, vector<16x32xbf16>, vector<8x32xf32> -> vector<8x32xf32>
    %414 = arith.truncf %413 : vector<8x32xf32> to vector<8x32xbf16>
    %415 = vector.extract_strided_slice %293 {offsets = [0, 0], sizes = [32, 128], strides = [1, 1]} : vector<128x128xbf16> to vector<32x128xbf16>
    %cst_165 = arith.constant dense<0.000000e+00> : vector<8x128xf32>
    %416 = tpu.matmul %414, %415, %cst_165 {dimension_numbers = #tpu.dot_dimension_numbers<[1], [0], [0], [1], [0, 0, 1, 1], [], []>} : vector<8x32xbf16>, vector<32x128xbf16>, vector<8x128xf32> -> vector<8x128xf32>
    %417 = arith.addf %394, %416 : vector<8x128xf32>
    %418 = vector.extract_strided_slice %391 {offsets = [0, 32], sizes = [8, 32], strides = [1, 1]} : vector<8x128xbf16> to vector<8x32xbf16>
    %419 = vector.extract_strided_slice %392 {offsets = [0, 32], sizes = [16, 32], strides = [1, 1]} : vector<16x128xbf16> to vector<16x32xbf16>
    %420 = vector.extract_strided_slice %393 {offsets = [0, 32], sizes = [16, 32], strides = [1, 1]} : vector<16x128xbf16> to vector<16x32xbf16>
    %cst_166 = arith.constant dense<0.000000e+00> : vector<8x16xf32>
    %421 = tpu.matmul %418, %419, %cst_166 {dimension_numbers = #tpu.dot_dimension_numbers<[1], [1], [0], [0], [0, 0, 1, 0], [], []>} : vector<8x32xbf16>, vector<16x32xbf16>, vector<8x16xf32> -> vector<8x16xf32>
    %cst_167 = arith.constant dense<0xFF800000> : vector<8xf32>
    %422 = vector.multi_reduction <maximumf>, %421, %cst_167 [1] : vector<8x16xf32> to vector<8xf32>
    %423 = vector.shape_cast %422 : vector<8xf32> to vector<8x1xf32>
    %424 = vector.broadcast %423 : vector<8x1xf32> to vector<8x16xf32>
    %425 = arith.subf %421, %424 : vector<8x16xf32>
    %426 = math.exp %425 : vector<8x16xf32>
    %cst_168 = arith.constant dense<0.000000e+00> : vector<8xf32>
    %427 = vector.multi_reduction <add>, %426, %cst_168 [1] : vector<8x16xf32> to vector<8xf32>
    %428 = vector.shape_cast %427 : vector<8xf32> to vector<8x1xf32>
    %429 = tpu.reciprocal %428 {approx = true} : vector<8x1xf32> -> vector<8x1xf32>
    %430 = vector.broadcast %429 : vector<8x1xf32> to vector<8x16xf32>
    %431 = arith.mulf %426, %430 : vector<8x16xf32>
    %c1_169 = arith.constant 1 : index
    %c1_170 = arith.constant 1 : index
    %c0_171 = arith.constant 0 : index
    %c0_172 = arith.constant 0 : index
    %432 = vector.load %arg16[%c1_169, %c1_170, %c0_171, %c0_172] : memref<2x4x8x16xf32, #tpu.memory_space<vmem>>, vector<1x1x8x16xf32>
    %433 = vector.shape_cast %432 : vector<1x1x8x16xf32> to vector<8x16xf32>
    %434 = vector.shape_cast %431 : vector<8x16xf32> to vector<1x1x8x16xf32>
    tpu.vector_store %arg16[%c1_169, %c1_170, %c0_171, %c0_172], %434 {strides = array<i32>} : memref<2x4x8x16xf32, #tpu.memory_space<vmem>>, vector<1x1x8x16xf32>,
    %435 = arith.truncf %431 : vector<8x16xf32> to vector<8x16xbf16>
    %cst_173 = arith.constant dense<0.000000e+00> : vector<8x32xf32>
    %436 = tpu.matmul %435, %420, %cst_173 {dimension_numbers = #tpu.dot_dimension_numbers<[1], [0], [0], [1], [0, 0, 1, 1], [], []>} : vector<8x16xbf16>, vector<16x32xbf16>, vector<8x32xf32> -> vector<8x32xf32>
    %437 = arith.truncf %436 : vector<8x32xf32> to vector<8x32xbf16>
    %438 = vector.extract_strided_slice %293 {offsets = [32, 0], sizes = [32, 128], strides = [1, 1]} : vector<128x128xbf16> to vector<32x128xbf16>
    %cst_174 = arith.constant dense<0.000000e+00> : vector<8x128xf32>
    %439 = tpu.matmul %437, %438, %cst_174 {dimension_numbers = #tpu.dot_dimension_numbers<[1], [0], [0], [1], [0, 0, 1, 1], [], []>} : vector<8x32xbf16>, vector<32x128xbf16>, vector<8x128xf32> -> vector<8x128xf32>
    %440 = arith.addf %417, %439 : vector<8x128xf32>
    %441 = vector.extract_strided_slice %391 {offsets = [0, 64], sizes = [8, 32], strides = [1, 1]} : vector<8x128xbf16> to vector<8x32xbf16>
    %442 = vector.extract_strided_slice %392 {offsets = [0, 64], sizes = [16, 32], strides = [1, 1]} : vector<16x128xbf16> to vector<16x32xbf16>
    %443 = vector.extract_strided_slice %393 {offsets = [0, 64], sizes = [16, 32], strides = [1, 1]} : vector<16x128xbf16> to vector<16x32xbf16>
    %cst_175 = arith.constant dense<0.000000e+00> : vector<8x16xf32>
    %444 = tpu.matmul %441, %442, %cst_175 {dimension_numbers = #tpu.dot_dimension_numbers<[1], [1], [0], [0], [0, 0, 1, 0], [], []>} : vector<8x32xbf16>, vector<16x32xbf16>, vector<8x16xf32> -> vector<8x16xf32>
    %cst_176 = arith.constant dense<0xFF800000> : vector<8xf32>
    %445 = vector.multi_reduction <maximumf>, %444, %cst_176 [1] : vector<8x16xf32> to vector<8xf32>
    %446 = vector.shape_cast %445 : vector<8xf32> to vector<8x1xf32>
    %447 = vector.broadcast %446 : vector<8x1xf32> to vector<8x16xf32>
    %448 = arith.subf %444, %447 : vector<8x16xf32>
    %449 = math.exp %448 : vector<8x16xf32>
    %cst_177 = arith.constant dense<0.000000e+00> : vector<8xf32>
    %450 = vector.multi_reduction <add>, %449, %cst_177 [1] : vector<8x16xf32> to vector<8xf32>
    %451 = vector.shape_cast %450 : vector<8xf32> to vector<8x1xf32>
    %452 = tpu.reciprocal %451 {approx = true} : vector<8x1xf32> -> vector<8x1xf32>
    %453 = vector.broadcast %452 : vector<8x1xf32> to vector<8x16xf32>
    %454 = arith.mulf %449, %453 : vector<8x16xf32>
    %c1_178 = arith.constant 1 : index
    %c2_179 = arith.constant 2 : index
    %c0_180 = arith.constant 0 : index
    %c0_181 = arith.constant 0 : index
    %455 = vector.load %arg16[%c1_178, %c2_179, %c0_180, %c0_181] : memref<2x4x8x16xf32, #tpu.memory_space<vmem>>, vector<1x1x8x16xf32>
    %456 = vector.shape_cast %455 : vector<1x1x8x16xf32> to vector<8x16xf32>
    %457 = vector.shape_cast %454 : vector<8x16xf32> to vector<1x1x8x16xf32>
    tpu.vector_store %arg16[%c1_178, %c2_179, %c0_180, %c0_181], %457 {strides = array<i32>} : memref<2x4x8x16xf32, #tpu.memory_space<vmem>>, vector<1x1x8x16xf32>,
    %458 = arith.truncf %454 : vector<8x16xf32> to vector<8x16xbf16>
    %cst_182 = arith.constant dense<0.000000e+00> : vector<8x32xf32>
    %459 = tpu.matmul %458, %443, %cst_182 {dimension_numbers = #tpu.dot_dimension_numbers<[1], [0], [0], [1], [0, 0, 1, 1], [], []>} : vector<8x16xbf16>, vector<16x32xbf16>, vector<8x32xf32> -> vector<8x32xf32>
    %460 = arith.truncf %459 : vector<8x32xf32> to vector<8x32xbf16>
    %461 = vector.extract_strided_slice %293 {offsets = [64, 0], sizes = [32, 128], strides = [1, 1]} : vector<128x128xbf16> to vector<32x128xbf16>
    %cst_183 = arith.constant dense<0.000000e+00> : vector<8x128xf32>
    %462 = tpu.matmul %460, %461, %cst_183 {dimension_numbers = #tpu.dot_dimension_numbers<[1], [0], [0], [1], [0, 0, 1, 1], [], []>} : vector<8x32xbf16>, vector<32x128xbf16>, vector<8x128xf32> -> vector<8x128xf32>
    %463 = arith.addf %440, %462 : vector<8x128xf32>
    %464 = vector.extract_strided_slice %391 {offsets = [0, 96], sizes = [8, 32], strides = [1, 1]} : vector<8x128xbf16> to vector<8x32xbf16>
    %465 = vector.extract_strided_slice %392 {offsets = [0, 96], sizes = [16, 32], strides = [1, 1]} : vector<16x128xbf16> to vector<16x32xbf16>
    %466 = vector.extract_strided_slice %393 {offsets = [0, 96], sizes = [16, 32], strides = [1, 1]} : vector<16x128xbf16> to vector<16x32xbf16>
    %cst_184 = arith.constant dense<0.000000e+00> : vector<8x16xf32>
    %467 = tpu.matmul %464, %465, %cst_184 {dimension_numbers = #tpu.dot_dimension_numbers<[1], [1], [0], [0], [0, 0, 1, 0], [], []>} : vector<8x32xbf16>, vector<16x32xbf16>, vector<8x16xf32> -> vector<8x16xf32>
    %cst_185 = arith.constant dense<0xFF800000> : vector<8xf32>
    %468 = vector.multi_reduction <maximumf>, %467, %cst_185 [1] : vector<8x16xf32> to vector<8xf32>
    %469 = vector.shape_cast %468 : vector<8xf32> to vector<8x1xf32>
    %470 = vector.broadcast %469 : vector<8x1xf32> to vector<8x16xf32>
    %471 = arith.subf %467, %470 : vector<8x16xf32>
    %472 = math.exp %471 : vector<8x16xf32>
    %cst_186 = arith.constant dense<0.000000e+00> : vector<8xf32>
    %473 = vector.multi_reduction <add>, %472, %cst_186 [1] : vector<8x16xf32> to vector<8xf32>
    %474 = vector.shape_cast %473 : vector<8xf32> to vector<8x1xf32>
    %475 = tpu.reciprocal %474 {approx = true} : vector<8x1xf32> -> vector<8x1xf32>
    %476 = vector.broadcast %475 : vector<8x1xf32> to vector<8x16xf32>
    %477 = arith.mulf %472, %476 : vector<8x16xf32>
    %c1_187 = arith.constant 1 : index
    %c3_188 = arith.constant 3 : index
    %c0_189 = arith.constant 0 : index
    %c0_190 = arith.constant 0 : index
    %478 = vector.load %arg16[%c1_187, %c3_188, %c0_189, %c0_190] : memref<2x4x8x16xf32, #tpu.memory_space<vmem>>, vector<1x1x8x16xf32>
    %479 = vector.shape_cast %478 : vector<1x1x8x16xf32> to vector<8x16xf32>
    %480 = vector.shape_cast %477 : vector<8x16xf32> to vector<1x1x8x16xf32>
    tpu.vector_store %arg16[%c1_187, %c3_188, %c0_189, %c0_190], %480 {strides = array<i32>} : memref<2x4x8x16xf32, #tpu.memory_space<vmem>>, vector<1x1x8x16xf32>,
    %481 = arith.truncf %477 : vector<8x16xf32> to vector<8x16xbf16>
    %cst_191 = arith.constant dense<0.000000e+00> : vector<8x32xf32>
    %482 = tpu.matmul %481, %466, %cst_191 {dimension_numbers = #tpu.dot_dimension_numbers<[1], [0], [0], [1], [0, 0, 1, 1], [], []>} : vector<8x16xbf16>, vector<16x32xbf16>, vector<8x32xf32> -> vector<8x32xf32>
    %483 = arith.truncf %482 : vector<8x32xf32> to vector<8x32xbf16>
    %484 = vector.extract_strided_slice %293 {offsets = [96, 0], sizes = [32, 128], strides = [1, 1]} : vector<128x128xbf16> to vector<32x128xbf16>
    %cst_192 = arith.constant dense<0.000000e+00> : vector<8x128xf32>
    %485 = tpu.matmul %483, %484, %cst_192 {dimension_numbers = #tpu.dot_dimension_numbers<[1], [0], [0], [1], [0, 0, 1, 1], [], []>} : vector<8x32xbf16>, vector<32x128xbf16>, vector<8x128xf32> -> vector<8x128xf32>
    %486 = arith.addf %463, %485 : vector<8x128xf32>
    %c8_193 = arith.constant 8 : index
    %c0_194 = arith.constant 0 : index
    %487 = vector.load %arg17[%c8_193, %c0_194] : memref<16x128xf32, #tpu.memory_space<vmem>>, vector<8x128xf32>
    tpu.vector_store %arg17[%c8_193, %c0_194], %486 {strides = array<i32>} : memref<16x128xf32, #tpu.memory_space<vmem>>, vector<8x128xf32>,
    %c0_195 = arith.constant 0 : index
    %c0_196 = arith.constant 0 : index
    %488 = vector.load %arg17[%c0_195, %c0_196] : memref<16x128xf32, #tpu.memory_space<vmem>>, vector<16x128xf32>
    %489 = vector.broadcast %272 : vector<1x128xf32> to vector<16x128xf32>
    %490 = arith.addf %488, %489 : vector<16x128xf32>
    %491 = arith.addf %490, %268 : vector<16x128xf32>
    %492 = vector.extract_strided_slice %2 {offsets = [11, 0], sizes = [1, 128], strides = [1, 1]} : vector<15x128xf32> to vector<1x128xf32>
    %493 = vector.extract_strided_slice %2 {offsets = [12, 0], sizes = [1, 128], strides = [1, 1]} : vector<15x128xf32> to vector<1x128xf32>
    %cst_197 = arith.constant dense<0.000000e+00> : vector<16xf32>
    %494 = vector.multi_reduction <add>, %491, %cst_197 [1] : vector<16x128xf32> to vector<16xf32>
    %495 = vector.shape_cast %494 : vector<16xf32> to vector<16x1xf32>
    %cst_198 = arith.constant 1.280000e+02 : f32
    %496 = vector.broadcast %cst_198 : f32 to vector<16x1xf32>
    %497 = arith.divf %495, %496 : vector<16x1xf32>
    %498 = vector.broadcast %497 : vector<16x1xf32> to vector<16x128xf32>
    %499 = arith.subf %491, %498 : vector<16x128xf32>
    %500 = arith.mulf %499, %499 : vector<16x128xf32>
    %cst_199 = arith.constant dense<0.000000e+00> : vector<16xf32>
    %501 = vector.multi_reduction <add>, %500, %cst_199 [1] : vector<16x128xf32> to vector<16xf32>
    %502 = vector.shape_cast %501 : vector<16xf32> to vector<16x1xf32>
    %cst_200 = arith.constant 1.280000e+02 : f32
    %503 = vector.broadcast %cst_200 : f32 to vector<16x1xf32>
    %504 = arith.divf %502, %503 : vector<16x1xf32>
    %505 = vector.broadcast %497 : vector<16x1xf32> to vector<16x128xf32>
    %506 = arith.subf %491, %505 : vector<16x128xf32>
    %cst_201 = arith.constant 9.99999974E-6 : f32
    %507 = vector.broadcast %cst_201 : f32 to vector<16x1xf32>
    %508 = arith.addf %504, %507 : vector<16x1xf32>
    %509 = math.rsqrt %508 : vector<16x1xf32>
    %510 = vector.broadcast %509 : vector<16x1xf32> to vector<16x128xf32>
    %511 = arith.mulf %506, %510 : vector<16x128xf32>
    %512 = vector.broadcast %492 : vector<1x128xf32> to vector<16x128xf32>
    %513 = arith.mulf %511, %512 : vector<16x128xf32>
    %514 = vector.broadcast %493 : vector<1x128xf32> to vector<16x128xf32>
    %515 = arith.addf %513, %514 : vector<16x128xf32>
    %516 = arith.truncf %515 : vector<16x128xf32> to vector<16x128xbf16>
    %c0_202 = arith.constant 0 : index
    %c0_203 = arith.constant 0 : index
    %517 = vector.load %arg10[%c0_202, %c0_203] : memref<128x256xbf16, #tpu.memory_space<vmem>>, vector<128x256xbf16>
    %cst_204 = arith.constant dense<0.000000e+00> : vector<16x256xf32>
    %518 = tpu.matmul %516, %517, %cst_204 {dimension_numbers = #tpu.dot_dimension_numbers<[1], [0], [0], [1], [0, 0, 1, 1], [], []>} : vector<16x128xbf16>, vector<128x256xbf16>, vector<16x256xf32> -> vector<16x256xf32>
    %c0_205 = arith.constant 0 : index
    %c0_206 = arith.constant 0 : index
    %519 = vector.load %arg13[%c0_205, %c0_206] : memref<1x256xf32, #tpu.memory_space<vmem>>, vector<1x256xf32>
    %520 = vector.broadcast %519 : vector<1x256xf32> to vector<16x256xf32>
    %521 = arith.addf %518, %520 : vector<16x256xf32>
    %cst_207 = arith.constant 0.000000e+00 : f32
    %522 = vector.broadcast %cst_207 : f32 to vector<16x256xf32>
    %523 = arith.maximumf %521, %522 : vector<16x256xf32>
    %524 = arith.truncf %523 : vector<16x256xf32> to vector<16x256xbf16>
    %c0_208 = arith.constant 0 : index
    %c0_209 = arith.constant 0 : index
    %525 = vector.load %arg11[%c0_208, %c0_209] : memref<256x128xbf16, #tpu.memory_space<vmem>>, vector<256x128xbf16>
    %cst_210 = arith.constant dense<0.000000e+00> : vector<16x128xf32>
    %526 = tpu.matmul %524, %525, %cst_210 {dimension_numbers = #tpu.dot_dimension_numbers<[1], [0], [0], [1], [0, 0, 1, 1], [], []>} : vector<16x256xbf16>, vector<256x128xbf16>, vector<16x128xf32> -> vector<16x128xf32>
    %527 = vector.extract_strided_slice %2 {offsets = [8, 0], sizes = [1, 128], strides = [1, 1]} : vector<15x128xf32> to vector<1x128xf32>
    %528 = vector.broadcast %527 : vector<1x128xf32> to vector<16x128xf32>
    %529 = arith.addf %526, %528 : vector<16x128xf32>
    %530 = arith.addf %515, %529 : vector<16x128xf32>
    %531 = vector.extract_strided_slice %2 {offsets = [13, 0], sizes = [1, 128], strides = [1, 1]} : vector<15x128xf32> to vector<1x128xf32>
    %532 = vector.extract_strided_slice %2 {offsets = [14, 0], sizes = [1, 128], strides = [1, 1]} : vector<15x128xf32> to vector<1x128xf32>
    %cst_211 = arith.constant dense<0.000000e+00> : vector<16xf32>
    %533 = vector.multi_reduction <add>, %530, %cst_211 [1] : vector<16x128xf32> to vector<16xf32>
    %534 = vector.shape_cast %533 : vector<16xf32> to vector<16x1xf32>
    %cst_212 = arith.constant 1.280000e+02 : f32
    %535 = vector.broadcast %cst_212 : f32 to vector<16x1xf32>
    %536 = arith.divf %534, %535 : vector<16x1xf32>
    %537 = vector.broadcast %536 : vector<16x1xf32> to vector<16x128xf32>
    %538 = arith.subf %530, %537 : vector<16x128xf32>
    %539 = arith.mulf %538, %538 : vector<16x128xf32>
    %cst_213 = arith.constant dense<0.000000e+00> : vector<16xf32>
    %540 = vector.multi_reduction <add>, %539, %cst_213 [1] : vector<16x128xf32> to vector<16xf32>
    %541 = vector.shape_cast %540 : vector<16xf32> to vector<16x1xf32>
    %cst_214 = arith.constant 1.280000e+02 : f32
    %542 = vector.broadcast %cst_214 : f32 to vector<16x1xf32>
    %543 = arith.divf %541, %542 : vector<16x1xf32>
    %544 = vector.broadcast %536 : vector<16x1xf32> to vector<16x128xf32>
    %545 = arith.subf %530, %544 : vector<16x128xf32>
    %cst_215 = arith.constant 9.99999974E-6 : f32
    %546 = vector.broadcast %cst_215 : f32 to vector<16x1xf32>
    %547 = arith.addf %543, %546 : vector<16x1xf32>
    %548 = math.rsqrt %547 : vector<16x1xf32>
    %549 = vector.broadcast %548 : vector<16x1xf32> to vector<16x128xf32>
    %550 = arith.mulf %545, %549 : vector<16x128xf32>
    %551 = vector.broadcast %531 : vector<1x128xf32> to vector<16x128xf32>
    %552 = arith.mulf %550, %551 : vector<16x128xf32>
    %553 = vector.broadcast %532 : vector<1x128xf32> to vector<16x128xf32>
    %554 = arith.addf %552, %553 : vector<16x128xf32>
    %c0_216 = arith.constant 0 : index
    %c0_217 = arith.constant 0 : index
    %555 = vector.load %arg14[%c0_216, %c0_217] : memref<16x128xf32, #tpu.memory_space<vmem>>, vector<16x128xf32>
    tpu.vector_store %arg14[%c0_216, %c0_217], %554 {strides = array<i32>} : memref<16x128xf32, #tpu.memory_space<vmem>>, vector<16x128xf32>,
    return
  }
}

</mosaic_0001>

<llo_original>
// kernel: tpu_custom_call.1
$region0: #{tpu_custom_call.1}
  #allocation0 [shape = 'u32[]', space=smem, size = 0x4, offset = 0x4, fixed_abs, tag = 'smem constant byte address 0x4 - core index']
  #allocation1 [shape = 'u32[144,128]{1,0:T(1,128)}', space=vmem, size = 0x12000, scoped, tag = 'internal scratch']
  #allocation2 [shape = 'f32[16,128]{1,0:T(8,128)}', space=vmem, size = 0x2000, scoped, tag = 'scratch operand']
  %s0 = inlined_call_operand.hbm [shape: f32[16,128], index: 0, kind: input, shape index: {}]
  %s1 = inlined_call_operand.hbm [shape: f32[32,128], index: 1, kind: input, shape index: {}]
  %s2 = inlined_call_operand.hbm [shape: bf16[128,128], index: 2, kind: input, shape index: {}]
  %s3 = inlined_call_operand.hbm [shape: bf16[128,128], index: 3, kind: input, shape index: {}]
  %s4 = inlined_call_operand.hbm [shape: bf16[128,128], index: 4, kind: input, shape index: {}]
  %s5 = inlined_call_operand.hbm [shape: bf16[128,128], index: 5, kind: input, shape index: {}]
  %s6 = inlined_call_operand.hbm [shape: bf16[128,128], index: 6, kind: input, shape index: {}]
  %s7 = inlined_call_operand.hbm [shape: bf16[128,128], index: 7, kind: input, shape index: {}]
  %s8 = inlined_call_operand.hbm [shape: bf16[128,128], index: 8, kind: input, shape index: {}]
  %s9 = inlined_call_operand.hbm [shape: bf16[128,128], index: 9, kind: input, shape index: {}]
  %s10 = inlined_call_operand.hbm [shape: bf16[128,256], index: 10, kind: input, shape index: {}]
  %s11 = inlined_call_operand.hbm [shape: bf16[256,128], index: 11, kind: input, shape index: {}]
  %s12 = inlined_call_operand.vmem [shape: f32[15,128], index: 12, kind: input, shape index: {}]
  %s13 = inlined_call_operand.vmem [shape: f32[1,256], index: 13, kind: input, shape index: {}]
  %s14 = inlined_call_operand.hbm [shape: f32[16,128], index: 14, kind: output, shape index: {0}]
  %s15 = inlined_call_operand.hbm [shape: f32[2,4,8,8], index: 15, kind: output, shape index: {1}]
  %s16 = inlined_call_operand.hbm [shape: f32[2,4,8,16], index: 16, kind: output, shape index: {2}]
  %17 = xla_tuple %s14, %s15, %s16
  %s18 = sld [smem:[#allocation0]]
  $region130: #{tpu_custom_call.1} parent=0
    _
  %s20 = ssub.s32 1, %s18
  %s21 = scalar_select 0, %s20, %s18
  $region1: #{tpu_custom_call.1} parent=0
    #allocation3 [shape = 'u8[8192]{0}', space=vmem, size = 0x2000, scoped, tag = 'input window, operand 0, single buffered']
    #allocation4 [shape = 's32[1]{0}', space=sflag, size = 0x4, scoped, tag = 'scoped memory for tpu_custom_call.1']
    #allocation5 [shape = 's32[1]{0}', space=sflag, size = 0x4, scoped, tag = 'scoped memory for tpu_custom_call.1']
    #allocation6 [shape = 'u8[16384]{0}', space=vmem, size = 0x4000, scoped, tag = 'input window, operand 1, single buffered']
    #allocation7 [shape = 's32[1]{0}', space=sflag, size = 0x4, scoped, tag = 'scoped memory for tpu_custom_call.1']
    #allocation8 [shape = 'u8[32768]{0}', space=vmem, size = 0x8000, scoped, tag = 'input window, operand 2, single buffered']
    #allocation9 [shape = 'u8[32768]{0}', space=vmem, size = 0x8000, scoped, tag = 'input window, operand 3, single buffered']
    #allocation10 [shape = 's32[1]{0}', space=sflag, size = 0x4, scoped, tag = 'scoped memory for tpu_custom_call.1']
    #allocation11 [shape = 'u8[32768]{0}', space=vmem, size = 0x8000, scoped, tag = 'input window, operand 4, single buffered']
    #allocation12 [shape = 'u8[32768]{0}', space=vmem, size = 0x8000, scoped, tag = 'input window, operand 5, single buffered']
    #allocation13 [shape = 's32[1]{0}', space=sflag, size = 0x4, scoped, tag = 'scoped memory for tpu_custom_call.1']
    #allocation14 [shape = 'u8[32768]{0}', space=vmem, size = 0x8000, scoped, tag = 'input window, operand 6, single buffered']
    #allocation15 [shape = 'u8[32768]{0}', space=vmem, size = 0x8000, scoped, tag = 'input window, operand 7, single buffered']
    #allocation16 [shape = 's32[1]{0}', space=sflag, size = 0x4, scoped, tag = 'scoped memory for tpu_custom_call.1']
    #allocation17 [shape = 'u8[32768]{0}', space=vmem, size = 0x8000, scoped, tag = 'input window, operand 8, single buffered']
    #allocation18 [shape = 'u8[32768]{0}', space=vmem, size = 0x8000, scoped, tag = 'input window, operand 9, single buffered']
    #allocation19 [shape = 's32[1]{0}', space=sflag, size = 0x4, scoped, tag = 'scoped memory for tpu_custom_call.1']
    #allocation20 [shape = 'u8[65536]{0}', space=vmem, size = 0x10000, scoped, tag = 'input window, operand 10, single buffered']
    #allocation21 [shape = 'u8[65536]{0}', space=vmem, size = 0x10000, scoped, tag = 'input window, operand 11, single buffered']
    #allocation22 [shape = 's32[1]{0}', space=sflag, size = 0x4, scoped, tag = 'scoped memory for tpu_custom_call.1']
    #allocation23 [shape = 'u8[8192]{0}', space=vmem, size = 0x2000, scoped, tag = 'output window, operand 0, single buffered']
    #allocation24 [shape = 'u8[32768]{0}', space=vmem, size = 0x8000, scoped, tag = 'output window, operand 1, single buffered']
    #allocation25 [shape = 's32[1]{0}', space=sflag, size = 0x4, scoped, tag = 'scoped memory for tpu_custom_call.1']
    #allocation26 [shape = 'u8[32768]{0}', space=vmem, size = 0x8000, scoped, tag = 'output window, operand 2, single buffered']
    %22 = vsyncpa [#allocation4], 0
    %23 = vsyncpa [#allocation7], 0
    %24 = vsyncpa [#allocation10], 0
    %25 = vsyncpa [#allocation13], 0
    %26 = vsyncpa [#allocation16], 0
    %27 = vsyncpa [#allocation19], 0
    %28 = vsyncpa [#allocation22], 0
    %29 = vsyncpa [#allocation5], 0
    %30 = vsyncpa [#allocation25], 0
    // Predicated region
    $region2: #{tpu_custom_call.1} parent=1 // pred_check
      _
    $region3: #{tpu_custom_call.1} parent=1 // pred_check_branch
      %32 = sbr.rel (0) target = $region5
    $region4: #{tpu_custom_call.1} parent=1 // pred_region
      %s34 = ssub.s32 256, 256
      %35 = vsyncadd [#allocation4], %s34
      %s36 = sshll.u32 [#allocation3], 4
      %s37 = int_to_ptr.vmem [resolvable:$true] %s36
      %42 = dma.hbm_to_vmem [thread:$0]  %s0, 256, %s37, [#allocation4], 128, 128, 8
    $region5: #{tpu_custom_call.1} parent=1 // pred_fallthru
      _
    // Predicated region
    $region6: #{tpu_custom_call.1} parent=1 // pred_check
      _
    $region7: #{tpu_custom_call.1} parent=1 // pred_check_branch
      %44 = sbr.rel (0) target = $region9
    $region8: #{tpu_custom_call.1} parent=1 // pred_region
      %s46 = ssub.s32 512, 512
      %47 = vsyncadd [#allocation7], %s46
      %s48 = sshll.u32 [#allocation6], 4
      %s49 = int_to_ptr.vmem [resolvable:$true] %s48
      %54 = dma.hbm_to_vmem [thread:$0]  %s1, 512, %s49, [#allocation7], 128, 128, 8
    $region9: #{tpu_custom_call.1} parent=1 // pred_fallthru
      _
    // Predicated region
    $region10: #{tpu_custom_call.1} parent=1 // pred_check
      _
    $region11: #{tpu_custom_call.1} parent=1 // pred_check_branch
      %56 = sbr.rel (0) target = $region13
    $region12: #{tpu_custom_call.1} parent=1 // pred_region
      %s58 = ssub.s32 1024, 1024
      %59 = vsyncadd [#allocation7], %s58
      %s60 = sshll.u32 [#allocation8], 4
      %s61 = int_to_ptr.vmem [resolvable:$true] %s60
      %66 = dma.hbm_to_vmem [thread:$0]  %s2, 1024, %s61, [#allocation7], 64, 64, 4
    $region13: #{tpu_custom_call.1} parent=1 // pred_fallthru
      _
    // Predicated region
    $region14: #{tpu_custom_call.1} parent=1 // pred_check
      _
    $region15: #{tpu_custom_call.1} parent=1 // pred_check_branch
      %68 = sbr.rel (0) target = $region17
    $region16: #{tpu_custom_call.1} parent=1 // pred_region
      %s70 = ssub.s32 1024, 1024
      %71 = vsyncadd [#allocation10], %s70
      %s72 = sshll.u32 [#allocation9], 4
      %s73 = int_to_ptr.vmem [resolvable:$true] %s72
      %78 = dma.hbm_to_vmem [thread:$0]  %s3, 1024, %s73, [#allocation10], 64, 64, 4
    $region17: #{tpu_custom_call.1} parent=1 // pred_fallthru
      _
    // Predicated region
    $region18: #{tpu_custom_call.1} parent=1 // pred_check
      _
    $region19: #{tpu_custom_call.1} parent=1 // pred_check_branch
      %80 = sbr.rel (0) target = $region21
    $region20: #{tpu_custom_call.1} parent=1 // pred_region
      %s82 = ssub.s32 1024, 1024
      %83 = vsyncadd [#allocation10], %s82
      %s84 = sshll.u32 [#allocation11], 4
      %s85 = int_to_ptr.vmem [resolvable:$true] %s84
      %90 = dma.hbm_to_vmem [thread:$0]  %s4, 1024, %s85, [#allocation10], 64, 64, 4
    $region21: #{tpu_custom_call.1} parent=1 // pred_fallthru
      _
    // Predicated region
    $region22: #{tpu_custom_call.1} parent=1 // pred_check
      _
    $region23: #{tpu_custom_call.1} parent=1 // pred_check_branch
      %92 = sbr.rel (0) target = $region25
    $region24: #{tpu_custom_call.1} parent=1 // pred_region
      %s94 = ssub.s32 1024, 1024
      %95 = vsyncadd [#allocation13], %s94
      %s96 = sshll.u32 [#allocation12], 4
      %s97 = int_to_ptr.vmem [resolvable:$true] %s96
      %102 = dma.hbm_to_vmem [thread:$0]  %s5, 1024, %s97, [#allocation13], 64, 64, 4
    $region25: #{tpu_custom_call.1} parent=1 // pred_fallthru
      _
    // Predicated region
    $region26: #{tpu_custom_call.1} parent=1 // pred_check
      _
    $region27: #{tpu_custom_call.1} parent=1 // pred_check_branch
      %104 = sbr.rel (0) target = $region29
    $region28: #{tpu_custom_call.1} parent=1 // pred_region
      %s106 = ssub.s32 1024, 1024
      %107 = vsyncadd [#allocation13], %s106
      %s108 = sshll.u32 [#allocation14], 4
      %s109 = int_to_ptr.vmem [resolvable:$true] %s108
      %114 = dma.hbm_to_vmem [thread:$0]  %s6, 1024, %s109, [#allocation13], 64, 64, 4
    $region29: #{tpu_custom_call.1} parent=1 // pred_fallthru
      _
    // Predicated region
    $region30: #{tpu_custom_call.1} parent=1 // pred_check
      _
    $region31: #{tpu_custom_call.1} parent=1 // pred_check_branch
      %116 = sbr.rel (0) target = $region33
    $region32: #{tpu_custom_call.1} parent=1 // pred_region
      %s118 = ssub.s32 1024, 1024
      %119 = vsyncadd [#allocation16], %s118
      %s120 = sshll.u32 [#allocation15], 4
      %s121 = int_to_ptr.vmem [resolvable:$true] %s120
      %126 = dma.hbm_to_vmem [thread:$0]  %s7, 1024, %s121, [#allocation16], 64, 64, 4
    $region33: #{tpu_custom_call.1} parent=1 // pred_fallthru
      _
    // Predicated region
    $region34: #{tpu_custom_call.1} parent=1 // pred_check
      _
    $region35: #{tpu_custom_call.1} parent=1 // pred_check_branch
      %128 = sbr.rel (0) target = $region37
    $region36: #{tpu_custom_call.1} parent=1 // pred_region
      %s130 = ssub.s32 1024, 1024
      %131 = vsyncadd [#allocation16], %s130
      %s132 = sshll.u32 [#allocation17], 4
      %s133 = int_to_ptr.vmem [resolvable:$true] %s132
      %138 = dma.hbm_to_vmem [thread:$0]  %s8, 1024, %s133, [#allocation16], 64, 64, 4
    $region37: #{tpu_custom_call.1} parent=1 // pred_fallthru
      _
    // Predicated region
    $region38: #{tpu_custom_call.1} parent=1 // pred_check
      _
    $region39: #{tpu_custom_call.1} parent=1 // pred_check_branch
      %140 = sbr.rel (0) target = $region41
    $region40: #{tpu_custom_call.1} parent=1 // pred_region
      %s142 = ssub.s32 1024, 1024
      %143 = vsyncadd [#allocation19], %s142
      %s144 = sshll.u32 [#allocation18], 4
      %s145 = int_to_ptr.vmem [resolvable:$true] %s144
      %150 = dma.hbm_to_vmem [thread:$0]  %s9, 1024, %s145, [#allocation19], 64, 64, 4
    $region41: #{tpu_custom_call.1} parent=1 // pred_fallthru
      _
    // Predicated region
    $region42: #{tpu_custom_call.1} parent=1 // pred_check
      _
    $region43: #{tpu_custom_call.1} parent=1 // pred_check_branch
      %152 = sbr.rel (0) target = $region45
    $region44: #{tpu_custom_call.1} parent=1 // pred_region
      %s154 = ssub.s32 2048, 2048
      %155 = vsyncadd [#allocation19], %s154
      %s156 = sshll.u32 [#allocation20], 4
      %s157 = int_to_ptr.vmem [resolvable:$true] %s156
      %162 = dma.hbm_to_vmem [thread:$0]  %s10, 2048, %s157, [#allocation19], 128, 128, 8
    $region45: #{tpu_custom_call.1} parent=1 // pred_fallthru
      _
    // Predicated region
    $region46: #{tpu_custom_call.1} parent=1 // pred_check
      _
    $region47: #{tpu_custom_call.1} parent=1 // pred_check_branch
      %164 = sbr.rel (0) target = $region49
    $region48: #{tpu_custom_call.1} parent=1 // pred_region
      %s166 = ssub.s32 2048, 2048
      %167 = vsyncadd [#allocation22], %s166
      %s168 = sshll.u32 [#allocation21], 4
      %s169 = int_to_ptr.vmem [resolvable:$true] %s168
      %174 = dma.hbm_to_vmem [thread:$0]  %s11, 2048, %s169, [#allocation22], 64, 64, 4
    $region49: #{tpu_custom_call.1} parent=1 // pred_fallthru
      _
    // Predicated region
    $region50: #{tpu_custom_call.1} parent=1 // pred_check
      _
    $region51: #{tpu_custom_call.1} parent=1 // pred_check_branch
      %176 = sbr.rel (0) target = $region53
    $region52: #{tpu_custom_call.1} parent=1 // pred_region
      _
    $region53: #{tpu_custom_call.1} parent=1 // pred_fallthru
      _
    // Predicated region
    $region54: #{tpu_custom_call.1} parent=1 // pred_check
      _
    $region55: #{tpu_custom_call.1} parent=1 // pred_check_branch
      %178 = sbr.rel (0) target = $region57
    $region56: #{tpu_custom_call.1} parent=1 // pred_region
      _
    $region57: #{tpu_custom_call.1} parent=1 // pred_fallthru
      _
    // Predicated region
    $region58: #{tpu_custom_call.1} parent=1 // pred_check
      _
    $region59: #{tpu_custom_call.1} parent=1 // pred_check_branch
      %180 = sbr.rel (0) target = $region61
    $region60: #{tpu_custom_call.1} parent=1 // pred_region
      %181 = dma.done [#allocation4], 256
    $region61: #{tpu_custom_call.1} parent=1 // pred_fallthru
      _
    // Predicated region
    $region62: #{tpu_custom_call.1} parent=1 // pred_check
      _
    $region63: #{tpu_custom_call.1} parent=1 // pred_check_branch
      %183 = sbr.rel (0) target = $region65
    $region64: #{tpu_custom_call.1} parent=1 // pred_region
      %184 = dma.done [#allocation7], 512
    $region65: #{tpu_custom_call.1} parent=1 // pred_fallthru
      _
    // Predicated region
    $region66: #{tpu_custom_call.1} parent=1 // pred_check
      _
    $region67: #{tpu_custom_call.1} parent=1 // pred_check_branch
      %186 = sbr.rel (0) target = $region69
    $region68: #{tpu_custom_call.1} parent=1 // pred_region
      %187 = dma.done [#allocation7], 1024
    $region69: #{tpu_custom_call.1} parent=1 // pred_fallthru
      _
    // Predicated region
    $region70: #{tpu_custom_call.1} parent=1 // pred_check
      _
    $region71: #{tpu_custom_call.1} parent=1 // pred_check_branch
      %189 = sbr.rel (0) target = $region73
    $region72: #{tpu_custom_call.1} parent=1 // pred_region
      %190 = dma.done [#allocation10], 1024
    $region73: #{tpu_custom_call.1} parent=1 // pred_fallthru
      _
    // Predicated region
    $region74: #{tpu_custom_call.1} parent=1 // pred_check
      _
    $region75: #{tpu_custom_call.1} parent=1 // pred_check_branch
      %192 = sbr.rel (0) target = $region77
    $region76: #{tpu_custom_call.1} parent=1 // pred_region
      %193 = dma.done [#allocation10], 1024
    $region77: #{tpu_custom_call.1} parent=1 // pred_fallthru
      _
    // Predicated region
    $region78: #{tpu_custom_call.1} parent=1 // pred_check
      _
    $region79: #{tpu_custom_call.1} parent=1 // pred_check_branch
      %195 = sbr.rel (0) target = $region81
    $region80: #{tpu_custom_call.1} parent=1 // pred_region
      %196 = dma.done [#allocation13], 1024
    $region81: #{tpu_custom_call.1} parent=1 // pred_fallthru
      _
    // Predicated region
    $region82: #{tpu_custom_call.1} parent=1 // pred_check
      _
    $region83: #{tpu_custom_call.1} parent=1 // pred_check_branch
      %198 = sbr.rel (0) target = $region85
    $region84: #{tpu_custom_call.1} parent=1 // pred_region
      %199 = dma.done [#allocation13], 1024
    $region85: #{tpu_custom_call.1} parent=1 // pred_fallthru
      _
    // Predicated region
    $region86: #{tpu_custom_call.1} parent=1 // pred_check
      _
    $region87: #{tpu_custom_call.1} parent=1 // pred_check_branch
      %201 = sbr.rel (0) target = $region89
    $region88: #{tpu_custom_call.1} parent=1 // pred_region
      %202 = dma.done [#allocation16], 1024
    $region89: #{tpu_custom_call.1} parent=1 // pred_fallthru
      _
    // Predicated region
    $region90: #{tpu_custom_call.1} parent=1 // pred_check
      _
    $region91: #{tpu_custom_call.1} parent=1 // pred_check_branch
      %204 = sbr.rel (0) target = $region93
    $region92: #{tpu_custom_call.1} parent=1 // pred_region
      %205 = dma.done [#allocation16], 1024
    $region93: #{tpu_custom_call.1} parent=1 // pred_fallthru
      _
    // Predicated region
    $region94: #{tpu_custom_call.1} parent=1 // pred_check
      _
    $region95: #{tpu_custom_call.1} parent=1 // pred_check_branch
      %207 = sbr.rel (0) target = $region97
    $region96: #{tpu_custom_call.1} parent=1 // pred_region
      %208 = dma.done [#allocation19], 1024
    $region97: #{tpu_custom_call.1} parent=1 // pred_fallthru
      _
    // Predicated region
    $region98: #{tpu_custom_call.1} parent=1 // pred_check
      _
    $region99: #{tpu_custom_call.1} parent=1 // pred_check_branch
      %210 = sbr.rel (0) target = $region101
    $region100: #{tpu_custom_call.1} parent=1 // pred_region
      %211 = dma.done [#allocation19], 2048
    $region101: #{tpu_custom_call.1} parent=1 // pred_fallthru
      _
    // Predicated region
    $region102: #{tpu_custom_call.1} parent=1 // pred_check
      _
    $region103: #{tpu_custom_call.1} parent=1 // pred_check_branch
      %213 = sbr.rel (0) target = $region105
    $region104: #{tpu_custom_call.1} parent=1 // pred_region
      %214 = dma.done [#allocation22], 2048
    $region105: #{tpu_custom_call.1} parent=1 // pred_fallthru
      _
    %v216 = vld [vmem:[#allocation3] sm:$0xff]
    %v217 = vld [vmem:[#allocation3 + $0x8] sm:$0xff]
    %v218 = vld [vmem:[#allocation6] sm:$0xff]
    %v219 = vld [vmem:[#allocation6 + $0x8] sm:$0xff]
    %v220 = vld [vmem:[#allocation6 + $0x10] sm:$0xff]
    %v221 = vld [vmem:[#allocation6 + $0x18] sm:$0xff]
    %v222 = vld [vmem:[%s12] sm:$0xff]
    %v223 = vld [vmem:[%s12 + $0x8] sm:$0x7f]
    %v224 = vlaneseq
    %v225 = vshrl.u32 %v224, 7
    %v226 = vlaneseq
    %v227 = vand.u32 %v226, 127
    %vm228 = vcmp.le.s32.totalorder %v227, %v225
    %v229 = vpack.c.bf16 %v217, %v216
    %v230 = vld [vmem:[#allocation8] sm:$0xf]
    %v231 = vld [vmem:[#allocation8 + $0x4] sm:$0xf]
    %v232 = vld [vmem:[#allocation8 + $0x8] sm:$0xf]
    %v233 = vld [vmem:[#allocation8 + $0xc] sm:$0xf]
    %v234 = vld [vmem:[#allocation8 + $0x10] sm:$0xf]
    %v235 = vld [vmem:[#allocation8 + $0x14] sm:$0xf]
    %v236 = vld [vmem:[#allocation8 + $0x18] sm:$0xf]
    %v237 = vld [vmem:[#allocation8 + $0x1c] sm:$0xf]
    %v238 = vld [vmem:[#allocation8 + $0x20] sm:$0xf]
    %v239 = vld [vmem:[#allocation8 + $0x24] sm:$0xf]
    %v240 = vld [vmem:[#allocation8 + $0x28] sm:$0xf]
    %v241 = vld [vmem:[#allocation8 + $0x2c] sm:$0xf]
    %v242 = vld [vmem:[#allocation8 + $0x30] sm:$0xf]
    %v243 = vld [vmem:[#allocation8 + $0x34] sm:$0xf]
    %v244 = vld [vmem:[#allocation8 + $0x38] sm:$0xf]
    %v245 = vld [vmem:[#allocation8 + $0x3c] sm:$0xf]
    %v246 = vlaneseq
    %v247 = vshrl.u32 %v246, 7
    %v248 = vsub.s32 0, %v247
    %v249 = vrot.slane %v222, %v248
    %v266 = vunpack.c.l.b16 %v230
    %v267 = vunpack.c.l.b16 %v231
    %v268 = vunpack.c.l.b16 %v232
    %v269 = vunpack.c.l.b16 %v233
    %v270 = vunpack.c.l.b16 %v234
    %v271 = vunpack.c.l.b16 %v235
    %v272 = vunpack.c.l.b16 %v236
    %v273 = vunpack.c.l.b16 %v237
    %v274 = vunpack.c.l.b16 %v238
    %v275 = vunpack.c.l.b16 %v239
    %v276 = vunpack.c.l.b16 %v240
    %v277 = vunpack.c.l.b16 %v241
    %v278 = vunpack.c.l.b16 %v242
    %v279 = vunpack.c.l.b16 %v243
    %v280 = vunpack.c.l.b16 %v244
    %v281 = vunpack.c.l.b16 %v245
    %v282 = vpack.c.b16 %v267, %v266
    %v283 = vpack.c.b16 %v269, %v268
    %v284 = vpack.c.b16 %v271, %v270
    %v285 = vpack.c.b16 %v273, %v272
    %v286 = vpack.c.b16 %v275, %v274
    %v287 = vpack.c.b16 %v277, %v276
    %v288 = vpack.c.b16 %v279, %v278
    %v289 = vpack.c.b16 %v281, %v280
    %298 = vmatprep.subr.bf16.mxu0 0
    %299 = vmatpush1.bf16.msra.mxu0 %v282
    %300 = vmatprep.subr.bf16.mxu0 0
    %301 = vmatpush1.bf16.msra.mxu0 %v283
    %302 = vmatprep.subr.bf16.mxu0 0
    %303 = vmatpush1.bf16.msra.mxu0 %v284
    %304 = vmatprep.subr.bf16.mxu0 0
    %305 = vmatpush1.bf16.msra.mxu0 %v285
    %306 = vmatprep.subr.bf16.mxu0 0
    %307 = vmatpush1.bf16.msra.mxu0 %v286
    %308 = vmatprep.subr.bf16.mxu0 0
    %309 = vmatpush1.bf16.msra.mxu0 %v287
    %310 = vmatprep.subr.bf16.mxu0 0
    %311 = vmatpush1.bf16.msra.mxu0 %v288
    %312 = vmatprep.subr.bf16.mxu0 0
    %313 = vmatpush1.bf16.msra.mxu0 %v289
    %314 = vmatprep.subr.bf16.mxu0 0
    %315 = vmatpush1.bf16.msra.mxu0 0
    %316 = vmatprep.subr.bf16.mxu0 0
    %317 = vmatpush1.bf16.msra.mxu0 0
    %318 = vmatprep.subr.bf16.mxu0 0
    %319 = vmatpush1.bf16.msra.mxu0 0
    %320 = vmatprep.subr.bf16.mxu0 0
    %321 = vmatpush1.bf16.msra.mxu0 0
    %322 = vmatprep.subr.bf16.mxu0 0
    %323 = vmatpush1.bf16.msra.mxu0 0
    %324 = vmatprep.subr.bf16.mxu0 0
    %325 = vmatpush1.bf16.msra.mxu0 0
    %326 = vmatprep.subr.bf16.mxu0 0
    %327 = vmatpush1.bf16.msra.mxu0 0
    %328 = vmatprep.subr.bf16.mxu0 0
    %329 = vmatpush1.bf16.msra.mxu0 0
    %330 = vmatprep.mubr.bf16.mxu0 0
    %331 = vmatmul.mubr.bf16.gmra.mrb[0].mxu0 %v229
    %v332 = vpop.f32.mrb[0].mxu0
    %v333 = vadd.f32 %v249, %v332
    %v334 = vpop.f32.mrb[0].mxu0
    %v335 = vpop.f32.mrb[0].mxu0
    %v336 = vadd.f32 %v249, %v335
    %v337 = vpop.f32.mrb[0].mxu0
    %338 = vdwg.mxu0
    %v339 = vld [vmem:[#allocation9] sm:$0xf]
    %v340 = vld [vmem:[#allocation9 + $0x4] sm:$0xf]
    %v341 = vld [vmem:[#allocation9 + $0x8] sm:$0xf]
    %v342 = vld [vmem:[#allocation9 + $0xc] sm:$0xf]
    %v343 = vld [vmem:[#allocation9 + $0x10] sm:$0xf]
    %v344 = vld [vmem:[#allocation9 + $0x14] sm:$0xf]
    %v345 = vld [vmem:[#allocation9 + $0x18] sm:$0xf]
    %v346 = vld [vmem:[#allocation9 + $0x1c] sm:$0xf]
    %v347 = vld [vmem:[#allocation9 + $0x20] sm:$0xf]
    %v348 = vld [vmem:[#allocation9 + $0x24] sm:$0xf]
    %v349 = vld [vmem:[#allocation9 + $0x28] sm:$0xf]
    %v350 = vld [vmem:[#allocation9 + $0x2c] sm:$0xf]
    %v351 = vld [vmem:[#allocation9 + $0x30] sm:$0xf]
    %v352 = vld [vmem:[#allocation9 + $0x34] sm:$0xf]
    %v353 = vld [vmem:[#allocation9 + $0x38] sm:$0xf]
    %v354 = vld [vmem:[#allocation9 + $0x3c] sm:$0xf]
    %v355 = vlaneseq
    %v356 = vshrl.u32 %v355, 7
    %v357 = vsub.s32 1, %v356
    %v358 = vrot.slane %v222, %v357
    %v375 = vunpack.c.l.b16 %v339
    %v376 = vunpack.c.l.b16 %v340
    %v377 = vunpack.c.l.b16 %v341
    %v378 = vunpack.c.l.b16 %v342
    %v379 = vunpack.c.l.b16 %v343
    %v380 = vunpack.c.l.b16 %v344
    %v381 = vunpack.c.l.b16 %v345
    %v382 = vunpack.c.l.b16 %v346
    %v383 = vunpack.c.l.b16 %v347
    %v384 = vunpack.c.l.b16 %v348
    %v385 = vunpack.c.l.b16 %v349
    %v386 = vunpack.c.l.b16 %v350
    %v387 = vunpack.c.l.b16 %v351
    %v388 = vunpack.c.l.b16 %v352
    %v389 = vunpack.c.l.b16 %v353
    %v390 = vunpack.c.l.b16 %v354
    %v391 = vpack.c.b16 %v376, %v375
    %v392 = vpack.c.b16 %v378, %v377
    %v393 = vpack.c.b16 %v380, %v379
    %v394 = vpack.c.b16 %v382, %v381
    %v395 = vpack.c.b16 %v384, %v383
    %v396 = vpack.c.b16 %v386, %v385
    %v397 = vpack.c.b16 %v388, %v387
    %v398 = vpack.c.b16 %v390, %v389
    %407 = vmatprep.subr.bf16.mxu0 0
    %408 = vmatpush1.bf16.msra.mxu0 %v391
    %409 = vmatprep.subr.bf16.mxu0 0
    %410 = vmatpush1.bf16.msra.mxu0 %v392
    %411 = vmatprep.subr.bf16.mxu0 0
    %412 = vmatpush1.bf16.msra.mxu0 %v393
    %413 = vmatprep.subr.bf16.mxu0 0
    %414 = vmatpush1.bf16.msra.mxu0 %v394
    %415 = vmatprep.subr.bf16.mxu0 0
    %416 = vmatpush1.bf16.msra.mxu0 %v395
    %417 = vmatprep.subr.bf16.mxu0 0
    %418 = vmatpush1.bf16.msra.mxu0 %v396
    %419 = vmatprep.subr.bf16.mxu0 0
    %420 = vmatpush1.bf16.msra.mxu0 %v397
    %421 = vmatprep.subr.bf16.mxu0 0
    %422 = vmatpush1.bf16.msra.mxu0 %v398
    %423 = vmatprep.subr.bf16.mxu0 0
    %424 = vmatpush1.bf16.msra.mxu0 0
    %425 = vmatprep.subr.bf16.mxu0 0
    %426 = vmatpush1.bf16.msra.mxu0 0
    %427 = vmatprep.subr.bf16.mxu0 0
    %428 = vmatpush1.bf16.msra.mxu0 0
    %429 = vmatprep.subr.bf16.mxu0 0
    %430 = vmatpush1.bf16.msra.mxu0 0
    %431 = vmatprep.subr.bf16.mxu0 0
    %432 = vmatpush1.bf16.msra.mxu0 0
    %433 = vmatprep.subr.bf16.mxu0 0
    %434 = vmatpush1.bf16.msra.mxu0 0
    %435 = vmatprep.subr.bf16.mxu0 0
    %436 = vmatpush1.bf16.msra.mxu0 0
    %437 = vmatprep.subr.bf16.mxu0 0
    %438 = vmatpush1.bf16.msra.mxu0 0
    %439 = vmatprep.mubr.bf16.mxu0 0
    %440 = vmatmul.mubr.bf16.gmra.mrb[0].mxu0 %v229
    %v441 = vpop.f32.mrb[0].mxu0
    %v442 = vadd.f32 %v358, %v441
    %v443 = vpop.f32.mrb[0].mxu0
    %v444 = vpop.f32.mrb[0].mxu0
    %v445 = vadd.f32 %v358, %v444
    %v446 = vpop.f32.mrb[0].mxu0
    %447 = vdwg.mxu0
    %v448 = vld [vmem:[#allocation11] sm:$0xf]
    %v449 = vld [vmem:[#allocation11 + $0x4] sm:$0xf]
    %v450 = vld [vmem:[#allocation11 + $0x8] sm:$0xf]
    %v451 = vld [vmem:[#allocation11 + $0xc] sm:$0xf]
    %v452 = vld [vmem:[#allocation11 + $0x10] sm:$0xf]
    %v453 = vld [vmem:[#allocation11 + $0x14] sm:$0xf]
    %v454 = vld [vmem:[#allocation11 + $0x18] sm:$0xf]
    %v455 = vld [vmem:[#allocation11 + $0x1c] sm:$0xf]
    %v456 = vld [vmem:[#allocation11 + $0x20] sm:$0xf]
    %v457 = vld [vmem:[#allocation11 + $0x24] sm:$0xf]
    %v458 = vld [vmem:[#allocation11 + $0x28] sm:$0xf]
    %v459 = vld [vmem:[#allocation11 + $0x2c] sm:$0xf]
    %v460 = vld [vmem:[#allocation11 + $0x30] sm:$0xf]
    %v461 = vld [vmem:[#allocation11 + $0x34] sm:$0xf]
    %v462 = vld [vmem:[#allocation11 + $0x38] sm:$0xf]
    %v463 = vld [vmem:[#allocation11 + $0x3c] sm:$0xf]
    %v464 = vlaneseq
    %v465 = vshrl.u32 %v464, 7
    %v466 = vsub.s32 2, %v465
    %v467 = vrot.slane %v222, %v466
    %v484 = vunpack.c.l.b16 %v448
    %v485 = vunpack.c.l.b16 %v449
    %v486 = vunpack.c.l.b16 %v450
    %v487 = vunpack.c.l.b16 %v451
    %v488 = vunpack.c.l.b16 %v452
    %v489 = vunpack.c.l.b16 %v453
    %v490 = vunpack.c.l.b16 %v454
    %v491 = vunpack.c.l.b16 %v455
    %v492 = vunpack.c.l.b16 %v456
    %v493 = vunpack.c.l.b16 %v457
    %v494 = vunpack.c.l.b16 %v458
    %v495 = vunpack.c.l.b16 %v459
    %v496 = vunpack.c.l.b16 %v460
    %v497 = vunpack.c.l.b16 %v461
    %v498 = vunpack.c.l.b16 %v462
    %v499 = vunpack.c.l.b16 %v463
    %v500 = vpack.c.b16 %v485, %v484
    %v501 = vpack.c.b16 %v487, %v486
    %v502 = vpack.c.b16 %v489, %v488
    %v503 = vpack.c.b16 %v491, %v490
    %v504 = vpack.c.b16 %v493, %v492
    %v505 = vpack.c.b16 %v495, %v494
    %v506 = vpack.c.b16 %v497, %v496
    %v507 = vpack.c.b16 %v499, %v498
    %516 = vmatprep.subr.bf16.mxu0 0
    %517 = vmatpush1.bf16.msra.mxu0 %v500
    %518 = vmatprep.subr.bf16.mxu0 0
    %519 = vmatpush1.bf16.msra.mxu0 %v501
    %520 = vmatprep.subr.bf16.mxu0 0
    %521 = vmatpush1.bf16.msra.mxu0 %v502
    %522 = vmatprep.subr.bf16.mxu0 0
    %523 = vmatpush1.bf16.msra.mxu0 %v503
    %524 = vmatprep.subr.bf16.mxu0 0
    %525 = vmatpush1.bf16.msra.mxu0 %v504
    %526 = vmatprep.subr.bf16.mxu0 0
    %527 = vmatpush1.bf16.msra.mxu0 %v505
    %528 = vmatprep.subr.bf16.mxu0 0
    %529 = vmatpush1.bf16.msra.mxu0 %v506
    %530 = vmatprep.subr.bf16.mxu0 0
    %531 = vmatpush1.bf16.msra.mxu0 %v507
    %532 = vmatprep.subr.bf16.mxu0 0
    %533 = vmatpush1.bf16.msra.mxu0 0
    %534 = vmatprep.subr.bf16.mxu0 0
    %535 = vmatpush1.bf16.msra.mxu0 0
    %536 = vmatprep.subr.bf16.mxu0 0
    %537 = vmatpush1.bf16.msra.mxu0 0
    %538 = vmatprep.subr.bf16.mxu0 0
    %539 = vmatpush1.bf16.msra.mxu0 0
    %540 = vmatprep.subr.bf16.mxu0 0
    %541 = vmatpush1.bf16.msra.mxu0 0
    %542 = vmatprep.subr.bf16.mxu0 0
    %543 = vmatpush1.bf16.msra.mxu0 0
    %544 = vmatprep.subr.bf16.mxu0 0
    %545 = vmatpush1.bf16.msra.mxu0 0
    %546 = vmatprep.subr.bf16.mxu0 0
    %547 = vmatpush1.bf16.msra.mxu0 0
    %548 = vmatprep.mubr.bf16.mxu0 0
    %549 = vmatmul.mubr.bf16.gmra.mrb[0].mxu0 %v229
    %v550 = vpop.f32.mrb[0].mxu0
    %v551 = vadd.f32 %v467, %v550
    %v552 = vpop.f32.mrb[0].mxu0
    %v553 = vpop.f32.mrb[0].mxu0
    %v554 = vadd.f32 %v467, %v553
    %v555 = vpop.f32.mrb[0].mxu0
    %556 = vdwg.mxu0
    %v557 = vmul.f32 %v333, 0.17677669
    %v558 = vmul.f32 %v336, 0.17677669
    %v559 = vpack.c.bf16 %v558, %v557
    %v560 = vpack.c.bf16 %v445, %v442
    %v561 = vpack.c.bf16 %v554, %v551
    %v562 = vld [vmem:[#allocation12] sm:$0xf]
    %v563 = vld [vmem:[#allocation12 + $0x4] sm:$0xf]
    %v564 = vld [vmem:[#allocation12 + $0x8] sm:$0xf]
    %v565 = vld [vmem:[#allocation12 + $0xc] sm:$0xf]
    %v566 = vld [vmem:[#allocation12 + $0x10] sm:$0xf]
    %v567 = vld [vmem:[#allocation12 + $0x14] sm:$0xf]
    %v568 = vld [vmem:[#allocation12 + $0x18] sm:$0xf]
    %v569 = vld [vmem:[#allocation12 + $0x1c] sm:$0xf]
    %v570 = vld [vmem:[#allocation12 + $0x20] sm:$0xf]
    %v571 = vld [vmem:[#allocation12 + $0x24] sm:$0xf]
    %v572 = vld [vmem:[#allocation12 + $0x28] sm:$0xf]
    %v573 = vld [vmem:[#allocation12 + $0x2c] sm:$0xf]
    %v574 = vld [vmem:[#allocation12 + $0x30] sm:$0xf]
    %v575 = vld [vmem:[#allocation12 + $0x34] sm:$0xf]
    %v576 = vld [vmem:[#allocation12 + $0x38] sm:$0xf]
    %v577 = vld [vmem:[#allocation12 + $0x3c] sm:$0xf]
    %vm578 = vcmask 261120
    %v580 = vsel %vm578, %v559, 0
    %v583 = vsel %vm578, %v560, 0
    %585 = vmatprep.subr.bf16.mxu0 0
    %586 = vmatpush1.bf16.xpose.msra.mxu0 %v583
    %587 = vmatprep.subr.bf16.mxu0 0
    %588 = vmatpush1.bf16.xpose.msra.mxu0 0
    %589 = vmatprep.subr.bf16.mxu0 0
    %590 = vmatpush1.bf16.xpose.msra.mxu0 0
    %591 = vmatprep.subr.bf16.mxu0 0
    %592 = vmatpush1.bf16.xpose.msra.mxu0 0
    %593 = vmatprep.subr.bf16.mxu0 0
    %594 = vmatpush1.bf16.xpose.msra.mxu0 0
    %595 = vmatprep.subr.bf16.mxu0 0
    %596 = vmatpush1.bf16.xpose.msra.mxu0 0
    %597 = vmatprep.subr.bf16.mxu0 0
    %598 = vmatpush1.bf16.xpose.msra.mxu0 0
    %599 = vmatprep.subr.bf16.mxu0 0
    %600 = vmatpush1.bf16.xpose.msra.mxu0 0
    %601 = vmatprep.subr.bf16.mxu0 0
    %602 = vmatpush1.bf16.xpose.msra.mxu0 0
    %603 = vmatprep.subr.bf16.mxu0 0
    %604 = vmatpush1.bf16.xpose.msra.mxu0 0
    %605 = vmatprep.subr.bf16.mxu0 0
    %606 = vmatpush1.bf16.xpose.msra.mxu0 0
    %607 = vmatprep.subr.bf16.mxu0 0
    %608 = vmatpush1.bf16.xpose.msra.mxu0 0
    %609 = vmatprep.subr.bf16.mxu0 0
    %610 = vmatpush1.bf16.xpose.msra.mxu0 0
    %611 = vmatprep.subr.bf16.mxu0 0
    %612 = vmatpush1.bf16.xpose.msra.mxu0 0
    %613 = vmatprep.subr.bf16.mxu0 0
    %614 = vmatpush1.bf16.xpose.msra.mxu0 0
    %615 = vmatprep.subr.bf16.mxu0 0
    %616 = vmatpush1.bf16.xpose.msra.mxu0 0
    %617 = vmatprep.mubr.bf16.mxu0 0
    %618 = vmatmul.mubr.bf16.gmra.mrb[0].mxu0 %v580
    %v619 = vpop.f32.mrb[0].mxu0
    %v620 = vadd.f32 0.0, %v619
    %v621 = vpop.f32.mrb[0].mxu0
    %v622 = vpop.f32.mrb[0].mxu0
    %v623 = vpop.f32.mrb[0].mxu0
    %624 = vdwg.mxu0
    %v625 = vsel %vm228, %v620, -1e+30
    %vm626 = vcmask 64512
    %v627 = vsel %vm626, %v625, -inf
    %628 = vmax.xlane.f32.xlu0 %v627
    %v629 = vpop.xlane.xlu0 %628
    %v630 = vsub.f32 %v625, %v629
    %v631 = vmul.f32 %v630, 1.442695
    %v632 = vpow.pop %v631
    %v633 = vsel %vm626, %v632, 0.0
    %634 = vadd.xlane.f32.xlu0 %v633
    %v635 = vpop.xlane.xlu0 %634
    %v636 = vrcp.pop %v635
    %v637 = vmul.f32 %v632, %v636
    %638 = vst.msk [vmem:[#allocation24] sm:$0xff] %vm626, %v637
    %v639 = vpack.c.bf16 %v637, %v637
    %v641 = vsel %vm626, %v639, 0
    %vm643 = vcmask 1043456
    %v645 = vsel %vm643, %v561, 0
    %647 = vmatprep.subr.bf16.mxu0 0
    %648 = vmatpush1.bf16.msra.mxu0 %v645
    %649 = vmatprep.subr.bf16.mxu0 0
    %650 = vmatpush1.bf16.msra.mxu0 0
    %651 = vmatprep.subr.bf16.mxu0 0
    %652 = vmatpush1.bf16.msra.mxu0 0
    %653 = vmatprep.subr.bf16.mxu0 0
    %654 = vmatpush1.bf16.msra.mxu0 0
    %655 = vmatprep.subr.bf16.mxu0 0
    %656 = vmatpush1.bf16.msra.mxu0 0
    %657 = vmatprep.subr.bf16.mxu0 0
    %658 = vmatpush1.bf16.msra.mxu0 0
    %659 = vmatprep.subr.bf16.mxu0 0
    %660 = vmatpush1.bf16.msra.mxu0 0
    %661 = vmatprep.subr.bf16.mxu0 0
    %662 = vmatpush1.bf16.msra.mxu0 0
    %663 = vmatprep.subr.bf16.mxu0 0
    %664 = vmatpush1.bf16.msra.mxu0 0
    %665 = vmatprep.subr.bf16.mxu0 0
    %666 = vmatpush1.bf16.msra.mxu0 0
    %667 = vmatprep.subr.bf16.mxu0 0
    %668 = vmatpush1.bf16.msra.mxu0 0
    %669 = vmatprep.subr.bf16.mxu0 0
    %670 = vmatpush1.bf16.msra.mxu0 0
    %671 = vmatprep.subr.bf16.mxu0 0
    %672 = vmatpush1.bf16.msra.mxu0 0
    %673 = vmatprep.subr.bf16.mxu0 0
    %674 = vmatpush1.bf16.msra.mxu0 0
    %675 = vmatprep.subr.bf16.mxu0 0
    %676 = vmatpush1.bf16.msra.mxu0 0
    %677 = vmatprep.subr.bf16.mxu0 0
    %678 = vmatpush1.bf16.msra.mxu0 0
    %679 = vmatprep.mubr.bf16.mxu0 0
    %680 = vmatmul.mubr.bf16.gmra.mrb[0].mxu0 %v641
    %v681 = vpop.f32.mrb[0].mxu0
    %v682 = vadd.f32 0.0, %v681
    %v683 = vpop.f32.mrb[0].mxu0
    %v684 = vpop.f32.mrb[0].mxu0
    %v685 = vpop.f32.mrb[0].mxu0
    %686 = vdwg.mxu0
    %v687 = vpack.c.bf16 %v682, %v682
    %689 = vrot.lane.b32.xlu0 %v559, 96
    %v690 = vpop.permute.xlu0 %689
    %692 = vrot.lane.b32.xlu0 %v560, 96
    %v693 = vpop.permute.xlu0 %692
    %v695 = vsel %vm578, %v690, 0
    %v698 = vsel %vm578, %v693, 0
    %700 = vmatprep.subr.bf16.mxu0 0
    %701 = vmatpush1.bf16.xpose.msra.mxu0 %v698
    %702 = vmatprep.subr.bf16.mxu0 0
    %703 = vmatpush1.bf16.xpose.msra.mxu0 0
    %704 = vmatprep.subr.bf16.mxu0 0
    %705 = vmatpush1.bf16.xpose.msra.mxu0 0
    %706 = vmatprep.subr.bf16.mxu0 0
    %707 = vmatpush1.bf16.xpose.msra.mxu0 0
    %708 = vmatprep.subr.bf16.mxu0 0
    %709 = vmatpush1.bf16.xpose.msra.mxu0 0
    %710 = vmatprep.subr.bf16.mxu0 0
    %711 = vmatpush1.bf16.xpose.msra.mxu0 0
    %712 = vmatprep.subr.bf16.mxu0 0
    %713 = vmatpush1.bf16.xpose.msra.mxu0 0
    %714 = vmatprep.subr.bf16.mxu0 0
    %715 = vmatpush1.bf16.xpose.msra.mxu0 0
    %716 = vmatprep.subr.bf16.mxu0 0
    %717 = vmatpush1.bf16.xpose.msra.mxu0 0
    %718 = vmatprep.subr.bf16.mxu0 0
    %719 = vmatpush1.bf16.xpose.msra.mxu0 0
    %720 = vmatprep.subr.bf16.mxu0 0
    %721 = vmatpush1.bf16.xpose.msra.mxu0 0
    %722 = vmatprep.subr.bf16.mxu0 0
    %723 = vmatpush1.bf16.xpose.msra.mxu0 0
    %724 = vmatprep.subr.bf16.mxu0 0
    %725 = vmatpush1.bf16.xpose.msra.mxu0 0
    %726 = vmatprep.subr.bf16.mxu0 0
    %727 = vmatpush1.bf16.xpose.msra.mxu0 0
    %728 = vmatprep.subr.bf16.mxu0 0
    %729 = vmatpush1.bf16.xpose.msra.mxu0 0
    %730 = vmatprep.subr.bf16.mxu0 0
    %731 = vmatpush1.bf16.xpose.msra.mxu0 0
    %732 = vmatprep.mubr.bf16.mxu0 0
    %733 = vmatmul.mubr.bf16.gmra.mrb[0].mxu0 %v695
    %v734 = vpop.f32.mrb[0].mxu0
    %v735 = vadd.f32 0.0, %v734
    %v736 = vpop.f32.mrb[0].mxu0
    %v737 = vpop.f32.mrb[0].mxu0
    %v738 = vpop.f32.mrb[0].mxu0
    %739 = vdwg.mxu0
    %v740 = vsel %vm228, %v735, -1e+30
    %v741 = vsel %vm626, %v740, -inf
    %742 = vmax.xlane.f32.xlu0 %v741
    %v743 = vpop.xlane.xlu0 %742
    %v744 = vsub.f32 %v740, %v743
    %v745 = vmul.f32 %v744, 1.442695
    %v746 = vpow.pop %v745
    %v747 = vsel %vm626, %v746, 0.0
    %748 = vadd.xlane.f32.xlu0 %v747
    %v749 = vpop.xlane.xlu0 %748
    %v750 = vrcp.pop %v749
    %v751 = vmul.f32 %v746, %v750
    %s752 = scalar_lea.vmem [#allocation24], 8
    %753 = vst.msk [vmem:[%s752] sm:$0xff] %vm626, %v751
    %v754 = vpack.c.bf16 %v751, %v751
    %756 = vrot.lane.b32.xlu0 %v561, 96
    %v757 = vpop.permute.xlu0 %756
    %v759 = vsel %vm626, %v754, 0
    %v762 = vsel %vm643, %v757, 0
    %764 = vmatprep.subr.bf16.mxu0 0
    %765 = vmatpush1.bf16.msra.mxu0 %v762
    %766 = vmatprep.subr.bf16.mxu0 0
    %767 = vmatpush1.bf16.msra.mxu0 0
    %768 = vmatprep.subr.bf16.mxu0 0
    %769 = vmatpush1.bf16.msra.mxu0 0
    %770 = vmatprep.subr.bf16.mxu0 0
    %771 = vmatpush1.bf16.msra.mxu0 0
    %772 = vmatprep.subr.bf16.mxu0 0
    %773 = vmatpush1.bf16.msra.mxu0 0
    %774 = vmatprep.subr.bf16.mxu0 0
    %775 = vmatpush1.bf16.msra.mxu0 0
    %776 = vmatprep.subr.bf16.mxu0 0
    %777 = vmatpush1.bf16.msra.mxu0 0
    %778 = vmatprep.subr.bf16.mxu0 0
    %779 = vmatpush1.bf16.msra.mxu0 0
    %780 = vmatprep.subr.bf16.mxu0 0
    %781 = vmatpush1.bf16.msra.mxu0 0
    %782 = vmatprep.subr.bf16.mxu0 0
    %783 = vmatpush1.bf16.msra.mxu0 0
    %784 = vmatprep.subr.bf16.mxu0 0
    %785 = vmatpush1.bf16.msra.mxu0 0
    %786 = vmatprep.subr.bf16.mxu0 0
    %787 = vmatpush1.bf16.msra.mxu0 0
    %788 = vmatprep.subr.bf16.mxu0 0
    %789 = vmatpush1.bf16.msra.mxu0 0
    %790 = vmatprep.subr.bf16.mxu0 0
    %791 = vmatpush1.bf16.msra.mxu0 0
    %792 = vmatprep.subr.bf16.mxu0 0
    %793 = vmatpush1.bf16.msra.mxu0 0
    %794 = vmatprep.subr.bf16.mxu0 0
    %795 = vmatpush1.bf16.msra.mxu0 0
    %796 = vmatprep.mubr.bf16.mxu0 0
    %797 = vmatmul.mubr.bf16.gmra.mrb[0].mxu0 %v759
    %v798 = vpop.f32.mrb[0].mxu0
    %v799 = vadd.f32 0.0, %v798
    %v800 = vpop.f32.mrb[0].mxu0
    %v801 = vpop.f32.mrb[0].mxu0
    %v802 = vpop.f32.mrb[0].mxu0
    %803 = vdwg.mxu0
    %v804 = vpack.c.bf16 %v799, %v799
    %v809 = vunpack.c.l.b16 %v566
    %v810 = vunpack.c.l.b16 %v567
    %v811 = vunpack.c.l.b16 %v568
    %v812 = vunpack.c.l.b16 %v569
    %v813 = vpack.c.b16 %v810, %v809
    %v814 = vpack.c.b16 %v812, %v811
    %v818 = vsel %vm578, %v804, 0
    %820 = vmatprep.subr.bf16.mxu0 0
    %821 = vmatpush1.bf16.msra.mxu0 %v813
    %822 = vmatprep.subr.bf16.mxu0 0
    %823 = vmatpush1.bf16.msra.mxu0 %v814
    %824 = vmatprep.subr.bf16.mxu0 0
    %825 = vmatpush1.bf16.msra.mxu0 0
    %826 = vmatprep.subr.bf16.mxu0 0
    %827 = vmatpush1.bf16.msra.mxu0 0
    %828 = vmatprep.subr.bf16.mxu0 0
    %829 = vmatpush1.bf16.msra.mxu0 0
    %830 = vmatprep.subr.bf16.mxu0 0
    %831 = vmatpush1.bf16.msra.mxu0 0
    %832 = vmatprep.subr.bf16.mxu0 0
    %833 = vmatpush1.bf16.msra.mxu0 0
    %834 = vmatprep.subr.bf16.mxu0 0
    %835 = vmatpush1.bf16.msra.mxu0 0
    %836 = vmatprep.subr.bf16.mxu0 0
    %837 = vmatpush1.bf16.msra.mxu0 0
    %838 = vmatprep.subr.bf16.mxu0 0
    %839 = vmatpush1.bf16.msra.mxu0 0
    %840 = vmatprep.subr.bf16.mxu0 0
    %841 = vmatpush1.bf16.msra.mxu0 0
    %842 = vmatprep.subr.bf16.mxu0 0
    %843 = vmatpush1.bf16.msra.mxu0 0
    %844 = vmatprep.subr.bf16.mxu0 0
    %845 = vmatpush1.bf16.msra.mxu0 0
    %846 = vmatprep.subr.bf16.mxu0 0
    %847 = vmatpush1.bf16.msra.mxu0 0
    %848 = vmatprep.subr.bf16.mxu0 0
    %849 = vmatpush1.bf16.msra.mxu0 0
    %850 = vmatprep.subr.bf16.mxu0 0
    %851 = vmatpush1.bf16.msra.mxu0 0
    %852 = vmatprep.mubr.bf16.mxu0 0
    %853 = vmatmul.mubr.bf16.gmra.mrb[0].mxu0 %v818
    %v854 = vpop.f32.mrb[0].mxu0
    %v855 = vadd.f32 0.0, %v854
    %v856 = vpop.f32.mrb[0].mxu0
    %v857 = vpop.f32.mrb[0].mxu0
    %v858 = vpop.f32.mrb[0].mxu0
    %859 = vdwg.mxu0
    %v864 = vunpack.c.l.b16 %v562
    %v865 = vunpack.c.l.b16 %v563
    %v866 = vunpack.c.l.b16 %v564
    %v867 = vunpack.c.l.b16 %v565
    %v868 = vpack.c.b16 %v865, %v864
    %v869 = vpack.c.b16 %v867, %v866
    %v873 = vsel %vm578, %v687, 0
    %875 = vmatprep.subr.bf16.mxu0 0
    %876 = vmatpush1.bf16.msra.mxu0 %v868
    %877 = vmatprep.subr.bf16.mxu0 0
    %878 = vmatpush1.bf16.msra.mxu0 %v869
    %879 = vmatprep.subr.bf16.mxu0 0
    %880 = vmatpush1.bf16.msra.mxu0 0
    %881 = vmatprep.subr.bf16.mxu0 0
    %882 = vmatpush1.bf16.msra.mxu0 0
    %883 = vmatprep.subr.bf16.mxu0 0
    %884 = vmatpush1.bf16.msra.mxu0 0
    %885 = vmatprep.subr.bf16.mxu0 0
    %886 = vmatpush1.bf16.msra.mxu0 0
    %887 = vmatprep.subr.bf16.mxu0 0
    %888 = vmatpush1.bf16.msra.mxu0 0
    %889 = vmatprep.subr.bf16.mxu0 0
    %890 = vmatpush1.bf16.msra.mxu0 0
    %891 = vmatprep.subr.bf16.mxu0 0
    %892 = vmatpush1.bf16.msra.mxu0 0
    %893 = vmatprep.subr.bf16.mxu0 0
    %894 = vmatpush1.bf16.msra.mxu0 0
    %895 = vmatprep.subr.bf16.mxu0 0
    %896 = vmatpush1.bf16.msra.mxu0 0
    %897 = vmatprep.subr.bf16.mxu0 0
    %898 = vmatpush1.bf16.msra.mxu0 0
    %899 = vmatprep.subr.bf16.mxu0 0
    %900 = vmatpush1.bf16.msra.mxu0 0
    %901 = vmatprep.subr.bf16.mxu0 0
    %902 = vmatpush1.bf16.msra.mxu0 0
    %903 = vmatprep.subr.bf16.mxu0 0
    %904 = vmatpush1.bf16.msra.mxu0 0
    %905 = vmatprep.subr.bf16.mxu0 0
    %906 = vmatpush1.bf16.msra.mxu0 0
    %907 = vmatprep.mubr.bf16.mxu0 0
    %908 = vmatmul.mubr.bf16.gmra.mrb[0].mxu0 %v873
    %v909 = vpop.f32.mrb[0].mxu0
    %v910 = vadd.f32 %v855, %v909
    %v911 = vpop.f32.mrb[0].mxu0
    %v912 = vpop.f32.mrb[0].mxu0
    %v913 = vpop.f32.mrb[0].mxu0
    %914 = vdwg.mxu0
    %915 = vrot.lane.b32.xlu0 %v559, 64
    %v916 = vpop.permute.xlu0 %915
    %917 = vrot.lane.b32.xlu0 %v560, 64
    %v918 = vpop.permute.xlu0 %917
    %v920 = vsel %vm578, %v916, 0
    %v923 = vsel %vm578, %v918, 0
    %925 = vmatprep.subr.bf16.mxu0 0
    %926 = vmatpush1.bf16.xpose.msra.mxu0 %v923
    %927 = vmatprep.subr.bf16.mxu0 0
    %928 = vmatpush1.bf16.xpose.msra.mxu0 0
    %929 = vmatprep.subr.bf16.mxu0 0
    %930 = vmatpush1.bf16.xpose.msra.mxu0 0
    %931 = vmatprep.subr.bf16.mxu0 0
    %932 = vmatpush1.bf16.xpose.msra.mxu0 0
    %933 = vmatprep.subr.bf16.mxu0 0
    %934 = vmatpush1.bf16.xpose.msra.mxu0 0
    %935 = vmatprep.subr.bf16.mxu0 0
    %936 = vmatpush1.bf16.xpose.msra.mxu0 0
    %937 = vmatprep.subr.bf16.mxu0 0
    %938 = vmatpush1.bf16.xpose.msra.mxu0 0
    %939 = vmatprep.subr.bf16.mxu0 0
    %940 = vmatpush1.bf16.xpose.msra.mxu0 0
    %941 = vmatprep.subr.bf16.mxu0 0
    %942 = vmatpush1.bf16.xpose.msra.mxu0 0
    %943 = vmatprep.subr.bf16.mxu0 0
    %944 = vmatpush1.bf16.xpose.msra.mxu0 0
    %945 = vmatprep.subr.bf16.mxu0 0
    %946 = vmatpush1.bf16.xpose.msra.mxu0 0
    %947 = vmatprep.subr.bf16.mxu0 0
    %948 = vmatpush1.bf16.xpose.msra.mxu0 0
    %949 = vmatprep.subr.bf16.mxu0 0
    %950 = vmatpush1.bf16.xpose.msra.mxu0 0
    %951 = vmatprep.subr.bf16.mxu0 0
    %952 = vmatpush1.bf16.xpose.msra.mxu0 0
    %953 = vmatprep.subr.bf16.mxu0 0
    %954 = vmatpush1.bf16.xpose.msra.mxu0 0
    %955 = vmatprep.subr.bf16.mxu0 0
    %956 = vmatpush1.bf16.xpose.msra.mxu0 0
    %957 = vmatprep.mubr.bf16.mxu0 0
    %958 = vmatmul.mubr.bf16.gmra.mrb[0].mxu0 %v920
    %v959 = vpop.f32.mrb[0].mxu0
    %v960 = vadd.f32 0.0, %v959
    %v961 = vpop.f32.mrb[0].mxu0
    %v962 = vpop.f32.mrb[0].mxu0
    %v963 = vpop.f32.mrb[0].mxu0
    %964 = vdwg.mxu0
    %v965 = vsel %vm228, %v960, -1e+30
    %v966 = vsel %vm626, %v965, -inf
    %967 = vmax.xlane.f32.xlu0 %v966
    %v968 = vpop.xlane.xlu0 %967
    %v969 = vsub.f32 %v965, %v968
    %v970 = vmul.f32 %v969, 1.442695
    %v971 = vpow.pop %v970
    %v972 = vsel %vm626, %v971, 0.0
    %973 = vadd.xlane.f32.xlu0 %v972
    %v974 = vpop.xlane.xlu0 %973
    %v975 = vrcp.pop %v974
    %v976 = vmul.f32 %v971, %v975
    %s977 = scalar_lea.vmem [#allocation24], 16
    %978 = vst.msk [vmem:[%s977] sm:$0xff] %vm626, %v976
    %v979 = vpack.c.bf16 %v976, %v976
    %980 = vrot.lane.b32.xlu0 %v561, 64
    %v981 = vpop.permute.xlu0 %980
    %v983 = vsel %vm626, %v979, 0
    %v986 = vsel %vm643, %v981, 0
    %988 = vmatprep.subr.bf16.mxu0 0
    %989 = vmatpush1.bf16.msra.mxu0 %v986
    %990 = vmatprep.subr.bf16.mxu0 0
    %991 = vmatpush1.bf16.msra.mxu0 0
    %992 = vmatprep.subr.bf16.mxu0 0
    %993 = vmatpush1.bf16.msra.mxu0 0
    %994 = vmatprep.subr.bf16.mxu0 0
    %995 = vmatpush1.bf16.msra.mxu0 0
    %996 = vmatprep.subr.bf16.mxu0 0
    %997 = vmatpush1.bf16.msra.mxu0 0
    %998 = vmatprep.subr.bf16.mxu0 0
    %999 = vmatpush1.bf16.msra.mxu0 0
    %1000 = vmatprep.subr.bf16.mxu0 0
    %1001 = vmatpush1.bf16.msra.mxu0 0
    %1002 = vmatprep.subr.bf16.mxu0 0
    %1003 = vmatpush1.bf16.msra.mxu0 0
    %1004 = vmatprep.subr.bf16.mxu0 0
    %1005 = vmatpush1.bf16.msra.mxu0 0
    %1006 = vmatprep.subr.bf16.mxu0 0
    %1007 = vmatpush1.bf16.msra.mxu0 0
    %1008 = vmatprep.subr.bf16.mxu0 0
    %1009 = vmatpush1.bf16.msra.mxu0 0
    %1010 = vmatprep.subr.bf16.mxu0 0
    %1011 = vmatpush1.bf16.msra.mxu0 0
    %1012 = vmatprep.subr.bf16.mxu0 0
    %1013 = vmatpush1.bf16.msra.mxu0 0
    %1014 = vmatprep.subr.bf16.mxu0 0
    %1015 = vmatpush1.bf16.msra.mxu0 0
    %1016 = vmatprep.subr.bf16.mxu0 0
    %1017 = vmatpush1.bf16.msra.mxu0 0
    %1018 = vmatprep.subr.bf16.mxu0 0
    %1019 = vmatpush1.bf16.msra.mxu0 0
    %1020 = vmatprep.mubr.bf16.mxu0 0
    %1021 = vmatmul.mubr.bf16.gmra.mrb[0].mxu0 %v983
    %v1022 = vpop.f32.mrb[0].mxu0
    %v1023 = vadd.f32 0.0, %v1022
    %v1024 = vpop.f32.mrb[0].mxu0
    %v1025 = vpop.f32.mrb[0].mxu0
    %v1026 = vpop.f32.mrb[0].mxu0
    %1027 = vdwg.mxu0
    %v1028 = vpack.c.bf16 %v1023, %v1023
    %v1033 = vunpack.c.l.b16 %v570
    %v1034 = vunpack.c.l.b16 %v571
    %v1035 = vunpack.c.l.b16 %v572
    %v1036 = vunpack.c.l.b16 %v573
    %v1037 = vpack.c.b16 %v1034, %v1033
    %v1038 = vpack.c.b16 %v1036, %v1035
    %v1042 = vsel %vm578, %v1028, 0
    %1044 = vmatprep.subr.bf16.mxu0 0
    %1045 = vmatpush1.bf16.msra.mxu0 %v1037
    %1046 = vmatprep.subr.bf16.mxu0 0
    %1047 = vmatpush1.bf16.msra.mxu0 %v1038
    %1048 = vmatprep.subr.bf16.mxu0 0
    %1049 = vmatpush1.bf16.msra.mxu0 0
    %1050 = vmatprep.subr.bf16.mxu0 0
    %1051 = vmatpush1.bf16.msra.mxu0 0
    %1052 = vmatprep.subr.bf16.mxu0 0
    %1053 = vmatpush1.bf16.msra.mxu0 0
    %1054 = vmatprep.subr.bf16.mxu0 0
    %1055 = vmatpush1.bf16.msra.mxu0 0
    %1056 = vmatprep.subr.bf16.mxu0 0
    %1057 = vmatpush1.bf16.msra.mxu0 0
    %1058 = vmatprep.subr.bf16.mxu0 0
    %1059 = vmatpush1.bf16.msra.mxu0 0
    %1060 = vmatprep.subr.bf16.mxu0 0
    %1061 = vmatpush1.bf16.msra.mxu0 0
    %1062 = vmatprep.subr.bf16.mxu0 0
    %1063 = vmatpush1.bf16.msra.mxu0 0
    %1064 = vmatprep.subr.bf16.mxu0 0
    %1065 = vmatpush1.bf16.msra.mxu0 0
    %1066 = vmatprep.subr.bf16.mxu0 0
    %1067 = vmatpush1.bf16.msra.mxu0 0
    %1068 = vmatprep.subr.bf16.mxu0 0
    %1069 = vmatpush1.bf16.msra.mxu0 0
    %1070 = vmatprep.subr.bf16.mxu0 0
    %1071 = vmatpush1.bf16.msra.mxu0 0
    %1072 = vmatprep.subr.bf16.mxu0 0
    %1073 = vmatpush1.bf16.msra.mxu0 0
    %1074 = vmatprep.subr.bf16.mxu0 0
    %1075 = vmatpush1.bf16.msra.mxu0 0
    %1076 = vmatprep.mubr.bf16.mxu0 0
    %1077 = vmatmul.mubr.bf16.gmra.mrb[0].mxu0 %v1042
    %v1078 = vpop.f32.mrb[0].mxu0
    %v1079 = vadd.f32 0.0, %v1078
    %v1080 = vpop.f32.mrb[0].mxu0
    %v1081 = vpop.f32.mrb[0].mxu0
    %v1082 = vpop.f32.mrb[0].mxu0
    %1083 = vdwg.mxu0
    %v1084 = vadd.f32 %v910, %v1079
    %1085 = vrot.lane.b32.xlu0 %v559, 32
    %v1086 = vpop.permute.xlu0 %1085
    %1087 = vrot.lane.b32.xlu0 %v560, 32
    %v1088 = vpop.permute.xlu0 %1087
    %v1090 = vsel %vm578, %v1086, 0
    %v1093 = vsel %vm578, %v1088, 0
    %1095 = vmatprep.subr.bf16.mxu0 0
    %1096 = vmatpush1.bf16.xpose.msra.mxu0 %v1093
    %1097 = vmatprep.subr.bf16.mxu0 0
    %1098 = vmatpush1.bf16.xpose.msra.mxu0 0
    %1099 = vmatprep.subr.bf16.mxu0 0
    %1100 = vmatpush1.bf16.xpose.msra.mxu0 0
    %1101 = vmatprep.subr.bf16.mxu0 0
    %1102 = vmatpush1.bf16.xpose.msra.mxu0 0
    %1103 = vmatprep.subr.bf16.mxu0 0
    %1104 = vmatpush1.bf16.xpose.msra.mxu0 0
    %1105 = vmatprep.subr.bf16.mxu0 0
    %1106 = vmatpush1.bf16.xpose.msra.mxu0 0
    %1107 = vmatprep.subr.bf16.mxu0 0
    %1108 = vmatpush1.bf16.xpose.msra.mxu0 0
    %1109 = vmatprep.subr.bf16.mxu0 0
    %1110 = vmatpush1.bf16.xpose.msra.mxu0 0
    %1111 = vmatprep.subr.bf16.mxu0 0
    %1112 = vmatpush1.bf16.xpose.msra.mxu0 0
    %1113 = vmatprep.subr.bf16.mxu0 0
    %1114 = vmatpush1.bf16.xpose.msra.mxu0 0
    %1115 = vmatprep.subr.bf16.mxu0 0
    %1116 = vmatpush1.bf16.xpose.msra.mxu0 0
    %1117 = vmatprep.subr.bf16.mxu0 0
    %1118 = vmatpush1.bf16.xpose.msra.mxu0 0
    %1119 = vmatprep.subr.bf16.mxu0 0
    %1120 = vmatpush1.bf16.xpose.msra.mxu0 0
    %1121 = vmatprep.subr.bf16.mxu0 0
    %1122 = vmatpush1.bf16.xpose.msra.mxu0 0
    %1123 = vmatprep.subr.bf16.mxu0 0
    %1124 = vmatpush1.bf16.xpose.msra.mxu0 0
    %1125 = vmatprep.subr.bf16.mxu0 0
    %1126 = vmatpush1.bf16.xpose.msra.mxu0 0
    %1127 = vmatprep.mubr.bf16.mxu0 0
    %1128 = vmatmul.mubr.bf16.gmra.mrb[0].mxu0 %v1090
    %v1129 = vpop.f32.mrb[0].mxu0
    %v1130 = vadd.f32 0.0, %v1129
    %v1131 = vpop.f32.mrb[0].mxu0
    %v1132 = vpop.f32.mrb[0].mxu0
    %v1133 = vpop.f32.mrb[0].mxu0
    %1134 = vdwg.mxu0
    %v1135 = vsel %vm228, %v1130, -1e+30
    %v1136 = vsel %vm626, %v1135, -inf
    %1137 = vmax.xlane.f32.xlu0 %v1136
    %v1138 = vpop.xlane.xlu0 %1137
    %v1139 = vsub.f32 %v1135, %v1138
    %v1140 = vmul.f32 %v1139, 1.442695
    %v1141 = vpow.pop %v1140
    %v1142 = vsel %vm626, %v1141, 0.0
    %1143 = vadd.xlane.f32.xlu0 %v1142
    %v1144 = vpop.xlane.xlu0 %1143
    %v1145 = vrcp.pop %v1144
    %v1146 = vmul.f32 %v1141, %v1145
    %s1147 = scalar_lea.vmem [#allocation24], 24
    %1148 = vst.msk [vmem:[%s1147] sm:$0xff] %vm626, %v1146
    %v1149 = vpack.c.bf16 %v1146, %v1146
    %1150 = vrot.lane.b32.xlu0 %v561, 32
    %v1151 = vpop.permute.xlu0 %1150
    %v1153 = vsel %vm626, %v1149, 0
    %v1156 = vsel %vm643, %v1151, 0
    %1158 = vmatprep.subr.bf16.mxu0 0
    %1159 = vmatpush1.bf16.msra.mxu0 %v1156
    %1160 = vmatprep.subr.bf16.mxu0 0
    %1161 = vmatpush1.bf16.msra.mxu0 0
    %1162 = vmatprep.subr.bf16.mxu0 0
    %1163 = vmatpush1.bf16.msra.mxu0 0
    %1164 = vmatprep.subr.bf16.mxu0 0
    %1165 = vmatpush1.bf16.msra.mxu0 0
    %1166 = vmatprep.subr.bf16.mxu0 0
    %1167 = vmatpush1.bf16.msra.mxu0 0
    %1168 = vmatprep.subr.bf16.mxu0 0
    %1169 = vmatpush1.bf16.msra.mxu0 0
    %1170 = vmatprep.subr.bf16.mxu0 0
    %1171 = vmatpush1.bf16.msra.mxu0 0
    %1172 = vmatprep.subr.bf16.mxu0 0
    %1173 = vmatpush1.bf16.msra.mxu0 0
    %1174 = vmatprep.subr.bf16.mxu0 0
    %1175 = vmatpush1.bf16.msra.mxu0 0
    %1176 = vmatprep.subr.bf16.mxu0 0
    %1177 = vmatpush1.bf16.msra.mxu0 0
    %1178 = vmatprep.subr.bf16.mxu0 0
    %1179 = vmatpush1.bf16.msra.mxu0 0
    %1180 = vmatprep.subr.bf16.mxu0 0
    %1181 = vmatpush1.bf16.msra.mxu0 0
    %1182 = vmatprep.subr.bf16.mxu0 0
    %1183 = vmatpush1.bf16.msra.mxu0 0
    %1184 = vmatprep.subr.bf16.mxu0 0
    %1185 = vmatpush1.bf16.msra.mxu0 0
    %1186 = vmatprep.subr.bf16.mxu0 0
    %1187 = vmatpush1.bf16.msra.mxu0 0
    %1188 = vmatprep.subr.bf16.mxu0 0
    %1189 = vmatpush1.bf16.msra.mxu0 0
    %1190 = vmatprep.mubr.bf16.mxu0 0
    %1191 = vmatmul.mubr.bf16.gmra.mrb[0].mxu0 %v1153
    %v1192 = vpop.f32.mrb[0].mxu0
    %v1193 = vadd.f32 0.0, %v1192
    %v1194 = vpop.f32.mrb[0].mxu0
    %v1195 = vpop.f32.mrb[0].mxu0
    %v1196 = vpop.f32.mrb[0].mxu0
    %1197 = vdwg.mxu0
    %v1198 = vpack.c.bf16 %v1193, %v1193
    %v1203 = vunpack.c.l.b16 %v574
    %v1204 = vunpack.c.l.b16 %v575
    %v1205 = vunpack.c.l.b16 %v576
    %v1206 = vunpack.c.l.b16 %v577
    %v1207 = vpack.c.b16 %v1204, %v1203
    %v1208 = vpack.c.b16 %v1206, %v1205
    %v1212 = vsel %vm578, %v1198, 0
    %1214 = vmatprep.subr.bf16.mxu0 0
    %1215 = vmatpush1.bf16.msra.mxu0 %v1207
    %1216 = vmatprep.subr.bf16.mxu0 0
    %1217 = vmatpush1.bf16.msra.mxu0 %v1208
    %1218 = vmatprep.subr.bf16.mxu0 0
    %1219 = vmatpush1.bf16.msra.mxu0 0
    %1220 = vmatprep.subr.bf16.mxu0 0
    %1221 = vmatpush1.bf16.msra.mxu0 0
    %1222 = vmatprep.subr.bf16.mxu0 0
    %1223 = vmatpush1.bf16.msra.mxu0 0
    %1224 = vmatprep.subr.bf16.mxu0 0
    %1225 = vmatpush1.bf16.msra.mxu0 0
    %1226 = vmatprep.subr.bf16.mxu0 0
    %1227 = vmatpush1.bf16.msra.mxu0 0
    %1228 = vmatprep.subr.bf16.mxu0 0
    %1229 = vmatpush1.bf16.msra.mxu0 0
    %1230 = vmatprep.subr.bf16.mxu0 0
    %1231 = vmatpush1.bf16.msra.mxu0 0
    %1232 = vmatprep.subr.bf16.mxu0 0
    %1233 = vmatpush1.bf16.msra.mxu0 0
    %1234 = vmatprep.subr.bf16.mxu0 0
    %1235 = vmatpush1.bf16.msra.mxu0 0
    %1236 = vmatprep.subr.bf16.mxu0 0
    %1237 = vmatpush1.bf16.msra.mxu0 0
    %1238 = vmatprep.subr.bf16.mxu0 0
    %1239 = vmatpush1.bf16.msra.mxu0 0
    %1240 = vmatprep.subr.bf16.mxu0 0
    %1241 = vmatpush1.bf16.msra.mxu0 0
    %1242 = vmatprep.subr.bf16.mxu0 0
    %1243 = vmatpush1.bf16.msra.mxu0 0
    %1244 = vmatprep.subr.bf16.mxu0 0
    %1245 = vmatpush1.bf16.msra.mxu0 0
    %1246 = vmatprep.mubr.bf16.mxu0 0
    %1247 = vmatmul.mubr.bf16.gmra.mrb[0].mxu0 %v1212
    %v1248 = vpop.f32.mrb[0].mxu0
    %v1249 = vadd.f32 0.0, %v1248
    %v1250 = vpop.f32.mrb[0].mxu0
    %v1251 = vpop.f32.mrb[0].mxu0
    %v1252 = vpop.f32.mrb[0].mxu0
    %1253 = vdwg.mxu0
    %v1254 = vadd.f32 %v1084, %v1249
    %1255 = vst [vmem:[#allocation2] sm:$0xff] %v1254
    %v1256 = vrot.slane %v559, 4
    %v1257 = vrot.slane %v560, 4
    %v1259 = vsel %vm578, %v1256, 0
    %v1262 = vsel %vm578, %v1257, 0
    %1264 = vmatprep.subr.bf16.mxu0 0
    %1265 = vmatpush1.bf16.xpose.msra.mxu0 %v1262
    %1266 = vmatprep.subr.bf16.mxu0 0
    %1267 = vmatpush1.bf16.xpose.msra.mxu0 0
    %1268 = vmatprep.subr.bf16.mxu0 0
    %1269 = vmatpush1.bf16.xpose.msra.mxu0 0
    %1270 = vmatprep.subr.bf16.mxu0 0
    %1271 = vmatpush1.bf16.xpose.msra.mxu0 0
    %1272 = vmatprep.subr.bf16.mxu0 0
    %1273 = vmatpush1.bf16.xpose.msra.mxu0 0
    %1274 = vmatprep.subr.bf16.mxu0 0
    %1275 = vmatpush1.bf16.xpose.msra.mxu0 0
    %1276 = vmatprep.subr.bf16.mxu0 0
    %1277 = vmatpush1.bf16.xpose.msra.mxu0 0
    %1278 = vmatprep.subr.bf16.mxu0 0
    %1279 = vmatpush1.bf16.xpose.msra.mxu0 0
    %1280 = vmatprep.subr.bf16.mxu0 0
    %1281 = vmatpush1.bf16.xpose.msra.mxu0 0
    %1282 = vmatprep.subr.bf16.mxu0 0
    %1283 = vmatpush1.bf16.xpose.msra.mxu0 0
    %1284 = vmatprep.subr.bf16.mxu0 0
    %1285 = vmatpush1.bf16.xpose.msra.mxu0 0
    %1286 = vmatprep.subr.bf16.mxu0 0
    %1287 = vmatpush1.bf16.xpose.msra.mxu0 0
    %1288 = vmatprep.subr.bf16.mxu0 0
    %1289 = vmatpush1.bf16.xpose.msra.mxu0 0
    %1290 = vmatprep.subr.bf16.mxu0 0
    %1291 = vmatpush1.bf16.xpose.msra.mxu0 0
    %1292 = vmatprep.subr.bf16.mxu0 0
    %1293 = vmatpush1.bf16.xpose.msra.mxu0 0
    %1294 = vmatprep.subr.bf16.mxu0 0
    %1295 = vmatpush1.bf16.xpose.msra.mxu0 0
    %1296 = vmatprep.mubr.bf16.mxu0 0
    %1297 = vmatmul.mubr.bf16.gmra.mrb[0].mxu0 %v1259
    %v1298 = vpop.f32.mrb[0].mxu0
    %v1299 = vadd.f32 0.0, %v1298
    %v1300 = vpop.f32.mrb[0].mxu0
    %v1301 = vpop.f32.mrb[0].mxu0
    %v1302 = vpop.f32.mrb[0].mxu0
    %1303 = vdwg.mxu0
    %v1304 = vsel %vm228, %v1299, -1e+30
    %v1305 = vsel %vm626, %v1304, -inf
    %1306 = vmax.xlane.f32.xlu0 %v1305
    %v1307 = vpop.xlane.xlu0 %1306
    %v1308 = vsub.f32 %v1304, %v1307
    %v1309 = vmul.f32 %v1308, 1.442695
    %v1310 = vpow.pop %v1309
    %v1311 = vsel %vm626, %v1310, 0.0
    %1312 = vadd.xlane.f32.xlu0 %v1311
    %v1313 = vpop.xlane.xlu0 %1312
    %v1314 = vrcp.pop %v1313
    %v1315 = vmul.f32 %v1310, %v1314
    %s1316 = scalar_lea.vmem [#allocation24], 32
    %1317 = vst.msk [vmem:[%s1316] sm:$0xff] %vm626, %v1315
    %v1318 = vpack.c.bf16 %v1315, %v1315
    %v1319 = vrot.slane %v561, 4
    %v1321 = vsel %vm626, %v1318, 0
    %v1324 = vsel %vm643, %v1319, 0
    %1326 = vmatprep.subr.bf16.mxu0 0
    %1327 = vmatpush1.bf16.msra.mxu0 %v1324
    %1328 = vmatprep.subr.bf16.mxu0 0
    %1329 = vmatpush1.bf16.msra.mxu0 0
    %1330 = vmatprep.subr.bf16.mxu0 0
    %1331 = vmatpush1.bf16.msra.mxu0 0
    %1332 = vmatprep.subr.bf16.mxu0 0
    %1333 = vmatpush1.bf16.msra.mxu0 0
    %1334 = vmatprep.subr.bf16.mxu0 0
    %1335 = vmatpush1.bf16.msra.mxu0 0
    %1336 = vmatprep.subr.bf16.mxu0 0
    %1337 = vmatpush1.bf16.msra.mxu0 0
    %1338 = vmatprep.subr.bf16.mxu0 0
    %1339 = vmatpush1.bf16.msra.mxu0 0
    %1340 = vmatprep.subr.bf16.mxu0 0
    %1341 = vmatpush1.bf16.msra.mxu0 0
    %1342 = vmatprep.subr.bf16.mxu0 0
    %1343 = vmatpush1.bf16.msra.mxu0 0
    %1344 = vmatprep.subr.bf16.mxu0 0
    %1345 = vmatpush1.bf16.msra.mxu0 0
    %1346 = vmatprep.subr.bf16.mxu0 0
    %1347 = vmatpush1.bf16.msra.mxu0 0
    %1348 = vmatprep.subr.bf16.mxu0 0
    %1349 = vmatpush1.bf16.msra.mxu0 0
    %1350 = vmatprep.subr.bf16.mxu0 0
    %1351 = vmatpush1.bf16.msra.mxu0 0
    %1352 = vmatprep.subr.bf16.mxu0 0
    %1353 = vmatpush1.bf16.msra.mxu0 0
    %1354 = vmatprep.subr.bf16.mxu0 0
    %1355 = vmatpush1.bf16.msra.mxu0 0
    %1356 = vmatprep.subr.bf16.mxu0 0
    %1357 = vmatpush1.bf16.msra.mxu0 0
    %1358 = vmatprep.mubr.bf16.mxu0 0
    %1359 = vmatmul.mubr.bf16.gmra.mrb[0].mxu0 %v1321
    %v1360 = vpop.f32.mrb[0].mxu0
    %v1361 = vadd.f32 0.0, %v1360
    %v1362 = vpop.f32.mrb[0].mxu0
    %v1363 = vpop.f32.mrb[0].mxu0
    %v1364 = vpop.f32.mrb[0].mxu0
    %1365 = vdwg.mxu0
    %v1366 = vpack.c.bf16 %v1361, %v1361
    %1367 = vrot.lane.b32.xlu0 %v1256, 96
    %v1368 = vpop.permute.xlu0 %1367
    %1369 = vrot.lane.b32.xlu0 %v1257, 96
    %v1370 = vpop.permute.xlu0 %1369
    %v1372 = vsel %vm578, %v1368, 0
    %v1375 = vsel %vm578, %v1370, 0
    %1377 = vmatprep.subr.bf16.mxu0 0
    %1378 = vmatpush1.bf16.xpose.msra.mxu0 %v1375
    %1379 = vmatprep.subr.bf16.mxu0 0
    %1380 = vmatpush1.bf16.xpose.msra.mxu0 0
    %1381 = vmatprep.subr.bf16.mxu0 0
    %1382 = vmatpush1.bf16.xpose.msra.mxu0 0
    %1383 = vmatprep.subr.bf16.mxu0 0
    %1384 = vmatpush1.bf16.xpose.msra.mxu0 0
    %1385 = vmatprep.subr.bf16.mxu0 0
    %1386 = vmatpush1.bf16.xpose.msra.mxu0 0
    %1387 = vmatprep.subr.bf16.mxu0 0
    %1388 = vmatpush1.bf16.xpose.msra.mxu0 0
    %1389 = vmatprep.subr.bf16.mxu0 0
    %1390 = vmatpush1.bf16.xpose.msra.mxu0 0
    %1391 = vmatprep.subr.bf16.mxu0 0
    %1392 = vmatpush1.bf16.xpose.msra.mxu0 0
    %1393 = vmatprep.subr.bf16.mxu0 0
    %1394 = vmatpush1.bf16.xpose.msra.mxu0 0
    %1395 = vmatprep.subr.bf16.mxu0 0
    %1396 = vmatpush1.bf16.xpose.msra.mxu0 0
    %1397 = vmatprep.subr.bf16.mxu0 0
    %1398 = vmatpush1.bf16.xpose.msra.mxu0 0
    %1399 = vmatprep.subr.bf16.mxu0 0
    %1400 = vmatpush1.bf16.xpose.msra.mxu0 0
    %1401 = vmatprep.subr.bf16.mxu0 0
    %1402 = vmatpush1.bf16.xpose.msra.mxu0 0
    %1403 = vmatprep.subr.bf16.mxu0 0
    %1404 = vmatpush1.bf16.xpose.msra.mxu0 0
    %1405 = vmatprep.subr.bf16.mxu0 0
    %1406 = vmatpush1.bf16.xpose.msra.mxu0 0
    %1407 = vmatprep.subr.bf16.mxu0 0
    %1408 = vmatpush1.bf16.xpose.msra.mxu0 0
    %1409 = vmatprep.mubr.bf16.mxu0 0
    %1410 = vmatmul.mubr.bf16.gmra.mrb[0].mxu0 %v1372
    %v1411 = vpop.f32.mrb[0].mxu0
    %v1412 = vadd.f32 0.0, %v1411
    %v1413 = vpop.f32.mrb[0].mxu0
    %v1414 = vpop.f32.mrb[0].mxu0
    %v1415 = vpop.f32.mrb[0].mxu0
    %1416 = vdwg.mxu0
    %v1417 = vsel %vm228, %v1412, -1e+30
    %v1418 = vsel %vm626, %v1417, -inf
    %1419 = vmax.xlane.f32.xlu0 %v1418
    %v1420 = vpop.xlane.xlu0 %1419
    %v1421 = vsub.f32 %v1417, %v1420
    %v1422 = vmul.f32 %v1421, 1.442695
    %v1423 = vpow.pop %v1422
    %v1424 = vsel %vm626, %v1423, 0.0
    %1425 = vadd.xlane.f32.xlu0 %v1424
    %v1426 = vpop.xlane.xlu0 %1425
    %v1427 = vrcp.pop %v1426
    %v1428 = vmul.f32 %v1423, %v1427
    %s1429 = scalar_lea.vmem [#allocation24], 40
    %1430 = vst.msk [vmem:[%s1429] sm:$0xff] %vm626, %v1428
    %v1431 = vpack.c.bf16 %v1428, %v1428
    %1432 = vrot.lane.b32.xlu0 %v1319, 96
    %v1433 = vpop.permute.xlu0 %1432
    %v1435 = vsel %vm626, %v1431, 0
    %v1438 = vsel %vm643, %v1433, 0
    %1440 = vmatprep.subr.bf16.mxu0 0
    %1441 = vmatpush1.bf16.msra.mxu0 %v1438
    %1442 = vmatprep.subr.bf16.mxu0 0
    %1443 = vmatpush1.bf16.msra.mxu0 0
    %1444 = vmatprep.subr.bf16.mxu0 0
    %1445 = vmatpush1.bf16.msra.mxu0 0
    %1446 = vmatprep.subr.bf16.mxu0 0
    %1447 = vmatpush1.bf16.msra.mxu0 0
    %1448 = vmatprep.subr.bf16.mxu0 0
    %1449 = vmatpush1.bf16.msra.mxu0 0
    %1450 = vmatprep.subr.bf16.mxu0 0
    %1451 = vmatpush1.bf16.msra.mxu0 0
    %1452 = vmatprep.subr.bf16.mxu0 0
    %1453 = vmatpush1.bf16.msra.mxu0 0
    %1454 = vmatprep.subr.bf16.mxu0 0
    %1455 = vmatpush1.bf16.msra.mxu0 0
    %1456 = vmatprep.subr.bf16.mxu0 0
    %1457 = vmatpush1.bf16.msra.mxu0 0
    %1458 = vmatprep.subr.bf16.mxu0 0
    %1459 = vmatpush1.bf16.msra.mxu0 0
    %1460 = vmatprep.subr.bf16.mxu0 0
    %1461 = vmatpush1.bf16.msra.mxu0 0
    %1462 = vmatprep.subr.bf16.mxu0 0
    %1463 = vmatpush1.bf16.msra.mxu0 0
    %1464 = vmatprep.subr.bf16.mxu0 0
    %1465 = vmatpush1.bf16.msra.mxu0 0
    %1466 = vmatprep.subr.bf16.mxu0 0
    %1467 = vmatpush1.bf16.msra.mxu0 0
    %1468 = vmatprep.subr.bf16.mxu0 0
    %1469 = vmatpush1.bf16.msra.mxu0 0
    %1470 = vmatprep.subr.bf16.mxu0 0
    %1471 = vmatpush1.bf16.msra.mxu0 0
    %1472 = vmatprep.mubr.bf16.mxu0 0
    %1473 = vmatmul.mubr.bf16.gmra.mrb[0].mxu0 %v1435
    %v1474 = vpop.f32.mrb[0].mxu0
    %v1475 = vadd.f32 0.0, %v1474
    %v1476 = vpop.f32.mrb[0].mxu0
    %v1477 = vpop.f32.mrb[0].mxu0
    %v1478 = vpop.f32.mrb[0].mxu0
    %1479 = vdwg.mxu0
    %v1480 = vpack.c.bf16 %v1475, %v1475
    %v1482 = vsel %vm578, %v1480, 0
    %1484 = vmatprep.subr.bf16.mxu0 0
    %1485 = vmatpush1.bf16.msra.mxu0 %v813
    %1486 = vmatprep.subr.bf16.mxu0 0
    %1487 = vmatpush1.bf16.msra.mxu0 %v814
    %1488 = vmatprep.subr.bf16.mxu0 0
    %1489 = vmatpush1.bf16.msra.mxu0 0
    %1490 = vmatprep.subr.bf16.mxu0 0
    %1491 = vmatpush1.bf16.msra.mxu0 0
    %1492 = vmatprep.subr.bf16.mxu0 0
    %1493 = vmatpush1.bf16.msra.mxu0 0
    %1494 = vmatprep.subr.bf16.mxu0 0
    %1495 = vmatpush1.bf16.msra.mxu0 0
    %1496 = vmatprep.subr.bf16.mxu0 0
    %1497 = vmatpush1.bf16.msra.mxu0 0
    %1498 = vmatprep.subr.bf16.mxu0 0
    %1499 = vmatpush1.bf16.msra.mxu0 0
    %1500 = vmatprep.subr.bf16.mxu0 0
    %1501 = vmatpush1.bf16.msra.mxu0 0
    %1502 = vmatprep.subr.bf16.mxu0 0
    %1503 = vmatpush1.bf16.msra.mxu0 0
    %1504 = vmatprep.subr.bf16.mxu0 0
    %1505 = vmatpush1.bf16.msra.mxu0 0
    %1506 = vmatprep.subr.bf16.mxu0 0
    %1507 = vmatpush1.bf16.msra.mxu0 0
    %1508 = vmatprep.subr.bf16.mxu0 0
    %1509 = vmatpush1.bf16.msra.mxu0 0
    %1510 = vmatprep.subr.bf16.mxu0 0
    %1511 = vmatpush1.bf16.msra.mxu0 0
    %1512 = vmatprep.subr.bf16.mxu0 0
    %1513 = vmatpush1.bf16.msra.mxu0 0
    %1514 = vmatprep.subr.bf16.mxu0 0
    %1515 = vmatpush1.bf16.msra.mxu0 0
    %1516 = vmatprep.mubr.bf16.mxu0 0
    %1517 = vmatmul.mubr.bf16.gmra.mrb[0].mxu0 %v1482
    %v1518 = vpop.f32.mrb[0].mxu0
    %v1519 = vadd.f32 0.0, %v1518
    %v1520 = vpop.f32.mrb[0].mxu0
    %v1521 = vpop.f32.mrb[0].mxu0
    %v1522 = vpop.f32.mrb[0].mxu0
    %1523 = vdwg.mxu0
    %v1525 = vsel %vm578, %v1366, 0
    %1527 = vmatprep.subr.bf16.mxu0 0
    %1528 = vmatpush1.bf16.msra.mxu0 %v868
    %1529 = vmatprep.subr.bf16.mxu0 0
    %1530 = vmatpush1.bf16.msra.mxu0 %v869
    %1531 = vmatprep.subr.bf16.mxu0 0
    %1532 = vmatpush1.bf16.msra.mxu0 0
    %1533 = vmatprep.subr.bf16.mxu0 0
    %1534 = vmatpush1.bf16.msra.mxu0 0
    %1535 = vmatprep.subr.bf16.mxu0 0
    %1536 = vmatpush1.bf16.msra.mxu0 0
    %1537 = vmatprep.subr.bf16.mxu0 0
    %1538 = vmatpush1.bf16.msra.mxu0 0
    %1539 = vmatprep.subr.bf16.mxu0 0
    %1540 = vmatpush1.bf16.msra.mxu0 0
    %1541 = vmatprep.subr.bf16.mxu0 0
    %1542 = vmatpush1.bf16.msra.mxu0 0
    %1543 = vmatprep.subr.bf16.mxu0 0
    %1544 = vmatpush1.bf16.msra.mxu0 0
    %1545 = vmatprep.subr.bf16.mxu0 0
    %1546 = vmatpush1.bf16.msra.mxu0 0
    %1547 = vmatprep.subr.bf16.mxu0 0
    %1548 = vmatpush1.bf16.msra.mxu0 0
    %1549 = vmatprep.subr.bf16.mxu0 0
    %1550 = vmatpush1.bf16.msra.mxu0 0
    %1551 = vmatprep.subr.bf16.mxu0 0
    %1552 = vmatpush1.bf16.msra.mxu0 0
    %1553 = vmatprep.subr.bf16.mxu0 0
    %1554 = vmatpush1.bf16.msra.mxu0 0
    %1555 = vmatprep.subr.bf16.mxu0 0
    %1556 = vmatpush1.bf16.msra.mxu0 0
    %1557 = vmatprep.subr.bf16.mxu0 0
    %1558 = vmatpush1.bf16.msra.mxu0 0
    %1559 = vmatprep.mubr.bf16.mxu0 0
    %1560 = vmatmul.mubr.bf16.gmra.mrb[0].mxu0 %v1525
    %v1561 = vpop.f32.mrb[0].mxu0
    %v1562 = vadd.f32 %v1519, %v1561
    %v1563 = vpop.f32.mrb[0].mxu0
    %v1564 = vpop.f32.mrb[0].mxu0
    %v1565 = vpop.f32.mrb[0].mxu0
    %1566 = vdwg.mxu0
    %1567 = vrot.lane.b32.xlu0 %v1256, 64
    %v1568 = vpop.permute.xlu0 %1567
    %1569 = vrot.lane.b32.xlu0 %v1257, 64
    %v1570 = vpop.permute.xlu0 %1569
    %v1572 = vsel %vm578, %v1568, 0
    %v1575 = vsel %vm578, %v1570, 0
    %1577 = vmatprep.subr.bf16.mxu0 0
    %1578 = vmatpush1.bf16.xpose.msra.mxu0 %v1575
    %1579 = vmatprep.subr.bf16.mxu0 0
    %1580 = vmatpush1.bf16.xpose.msra.mxu0 0
    %1581 = vmatprep.subr.bf16.mxu0 0
    %1582 = vmatpush1.bf16.xpose.msra.mxu0 0
    %1583 = vmatprep.subr.bf16.mxu0 0
    %1584 = vmatpush1.bf16.xpose.msra.mxu0 0
    %1585 = vmatprep.subr.bf16.mxu0 0
    %1586 = vmatpush1.bf16.xpose.msra.mxu0 0
    %1587 = vmatprep.subr.bf16.mxu0 0
    %1588 = vmatpush1.bf16.xpose.msra.mxu0 0
    %1589 = vmatprep.subr.bf16.mxu0 0
    %1590 = vmatpush1.bf16.xpose.msra.mxu0 0
    %1591 = vmatprep.subr.bf16.mxu0 0
    %1592 = vmatpush1.bf16.xpose.msra.mxu0 0
    %1593 = vmatprep.subr.bf16.mxu0 0
    %1594 = vmatpush1.bf16.xpose.msra.mxu0 0
    %1595 = vmatprep.subr.bf16.mxu0 0
    %1596 = vmatpush1.bf16.xpose.msra.mxu0 0
    %1597 = vmatprep.subr.bf16.mxu0 0
    %1598 = vmatpush1.bf16.xpose.msra.mxu0 0
    %1599 = vmatprep.subr.bf16.mxu0 0
    %1600 = vmatpush1.bf16.xpose.msra.mxu0 0
    %1601 = vmatprep.subr.bf16.mxu0 0
    %1602 = vmatpush1.bf16.xpose.msra.mxu0 0
    %1603 = vmatprep.subr.bf16.mxu0 0
    %1604 = vmatpush1.bf16.xpose.msra.mxu0 0
    %1605 = vmatprep.subr.bf16.mxu0 0
    %1606 = vmatpush1.bf16.xpose.msra.mxu0 0
    %1607 = vmatprep.subr.bf16.mxu0 0
    %1608 = vmatpush1.bf16.xpose.msra.mxu0 0
    %1609 = vmatprep.mubr.bf16.mxu0 0
    %1610 = vmatmul.mubr.bf16.gmra.mrb[0].mxu0 %v1572
    %v1611 = vpop.f32.mrb[0].mxu0
    %v1612 = vadd.f32 0.0, %v1611
    %v1613 = vpop.f32.mrb[0].mxu0
    %v1614 = vpop.f32.mrb[0].mxu0
    %v1615 = vpop.f32.mrb[0].mxu0
    %1616 = vdwg.mxu0
    %v1617 = vsel %vm228, %v1612, -1e+30
    %v1618 = vsel %vm626, %v1617, -inf
    %1619 = vmax.xlane.f32.xlu0 %v1618
    %v1620 = vpop.xlane.xlu0 %1619
    %v1621 = vsub.f32 %v1617, %v1620
    %v1622 = vmul.f32 %v1621, 1.442695
    %v1623 = vpow.pop %v1622
    %v1624 = vsel %vm626, %v1623, 0.0
    %1625 = vadd.xlane.f32.xlu0 %v1624
    %v1626 = vpop.xlane.xlu0 %1625
    %v1627 = vrcp.pop %v1626
    %v1628 = vmul.f32 %v1623, %v1627
    %s1629 = scalar_lea.vmem [#allocation24], 48
    %1630 = vst.msk [vmem:[%s1629] sm:$0xff] %vm626, %v1628
    %v1631 = vpack.c.bf16 %v1628, %v1628
    %1632 = vrot.lane.b32.xlu0 %v1319, 64
    %v1633 = vpop.permute.xlu0 %1632
    %v1635 = vsel %vm626, %v1631, 0
    %v1638 = vsel %vm643, %v1633, 0
    %1640 = vmatprep.subr.bf16.mxu0 0
    %1641 = vmatpush1.bf16.msra.mxu0 %v1638
    %1642 = vmatprep.subr.bf16.mxu0 0
    %1643 = vmatpush1.bf16.msra.mxu0 0
    %1644 = vmatprep.subr.bf16.mxu0 0
    %1645 = vmatpush1.bf16.msra.mxu0 0
    %1646 = vmatprep.subr.bf16.mxu0 0
    %1647 = vmatpush1.bf16.msra.mxu0 0
    %1648 = vmatprep.subr.bf16.mxu0 0
    %1649 = vmatpush1.bf16.msra.mxu0 0
    %1650 = vmatprep.subr.bf16.mxu0 0
    %1651 = vmatpush1.bf16.msra.mxu0 0
    %1652 = vmatprep.subr.bf16.mxu0 0
    %1653 = vmatpush1.bf16.msra.mxu0 0
    %1654 = vmatprep.subr.bf16.mxu0 0
    %1655 = vmatpush1.bf16.msra.mxu0 0
    %1656 = vmatprep.subr.bf16.mxu0 0
    %1657 = vmatpush1.bf16.msra.mxu0 0
    %1658 = vmatprep.subr.bf16.mxu0 0
    %1659 = vmatpush1.bf16.msra.mxu0 0
    %1660 = vmatprep.subr.bf16.mxu0 0
    %1661 = vmatpush1.bf16.msra.mxu0 0
    %1662 = vmatprep.subr.bf16.mxu0 0
    %1663 = vmatpush1.bf16.msra.mxu0 0
    %1664 = vmatprep.subr.bf16.mxu0 0
    %1665 = vmatpush1.bf16.msra.mxu0 0
    %1666 = vmatprep.subr.bf16.mxu0 0
    %1667 = vmatpush1.bf16.msra.mxu0 0
    %1668 = vmatprep.subr.bf16.mxu0 0
    %1669 = vmatpush1.bf16.msra.mxu0 0
    %1670 = vmatprep.subr.bf16.mxu0 0
    %1671 = vmatpush1.bf16.msra.mxu0 0
    %1672 = vmatprep.mubr.bf16.mxu0 0
    %1673 = vmatmul.mubr.bf16.gmra.mrb[0].mxu0 %v1635
    %v1674 = vpop.f32.mrb[0].mxu0
    %v1675 = vadd.f32 0.0, %v1674
    %v1676 = vpop.f32.mrb[0].mxu0
    %v1677 = vpop.f32.mrb[0].mxu0
    %v1678 = vpop.f32.mrb[0].mxu0
    %1679 = vdwg.mxu0
    %v1680 = vpack.c.bf16 %v1675, %v1675
    %v1682 = vsel %vm578, %v1680, 0
    %1684 = vmatprep.subr.bf16.mxu0 0
    %1685 = vmatpush1.bf16.msra.mxu0 %v1037
    %1686 = vmatprep.subr.bf16.mxu0 0
    %1687 = vmatpush1.bf16.msra.mxu0 %v1038
    %1688 = vmatprep.subr.bf16.mxu0 0
    %1689 = vmatpush1.bf16.msra.mxu0 0
    %1690 = vmatprep.subr.bf16.mxu0 0
    %1691 = vmatpush1.bf16.msra.mxu0 0
    %1692 = vmatprep.subr.bf16.mxu0 0
    %1693 = vmatpush1.bf16.msra.mxu0 0
    %1694 = vmatprep.subr.bf16.mxu0 0
    %1695 = vmatpush1.bf16.msra.mxu0 0
    %1696 = vmatprep.subr.bf16.mxu0 0
    %1697 = vmatpush1.bf16.msra.mxu0 0
    %1698 = vmatprep.subr.bf16.mxu0 0
    %1699 = vmatpush1.bf16.msra.mxu0 0
    %1700 = vmatprep.subr.bf16.mxu0 0
    %1701 = vmatpush1.bf16.msra.mxu0 0
    %1702 = vmatprep.subr.bf16.mxu0 0
    %1703 = vmatpush1.bf16.msra.mxu0 0
    %1704 = vmatprep.subr.bf16.mxu0 0
    %1705 = vmatpush1.bf16.msra.mxu0 0
    %1706 = vmatprep.subr.bf16.mxu0 0
    %1707 = vmatpush1.bf16.msra.mxu0 0
    %1708 = vmatprep.subr.bf16.mxu0 0
    %1709 = vmatpush1.bf16.msra.mxu0 0
    %1710 = vmatprep.subr.bf16.mxu0 0
    %1711 = vmatpush1.bf16.msra.mxu0 0
    %1712 = vmatprep.subr.bf16.mxu0 0
    %1713 = vmatpush1.bf16.msra.mxu0 0
    %1714 = vmatprep.subr.bf16.mxu0 0
    %1715 = vmatpush1.bf16.msra.mxu0 0
    %1716 = vmatprep.mubr.bf16.mxu0 0
    %1717 = vmatmul.mubr.bf16.gmra.mrb[0].mxu0 %v1682
    %v1718 = vpop.f32.mrb[0].mxu0
    %v1719 = vadd.f32 0.0, %v1718
    %v1720 = vpop.f32.mrb[0].mxu0
    %v1721 = vpop.f32.mrb[0].mxu0
    %v1722 = vpop.f32.mrb[0].mxu0
    %1723 = vdwg.mxu0
    %v1724 = vadd.f32 %v1562, %v1719
    %1725 = vrot.lane.b32.xlu0 %v1256, 32
    %v1726 = vpop.permute.xlu0 %1725
    %1727 = vrot.lane.b32.xlu0 %v1257, 32
    %v1728 = vpop.permute.xlu0 %1727
    %v1730 = vsel %vm578, %v1726, 0
    %v1733 = vsel %vm578, %v1728, 0
    %1735 = vmatprep.subr.bf16.mxu0 0
    %1736 = vmatpush1.bf16.xpose.msra.mxu0 %v1733
    %1737 = vmatprep.subr.bf16.mxu0 0
    %1738 = vmatpush1.bf16.xpose.msra.mxu0 0
    %1739 = vmatprep.subr.bf16.mxu0 0
    %1740 = vmatpush1.bf16.xpose.msra.mxu0 0
    %1741 = vmatprep.subr.bf16.mxu0 0
    %1742 = vmatpush1.bf16.xpose.msra.mxu0 0
    %1743 = vmatprep.subr.bf16.mxu0 0
    %1744 = vmatpush1.bf16.xpose.msra.mxu0 0
    %1745 = vmatprep.subr.bf16.mxu0 0
    %1746 = vmatpush1.bf16.xpose.msra.mxu0 0
    %1747 = vmatprep.subr.bf16.mxu0 0
    %1748 = vmatpush1.bf16.xpose.msra.mxu0 0
    %1749 = vmatprep.subr.bf16.mxu0 0
    %1750 = vmatpush1.bf16.xpose.msra.mxu0 0
    %1751 = vmatprep.subr.bf16.mxu0 0
    %1752 = vmatpush1.bf16.xpose.msra.mxu0 0
    %1753 = vmatprep.subr.bf16.mxu0 0
    %1754 = vmatpush1.bf16.xpose.msra.mxu0 0
    %1755 = vmatprep.subr.bf16.mxu0 0
    %1756 = vmatpush1.bf16.xpose.msra.mxu0 0
    %1757 = vmatprep.subr.bf16.mxu0 0
    %1758 = vmatpush1.bf16.xpose.msra.mxu0 0
    %1759 = vmatprep.subr.bf16.mxu0 0
    %1760 = vmatpush1.bf16.xpose.msra.mxu0 0
    %1761 = vmatprep.subr.bf16.mxu0 0
    %1762 = vmatpush1.bf16.xpose.msra.mxu0 0
    %1763 = vmatprep.subr.bf16.mxu0 0
    %1764 = vmatpush1.bf16.xpose.msra.mxu0 0
    %1765 = vmatprep.subr.bf16.mxu0 0
    %1766 = vmatpush1.bf16.xpose.msra.mxu0 0
    %1767 = vmatprep.mubr.bf16.mxu0 0
    %1768 = vmatmul.mubr.bf16.gmra.mrb[0].mxu0 %v1730
    %v1769 = vpop.f32.mrb[0].mxu0
    %v1770 = vadd.f32 0.0, %v1769
    %v1771 = vpop.f32.mrb[0].mxu0
    %v1772 = vpop.f32.mrb[0].mxu0
    %v1773 = vpop.f32.mrb[0].mxu0
    %1774 = vdwg.mxu0
    %v1775 = vsel %vm228, %v1770, -1e+30
    %v1776 = vsel %vm626, %v1775, -inf
    %1777 = vmax.xlane.f32.xlu0 %v1776
    %v1778 = vpop.xlane.xlu0 %1777
    %v1779 = vsub.f32 %v1775, %v1778
    %v1780 = vmul.f32 %v1779, 1.442695
    %v1781 = vpow.pop %v1780
    %v1782 = vsel %vm626, %v1781, 0.0
    %1783 = vadd.xlane.f32.xlu0 %v1782
    %v1784 = vpop.xlane.xlu0 %1783
    %v1785 = vrcp.pop %v1784
    %v1786 = vmul.f32 %v1781, %v1785
    %s1787 = scalar_lea.vmem [#allocation24], 56
    %1788 = vst.msk [vmem:[%s1787] sm:$0xff] %vm626, %v1786
    %v1789 = vpack.c.bf16 %v1786, %v1786
    %1790 = vrot.lane.b32.xlu0 %v1319, 32
    %v1791 = vpop.permute.xlu0 %1790
    %v1793 = vsel %vm626, %v1789, 0
    %v1796 = vsel %vm643, %v1791, 0
    %1798 = vmatprep.subr.bf16.mxu0 0
    %1799 = vmatpush1.bf16.msra.mxu0 %v1796
    %1800 = vmatprep.subr.bf16.mxu0 0
    %1801 = vmatpush1.bf16.msra.mxu0 0
    %1802 = vmatprep.subr.bf16.mxu0 0
    %1803 = vmatpush1.bf16.msra.mxu0 0
    %1804 = vmatprep.subr.bf16.mxu0 0
    %1805 = vmatpush1.bf16.msra.mxu0 0
    %1806 = vmatprep.subr.bf16.mxu0 0
    %1807 = vmatpush1.bf16.msra.mxu0 0
    %1808 = vmatprep.subr.bf16.mxu0 0
    %1809 = vmatpush1.bf16.msra.mxu0 0
    %1810 = vmatprep.subr.bf16.mxu0 0
    %1811 = vmatpush1.bf16.msra.mxu0 0
    %1812 = vmatprep.subr.bf16.mxu0 0
    %1813 = vmatpush1.bf16.msra.mxu0 0
    %1814 = vmatprep.subr.bf16.mxu0 0
    %1815 = vmatpush1.bf16.msra.mxu0 0
    %1816 = vmatprep.subr.bf16.mxu0 0
    %1817 = vmatpush1.bf16.msra.mxu0 0
    %1818 = vmatprep.subr.bf16.mxu0 0
    %1819 = vmatpush1.bf16.msra.mxu0 0
    %1820 = vmatprep.subr.bf16.mxu0 0
    %1821 = vmatpush1.bf16.msra.mxu0 0
    %1822 = vmatprep.subr.bf16.mxu0 0
    %1823 = vmatpush1.bf16.msra.mxu0 0
    %1824 = vmatprep.subr.bf16.mxu0 0
    %1825 = vmatpush1.bf16.msra.mxu0 0
    %1826 = vmatprep.subr.bf16.mxu0 0
    %1827 = vmatpush1.bf16.msra.mxu0 0
    %1828 = vmatprep.subr.bf16.mxu0 0
    %1829 = vmatpush1.bf16.msra.mxu0 0
    %1830 = vmatprep.mubr.bf16.mxu0 0
    %1831 = vmatmul.mubr.bf16.gmra.mrb[0].mxu0 %v1793
    %v1832 = vpop.f32.mrb[0].mxu0
    %v1833 = vadd.f32 0.0, %v1832
    %v1834 = vpop.f32.mrb[0].mxu0
    %v1835 = vpop.f32.mrb[0].mxu0
    %v1836 = vpop.f32.mrb[0].mxu0
    %1837 = vdwg.mxu0
    %v1838 = vpack.c.bf16 %v1833, %v1833
    %v1840 = vsel %vm578, %v1838, 0
    %1842 = vmatprep.subr.bf16.mxu0 0
    %1843 = vmatpush1.bf16.msra.mxu0 %v1207
    %1844 = vmatprep.subr.bf16.mxu0 0
    %1845 = vmatpush1.bf16.msra.mxu0 %v1208
    %1846 = vmatprep.subr.bf16.mxu0 0
    %1847 = vmatpush1.bf16.msra.mxu0 0
    %1848 = vmatprep.subr.bf16.mxu0 0
    %1849 = vmatpush1.bf16.msra.mxu0 0
    %1850 = vmatprep.subr.bf16.mxu0 0
    %1851 = vmatpush1.bf16.msra.mxu0 0
    %1852 = vmatprep.subr.bf16.mxu0 0
    %1853 = vmatpush1.bf16.msra.mxu0 0
    %1854 = vmatprep.subr.bf16.mxu0 0
    %1855 = vmatpush1.bf16.msra.mxu0 0
    %1856 = vmatprep.subr.bf16.mxu0 0
    %1857 = vmatpush1.bf16.msra.mxu0 0
    %1858 = vmatprep.subr.bf16.mxu0 0
    %1859 = vmatpush1.bf16.msra.mxu0 0
    %1860 = vmatprep.subr.bf16.mxu0 0
    %1861 = vmatpush1.bf16.msra.mxu0 0
    %1862 = vmatprep.subr.bf16.mxu0 0
    %1863 = vmatpush1.bf16.msra.mxu0 0
    %1864 = vmatprep.subr.bf16.mxu0 0
    %1865 = vmatpush1.bf16.msra.mxu0 0
    %1866 = vmatprep.subr.bf16.mxu0 0
    %1867 = vmatpush1.bf16.msra.mxu0 0
    %1868 = vmatprep.subr.bf16.mxu0 0
    %1869 = vmatpush1.bf16.msra.mxu0 0
    %1870 = vmatprep.subr.bf16.mxu0 0
    %1871 = vmatpush1.bf16.msra.mxu0 0
    %1872 = vmatprep.subr.bf16.mxu0 0
    %1873 = vmatpush1.bf16.msra.mxu0 0
    %1874 = vmatprep.mubr.bf16.mxu0 0
    %1875 = vmatmul.mubr.bf16.gmra.mrb[0].mxu0 %v1840
    %v1876 = vpop.f32.mrb[0].mxu0
    %v1877 = vadd.f32 0.0, %v1876
    %v1878 = vpop.f32.mrb[0].mxu0
    %v1879 = vpop.f32.mrb[0].mxu0
    %v1880 = vpop.f32.mrb[0].mxu0
    %1881 = vdwg.mxu0
    %v1882 = vadd.f32 %v1724, %v1877
    %1883 = vst [vmem:[#allocation2 + $0x8] sm:$0xff] %v1882
    %v1884 = vld [vmem:[#allocation2] sm:$0xff]
    %v1885 = vld [vmem:[#allocation2 + $0x8] sm:$0xff]
    %v1886 = vlaneseq
    %v1887 = vshrl.u32 %v1886, 7
    %v1888 = vsub.s32 3, %v1887
    %v1889 = vrot.slane %v222, %v1888
    %v1890 = vadd.f32 %v1884, %v1889
    %v1891 = vadd.f32 %v1885, %v1889
    %v1892 = vadd.f32 %v216, %v1890
    %v1893 = vadd.f32 %v217, %v1891
    %1894 = vadd.xlane.f32.xlu0 %v1892
    %v1895 = vpop.xlane.xlu0 %1894
    %1896 = vadd.xlane.f32.xlu0 %v1893
    %v1897 = vpop.xlane.xlu0 %1896
    %v1898 = vrcp.pop 128.0
    %v1899 = vmul.f32 %v1895, %v1898
    %v1900 = vmul.f32 %v1897, %v1898
    %v1901 = vsub.f32 %v1892, %v1899
    %v1902 = vsub.f32 %v1893, %v1900
    %v1903 = vmul.f32 %v1901, %v1901
    %v1904 = vmul.f32 %v1902, %v1902
    %1905 = vadd.xlane.f32.xlu0 %v1903
    %v1906 = vpop.xlane.xlu0 %1905
    %1907 = vadd.xlane.f32.xlu0 %v1904
    %v1908 = vpop.xlane.xlu0 %1907
    %v1909 = vmul.f32 %v1906, %v1898
    %v1910 = vmul.f32 %v1908, %v1898
    %v1911 = vadd.f32 %v1909, 1e-05
    %v1912 = vadd.f32 %v1910, 1e-05
    %v1913 = vrsqrt.pop %v1911
    %v1914 = vrsqrt.pop %v1912
    %v1915 = vmul.f32 %v1901, %v1913
    %v1916 = vmul.f32 %v1902, %v1914
    %v1917 = vlaneseq
    %v1918 = vshrl.u32 %v1917, 7
    %v1919 = vsub.s32 1, %v1918
    %v1920 = vrot.slane %v223, %v1919
    %v1921 = vmul.f32 %v1915, %v1920
    %v1922 = vmul.f32 %v1916, %v1920
    %v1923 = vlaneseq
    %v1924 = vshrl.u32 %v1923, 7
    %v1925 = vsub.s32 2, %v1924
    %v1926 = vrot.slane %v223, %v1925
    %v1927 = vadd.f32 %v1921, %v1926
    %v1928 = vadd.f32 %v1922, %v1926
    %v1929 = vpack.c.bf16 %v1928, %v1927
    %v1930 = vld [vmem:[#allocation14] sm:$0xf]
    %v1931 = vld [vmem:[#allocation14 + $0x4] sm:$0xf]
    %v1932 = vld [vmem:[#allocation14 + $0x8] sm:$0xf]
    %v1933 = vld [vmem:[#allocation14 + $0xc] sm:$0xf]
    %v1934 = vld [vmem:[#allocation14 + $0x10] sm:$0xf]
    %v1935 = vld [vmem:[#allocation14 + $0x14] sm:$0xf]
    %v1936 = vld [vmem:[#allocation14 + $0x18] sm:$0xf]
    %v1937 = vld [vmem:[#allocation14 + $0x1c] sm:$0xf]
    %v1938 = vld [vmem:[#allocation14 + $0x20] sm:$0xf]
    %v1939 = vld [vmem:[#allocation14 + $0x24] sm:$0xf]
    %v1940 = vld [vmem:[#allocation14 + $0x28] sm:$0xf]
    %v1941 = vld [vmem:[#allocation14 + $0x2c] sm:$0xf]
    %v1942 = vld [vmem:[#allocation14 + $0x30] sm:$0xf]
    %v1943 = vld [vmem:[#allocation14 + $0x34] sm:$0xf]
    %v1944 = vld [vmem:[#allocation14 + $0x38] sm:$0xf]
    %v1945 = vld [vmem:[#allocation14 + $0x3c] sm:$0xf]
    %v1946 = vlaneseq
    %v1947 = vshrl.u32 %v1946, 7
    %v1948 = vsub.s32 4, %v1947
    %v1949 = vrot.slane %v222, %v1948
    %v1966 = vunpack.c.l.b16 %v1930
    %v1967 = vunpack.c.l.b16 %v1931
    %v1968 = vunpack.c.l.b16 %v1932
    %v1969 = vunpack.c.l.b16 %v1933
    %v1970 = vunpack.c.l.b16 %v1934
    %v1971 = vunpack.c.l.b16 %v1935
    %v1972 = vunpack.c.l.b16 %v1936
    %v1973 = vunpack.c.l.b16 %v1937
    %v1974 = vunpack.c.l.b16 %v1938
    %v1975 = vunpack.c.l.b16 %v1939
    %v1976 = vunpack.c.l.b16 %v1940
    %v1977 = vunpack.c.l.b16 %v1941
    %v1978 = vunpack.c.l.b16 %v1942
    %v1979 = vunpack.c.l.b16 %v1943
    %v1980 = vunpack.c.l.b16 %v1944
    %v1981 = vunpack.c.l.b16 %v1945
    %v1982 = vpack.c.b16 %v1967, %v1966
    %v1983 = vpack.c.b16 %v1969, %v1968
    %v1984 = vpack.c.b16 %v1971, %v1970
    %v1985 = vpack.c.b16 %v1973, %v1972
    %v1986 = vpack.c.b16 %v1975, %v1974
    %v1987 = vpack.c.b16 %v1977, %v1976
    %v1988 = vpack.c.b16 %v1979, %v1978
    %v1989 = vpack.c.b16 %v1981, %v1980
    %1998 = vmatprep.subr.bf16.mxu0 0
    %1999 = vmatpush1.bf16.msra.mxu0 %v1982
    %2000 = vmatprep.subr.bf16.mxu0 0
    %2001 = vmatpush1.bf16.msra.mxu0 %v1983
    %2002 = vmatprep.subr.bf16.mxu0 0
    %2003 = vmatpush1.bf16.msra.mxu0 %v1984
    %2004 = vmatprep.subr.bf16.mxu0 0
    %2005 = vmatpush1.bf16.msra.mxu0 %v1985
    %2006 = vmatprep.subr.bf16.mxu0 0
    %2007 = vmatpush1.bf16.msra.mxu0 %v1986
    %2008 = vmatprep.subr.bf16.mxu0 0
    %2009 = vmatpush1.bf16.msra.mxu0 %v1987
    %2010 = vmatprep.subr.bf16.mxu0 0
    %2011 = vmatpush1.bf16.msra.mxu0 %v1988
    %2012 = vmatprep.subr.bf16.mxu0 0
    %2013 = vmatpush1.bf16.msra.mxu0 %v1989
    %2014 = vmatprep.subr.bf16.mxu0 0
    %2015 = vmatpush1.bf16.msra.mxu0 0
    %2016 = vmatprep.subr.bf16.mxu0 0
    %2017 = vmatpush1.bf16.msra.mxu0 0
    %2018 = vmatprep.subr.bf16.mxu0 0
    %2019 = vmatpush1.bf16.msra.mxu0 0
    %2020 = vmatprep.subr.bf16.mxu0 0
    %2021 = vmatpush1.bf16.msra.mxu0 0
    %2022 = vmatprep.subr.bf16.mxu0 0
    %2023 = vmatpush1.bf16.msra.mxu0 0
    %2024 = vmatprep.subr.bf16.mxu0 0
    %2025 = vmatpush1.bf16.msra.mxu0 0
    %2026 = vmatprep.subr.bf16.mxu0 0
    %2027 = vmatpush1.bf16.msra.mxu0 0
    %2028 = vmatprep.subr.bf16.mxu0 0
    %2029 = vmatpush1.bf16.msra.mxu0 0
    %2030 = vmatprep.mubr.bf16.mxu0 0
    %2031 = vmatmul.mubr.bf16.gmra.mrb[0].mxu0 %v1929
    %v2032 = vpop.f32.mrb[0].mxu0
    %v2033 = vadd.f32 %v1949, %v2032
    %v2034 = vpop.f32.mrb[0].mxu0
    %v2035 = vpop.f32.mrb[0].mxu0
    %v2036 = vadd.f32 %v1949, %v2035
    %v2037 = vpop.f32.mrb[0].mxu0
    %2038 = vdwg.mxu0
    %v2039 = vpack.c.bf16 %v219, %v218
    %v2040 = vpack.c.bf16 %v221, %v220
    %v2041 = vld [vmem:[#allocation15] sm:$0xf]
    %v2042 = vld [vmem:[#allocation15 + $0x4] sm:$0xf]
    %v2043 = vld [vmem:[#allocation15 + $0x8] sm:$0xf]
    %v2044 = vld [vmem:[#allocation15 + $0xc] sm:$0xf]
    %v2045 = vld [vmem:[#allocation15 + $0x10] sm:$0xf]
    %v2046 = vld [vmem:[#allocation15 + $0x14] sm:$0xf]
    %v2047 = vld [vmem:[#allocation15 + $0x18] sm:$0xf]
    %v2048 = vld [vmem:[#allocation15 + $0x1c] sm:$0xf]
    %v2049 = vld [vmem:[#allocation15 + $0x20] sm:$0xf]
    %v2050 = vld [vmem:[#allocation15 + $0x24] sm:$0xf]
    %v2051 = vld [vmem:[#allocation15 + $0x28] sm:$0xf]
    %v2052 = vld [vmem:[#allocation15 + $0x2c] sm:$0xf]
    %v2053 = vld [vmem:[#allocation15 + $0x30] sm:$0xf]
    %v2054 = vld [vmem:[#allocation15 + $0x34] sm:$0xf]
    %v2055 = vld [vmem:[#allocation15 + $0x38] sm:$0xf]
    %v2056 = vld [vmem:[#allocation15 + $0x3c] sm:$0xf]
    %v2057 = vlaneseq
    %v2058 = vshrl.u32 %v2057, 7
    %v2059 = vsub.s32 5, %v2058
    %v2060 = vrot.slane %v222, %v2059
    %v2077 = vunpack.c.l.b16 %v2041
    %v2078 = vunpack.c.l.b16 %v2042
    %v2079 = vunpack.c.l.b16 %v2043
    %v2080 = vunpack.c.l.b16 %v2044
    %v2081 = vunpack.c.l.b16 %v2045
    %v2082 = vunpack.c.l.b16 %v2046
    %v2083 = vunpack.c.l.b16 %v2047
    %v2084 = vunpack.c.l.b16 %v2048
    %v2085 = vunpack.c.l.b16 %v2049
    %v2086 = vunpack.c.l.b16 %v2050
    %v2087 = vunpack.c.l.b16 %v2051
    %v2088 = vunpack.c.l.b16 %v2052
    %v2089 = vunpack.c.l.b16 %v2053
    %v2090 = vunpack.c.l.b16 %v2054
    %v2091 = vunpack.c.l.b16 %v2055
    %v2092 = vunpack.c.l.b16 %v2056
    %v2093 = vpack.c.b16 %v2078, %v2077
    %v2094 = vpack.c.b16 %v2080, %v2079
    %v2095 = vpack.c.b16 %v2082, %v2081
    %v2096 = vpack.c.b16 %v2084, %v2083
    %v2097 = vpack.c.b16 %v2086, %v2085
    %v2098 = vpack.c.b16 %v2088, %v2087
    %v2099 = vpack.c.b16 %v2090, %v2089
    %v2100 = vpack.c.b16 %v2092, %v2091
    %2109 = vmatprep.subr.bf16.mxu0 0
    %2110 = vmatpush1.bf16.msra.mxu0 %v2093
    %2111 = vmatprep.subr.bf16.mxu0 0
    %2112 = vmatpush1.bf16.msra.mxu0 %v2094
    %2113 = vmatprep.subr.bf16.mxu0 0
    %2114 = vmatpush1.bf16.msra.mxu0 %v2095
    %2115 = vmatprep.subr.bf16.mxu0 0
    %2116 = vmatpush1.bf16.msra.mxu0 %v2096
    %2117 = vmatprep.subr.bf16.mxu0 0
    %2118 = vmatpush1.bf16.msra.mxu0 %v2097
    %2119 = vmatprep.subr.bf16.mxu0 0
    %2120 = vmatpush1.bf16.msra.mxu0 %v2098
    %2121 = vmatprep.subr.bf16.mxu0 0
    %2122 = vmatpush1.bf16.msra.mxu0 %v2099
    %2123 = vmatprep.subr.bf16.mxu0 0
    %2124 = vmatpush1.bf16.msra.mxu0 %v2100
    %2125 = vmatprep.subr.bf16.mxu0 0
    %2126 = vmatpush1.bf16.msra.mxu0 0
    %2127 = vmatprep.subr.bf16.mxu0 0
    %2128 = vmatpush1.bf16.msra.mxu0 0
    %2129 = vmatprep.subr.bf16.mxu0 0
    %2130 = vmatpush1.bf16.msra.mxu0 0
    %2131 = vmatprep.subr.bf16.mxu0 0
    %2132 = vmatpush1.bf16.msra.mxu0 0
    %2133 = vmatprep.subr.bf16.mxu0 0
    %2134 = vmatpush1.bf16.msra.mxu0 0
    %2135 = vmatprep.subr.bf16.mxu0 0
    %2136 = vmatpush1.bf16.msra.mxu0 0
    %2137 = vmatprep.subr.bf16.mxu0 0
    %2138 = vmatpush1.bf16.msra.mxu0 0
    %2139 = vmatprep.subr.bf16.mxu0 0
    %2140 = vmatpush1.bf16.msra.mxu0 0
    %2141 = vmatprep.mubr.bf16.mxu0 0
    %2142 = vmatmul.mubr.bf16.gmra.mrb[0].mxu0 %v2039
    %v2143 = vpop.f32.mrb[0].mxu0
    %v2144 = vadd.f32 %v2060, %v2143
    %v2145 = vpop.f32.mrb[0].mxu0
    %v2146 = vpop.f32.mrb[0].mxu0
    %v2147 = vadd.f32 %v2060, %v2146
    %v2148 = vpop.f32.mrb[0].mxu0
    %2149 = vmatprep.mubr.bf16.mxu0 0
    %2150 = vmatmul.mubr.bf16.gmra.mrb[0].mxu0 %v2040
    %v2151 = vpop.f32.mrb[0].mxu0
    %v2152 = vadd.f32 %v2060, %v2151
    %v2153 = vpop.f32.mrb[0].mxu0
    %v2154 = vpop.f32.mrb[0].mxu0
    %v2155 = vadd.f32 %v2060, %v2154
    %v2156 = vpop.f32.mrb[0].mxu0
    %2157 = vdwg.mxu0
    %v2158 = vld [vmem:[#allocation17] sm:$0xf]
    %v2159 = vld [vmem:[#allocation17 + $0x4] sm:$0xf]
    %v2160 = vld [vmem:[#allocation17 + $0x8] sm:$0xf]
    %v2161 = vld [vmem:[#allocation17 + $0xc] sm:$0xf]
    %v2162 = vld [vmem:[#allocation17 + $0x10] sm:$0xf]
    %v2163 = vld [vmem:[#allocation17 + $0x14] sm:$0xf]
    %v2164 = vld [vmem:[#allocation17 + $0x18] sm:$0xf]
    %v2165 = vld [vmem:[#allocation17 + $0x1c] sm:$0xf]
    %v2166 = vld [vmem:[#allocation17 + $0x20] sm:$0xf]
    %v2167 = vld [vmem:[#allocation17 + $0x24] sm:$0xf]
    %v2168 = vld [vmem:[#allocation17 + $0x28] sm:$0xf]
    %v2169 = vld [vmem:[#allocation17 + $0x2c] sm:$0xf]
    %v2170 = vld [vmem:[#allocation17 + $0x30] sm:$0xf]
    %v2171 = vld [vmem:[#allocation17 + $0x34] sm:$0xf]
    %v2172 = vld [vmem:[#allocation17 + $0x38] sm:$0xf]
    %v2173 = vld [vmem:[#allocation17 + $0x3c] sm:$0xf]
    %v2174 = vlaneseq
    %v2175 = vshrl.u32 %v2174, 7
    %v2176 = vsub.s32 6, %v2175
    %v2177 = vrot.slane %v222, %v2176
    %v2194 = vunpack.c.l.b16 %v2158
    %v2195 = vunpack.c.l.b16 %v2159
    %v2196 = vunpack.c.l.b16 %v2160
    %v2197 = vunpack.c.l.b16 %v2161
    %v2198 = vunpack.c.l.b16 %v2162
    %v2199 = vunpack.c.l.b16 %v2163
    %v2200 = vunpack.c.l.b16 %v2164
    %v2201 = vunpack.c.l.b16 %v2165
    %v2202 = vunpack.c.l.b16 %v2166
    %v2203 = vunpack.c.l.b16 %v2167
    %v2204 = vunpack.c.l.b16 %v2168
    %v2205 = vunpack.c.l.b16 %v2169
    %v2206 = vunpack.c.l.b16 %v2170
    %v2207 = vunpack.c.l.b16 %v2171
    %v2208 = vunpack.c.l.b16 %v2172
    %v2209 = vunpack.c.l.b16 %v2173
    %v2210 = vpack.c.b16 %v2195, %v2194
    %v2211 = vpack.c.b16 %v2197, %v2196
    %v2212 = vpack.c.b16 %v2199, %v2198
    %v2213 = vpack.c.b16 %v2201, %v2200
    %v2214 = vpack.c.b16 %v2203, %v2202
    %v2215 = vpack.c.b16 %v2205, %v2204
    %v2216 = vpack.c.b16 %v2207, %v2206
    %v2217 = vpack.c.b16 %v2209, %v2208
    %2226 = vmatprep.subr.bf16.mxu0 0
    %2227 = vmatpush1.bf16.msra.mxu0 %v2210
    %2228 = vmatprep.subr.bf16.mxu0 0
    %2229 = vmatpush1.bf16.msra.mxu0 %v2211
    %2230 = vmatprep.subr.bf16.mxu0 0
    %2231 = vmatpush1.bf16.msra.mxu0 %v2212
    %2232 = vmatprep.subr.bf16.mxu0 0
    %2233 = vmatpush1.bf16.msra.mxu0 %v2213
    %2234 = vmatprep.subr.bf16.mxu0 0
    %2235 = vmatpush1.bf16.msra.mxu0 %v2214
    %2236 = vmatprep.subr.bf16.mxu0 0
    %2237 = vmatpush1.bf16.msra.mxu0 %v2215
    %2238 = vmatprep.subr.bf16.mxu0 0
    %2239 = vmatpush1.bf16.msra.mxu0 %v2216
    %2240 = vmatprep.subr.bf16.mxu0 0
    %2241 = vmatpush1.bf16.msra.mxu0 %v2217
    %2242 = vmatprep.subr.bf16.mxu0 0
    %2243 = vmatpush1.bf16.msra.mxu0 0
    %2244 = vmatprep.subr.bf16.mxu0 0
    %2245 = vmatpush1.bf16.msra.mxu0 0
    %2246 = vmatprep.subr.bf16.mxu0 0
    %2247 = vmatpush1.bf16.msra.mxu0 0
    %2248 = vmatprep.subr.bf16.mxu0 0
    %2249 = vmatpush1.bf16.msra.mxu0 0
    %2250 = vmatprep.subr.bf16.mxu0 0
    %2251 = vmatpush1.bf16.msra.mxu0 0
    %2252 = vmatprep.subr.bf16.mxu0 0
    %2253 = vmatpush1.bf16.msra.mxu0 0
    %2254 = vmatprep.subr.bf16.mxu0 0
    %2255 = vmatpush1.bf16.msra.mxu0 0
    %2256 = vmatprep.subr.bf16.mxu0 0
    %2257 = vmatpush1.bf16.msra.mxu0 0
    %2258 = vmatprep.mubr.bf16.mxu0 0
    %2259 = vmatmul.mubr.bf16.gmra.mrb[0].mxu0 %v2039
    %v2260 = vpop.f32.mrb[0].mxu0
    %v2261 = vadd.f32 %v2177, %v2260
    %v2262 = vpop.f32.mrb[0].mxu0
    %v2263 = vpop.f32.mrb[0].mxu0
    %v2264 = vadd.f32 %v2177, %v2263
    %v2265 = vpop.f32.mrb[0].mxu0
    %2266 = vmatprep.mubr.bf16.mxu0 0
    %2267 = vmatmul.mubr.bf16.gmra.mrb[0].mxu0 %v2040
    %v2268 = vpop.f32.mrb[0].mxu0
    %v2269 = vadd.f32 %v2177, %v2268
    %v2270 = vpop.f32.mrb[0].mxu0
    %v2271 = vpop.f32.mrb[0].mxu0
    %v2272 = vadd.f32 %v2177, %v2271
    %v2273 = vpop.f32.mrb[0].mxu0
    %2274 = vdwg.mxu0
    %v2275 = vmul.f32 %v2033, 0.17677669
    %v2276 = vmul.f32 %v2036, 0.17677669
    %v2277 = vpack.c.bf16 %v2276, %v2275
    %v2278 = vpack.c.bf16 %v2147, %v2144
    %v2279 = vpack.c.bf16 %v2155, %v2152
    %v2280 = vpack.c.bf16 %v2264, %v2261
    %v2281 = vpack.c.bf16 %v2272, %v2269
    %v2282 = vld [vmem:[#allocation18] sm:$0xf]
    %v2283 = vld [vmem:[#allocation18 + $0x4] sm:$0xf]
    %v2284 = vld [vmem:[#allocation18 + $0x8] sm:$0xf]
    %v2285 = vld [vmem:[#allocation18 + $0xc] sm:$0xf]
    %v2286 = vld [vmem:[#allocation18 + $0x10] sm:$0xf]
    %v2287 = vld [vmem:[#allocation18 + $0x14] sm:$0xf]
    %v2288 = vld [vmem:[#allocation18 + $0x18] sm:$0xf]
    %v2289 = vld [vmem:[#allocation18 + $0x1c] sm:$0xf]
    %v2290 = vld [vmem:[#allocation18 + $0x20] sm:$0xf]
    %v2291 = vld [vmem:[#allocation18 + $0x24] sm:$0xf]
    %v2292 = vld [vmem:[#allocation18 + $0x28] sm:$0xf]
    %v2293 = vld [vmem:[#allocation18 + $0x2c] sm:$0xf]
    %v2294 = vld [vmem:[#allocation18 + $0x30] sm:$0xf]
    %v2295 = vld [vmem:[#allocation18 + $0x34] sm:$0xf]
    %v2296 = vld [vmem:[#allocation18 + $0x38] sm:$0xf]
    %v2297 = vld [vmem:[#allocation18 + $0x3c] sm:$0xf]
    %v2299 = vsel %vm578, %v2277, 0
    %v2302 = vsel %vm578, %v2278, 0
    %2304 = vmatprep.subr.bf16.mxu0 0
    %2305 = vmatpush1.bf16.xpose.msra.mxu0 %v2302
    %2306 = vmatprep.subr.bf16.mxu0 0
    %2307 = vmatpush1.bf16.xpose.msra.mxu0 0
    %2308 = vmatprep.subr.bf16.mxu0 0
    %2309 = vmatpush1.bf16.xpose.msra.mxu0 0
    %2310 = vmatprep.subr.bf16.mxu0 0
    %2311 = vmatpush1.bf16.xpose.msra.mxu0 0
    %2312 = vmatprep.subr.bf16.mxu0 0
    %2313 = vmatpush1.bf16.xpose.msra.mxu0 0
    %2314 = vmatprep.subr.bf16.mxu0 0
    %2315 = vmatpush1.bf16.xpose.msra.mxu0 0
    %2316 = vmatprep.subr.bf16.mxu0 0
    %2317 = vmatpush1.bf16.xpose.msra.mxu0 0
    %2318 = vmatprep.subr.bf16.mxu0 0
    %2319 = vmatpush1.bf16.xpose.msra.mxu0 0
    %2320 = vmatprep.subr.bf16.mxu0 0
    %2321 = vmatpush1.bf16.xpose.msra.mxu0 0
    %2322 = vmatprep.subr.bf16.mxu0 0
    %2323 = vmatpush1.bf16.xpose.msra.mxu0 0
    %2324 = vmatprep.subr.bf16.mxu0 0
    %2325 = vmatpush1.bf16.xpose.msra.mxu0 0
    %2326 = vmatprep.subr.bf16.mxu0 0
    %2327 = vmatpush1.bf16.xpose.msra.mxu0 0
    %2328 = vmatprep.subr.bf16.mxu0 0
    %2329 = vmatpush1.bf16.xpose.msra.mxu0 0
    %2330 = vmatprep.subr.bf16.mxu0 0
    %2331 = vmatpush1.bf16.xpose.msra.mxu0 0
    %2332 = vmatprep.subr.bf16.mxu0 0
    %2333 = vmatpush1.bf16.xpose.msra.mxu0 0
    %2334 = vmatprep.subr.bf16.mxu0 0
    %2335 = vmatpush1.bf16.xpose.msra.mxu0 0
    %2336 = vmatprep.mubr.bf16.mxu0 0
    %2337 = vmatmul.mubr.bf16.gmra.mrb[0].mxu0 %v2299
    %v2338 = vpop.f32.mrb[0].mxu0
    %v2339 = vadd.f32 0.0, %v2338
    %v2340 = vpop.f32.mrb[0].mxu0
    %v2341 = vpop.f32.mrb[0].mxu0
    %v2342 = vpop.f32.mrb[0].mxu0
    %2343 = vdwg.mxu0
    %vm2344 = vcmask 130048
    %v2345 = vsel %vm2344, %v2339, -inf
    %2346 = vmax.xlane.f32.xlu0 %v2345
    %v2347 = vpop.xlane.xlu0 %2346
    %v2348 = vsub.f32 %v2339, %v2347
    %v2349 = vmul.f32 %v2348, 1.442695
    %v2350 = vpow.pop %v2349
    %v2351 = vsel %vm2344, %v2350, 0.0
    %2352 = vadd.xlane.f32.xlu0 %v2351
    %v2353 = vpop.xlane.xlu0 %2352
    %v2354 = vrcp.pop %v2353
    %v2355 = vmul.f32 %v2350, %v2354
    %2356 = vst.msk [vmem:[#allocation26] sm:$0xff] %vm2344, %v2355
    %v2357 = vpack.c.bf16 %v2355, %v2355
    %v2359 = vsel %vm2344, %v2357, 0
    %2361 = vmatprep.subr.bf16.mxu0 0
    %2362 = vmatpush1.bf16.msra.mxu0 %v2280
    %2363 = vmatprep.subr.bf16.mxu0 0
    %2364 = vmatpush1.bf16.msra.mxu0 0
    %2365 = vmatprep.subr.bf16.mxu0 0
    %2366 = vmatpush1.bf16.msra.mxu0 0
    %2367 = vmatprep.subr.bf16.mxu0 0
    %2368 = vmatpush1.bf16.msra.mxu0 0
    %2369 = vmatprep.subr.bf16.mxu0 0
    %2370 = vmatpush1.bf16.msra.mxu0 0
    %2371 = vmatprep.subr.bf16.mxu0 0
    %2372 = vmatpush1.bf16.msra.mxu0 0
    %2373 = vmatprep.subr.bf16.mxu0 0
    %2374 = vmatpush1.bf16.msra.mxu0 0
    %2375 = vmatprep.subr.bf16.mxu0 0
    %2376 = vmatpush1.bf16.msra.mxu0 0
    %2377 = vmatprep.subr.bf16.mxu0 0
    %2378 = vmatpush1.bf16.msra.mxu0 0
    %2379 = vmatprep.subr.bf16.mxu0 0
    %2380 = vmatpush1.bf16.msra.mxu0 0
    %2381 = vmatprep.subr.bf16.mxu0 0
    %2382 = vmatpush1.bf16.msra.mxu0 0
    %2383 = vmatprep.subr.bf16.mxu0 0
    %2384 = vmatpush1.bf16.msra.mxu0 0
    %2385 = vmatprep.subr.bf16.mxu0 0
    %2386 = vmatpush1.bf16.msra.mxu0 0
    %2387 = vmatprep.subr.bf16.mxu0 0
    %2388 = vmatpush1.bf16.msra.mxu0 0
    %2389 = vmatprep.subr.bf16.mxu0 0
    %2390 = vmatpush1.bf16.msra.mxu0 0
    %2391 = vmatprep.subr.bf16.mxu0 0
    %2392 = vmatpush1.bf16.msra.mxu0 0
    %2393 = vmatprep.mubr.bf16.mxu0 0
    %2394 = vmatmul.mubr.bf16.gmra.mrb[0].mxu0 %v2359
    %v2395 = vpop.f32.mrb[0].mxu0
    %v2396 = vadd.f32 0.0, %v2395
    %v2397 = vpop.f32.mrb[0].mxu0
    %v2398 = vpop.f32.mrb[0].mxu0
    %v2399 = vpop.f32.mrb[0].mxu0
    %2400 = vdwg.mxu0
    %v2401 = vpack.c.bf16 %v2396, %v2396
    %2403 = vrot.lane.b32.xlu0 %v2277, 96
    %v2404 = vpop.permute.xlu0 %2403
    %2406 = vrot.lane.b32.xlu0 %v2278, 96
    %v2407 = vpop.permute.xlu0 %2406
    %v2409 = vsel %vm578, %v2404, 0
    %v2412 = vsel %vm578, %v2407, 0
    %2414 = vmatprep.subr.bf16.mxu0 0
    %2415 = vmatpush1.bf16.xpose.msra.mxu0 %v2412
    %2416 = vmatprep.subr.bf16.mxu0 0
    %2417 = vmatpush1.bf16.xpose.msra.mxu0 0
    %2418 = vmatprep.subr.bf16.mxu0 0
    %2419 = vmatpush1.bf16.xpose.msra.mxu0 0
    %2420 = vmatprep.subr.bf16.mxu0 0
    %2421 = vmatpush1.bf16.xpose.msra.mxu0 0
    %2422 = vmatprep.subr.bf16.mxu0 0
    %2423 = vmatpush1.bf16.xpose.msra.mxu0 0
    %2424 = vmatprep.subr.bf16.mxu0 0
    %2425 = vmatpush1.bf16.xpose.msra.mxu0 0
    %2426 = vmatprep.subr.bf16.mxu0 0
    %2427 = vmatpush1.bf16.xpose.msra.mxu0 0
    %2428 = vmatprep.subr.bf16.mxu0 0
    %2429 = vmatpush1.bf16.xpose.msra.mxu0 0
    %2430 = vmatprep.subr.bf16.mxu0 0
    %2431 = vmatpush1.bf16.xpose.msra.mxu0 0
    %2432 = vmatprep.subr.bf16.mxu0 0
    %2433 = vmatpush1.bf16.xpose.msra.mxu0 0
    %2434 = vmatprep.subr.bf16.mxu0 0
    %2435 = vmatpush1.bf16.xpose.msra.mxu0 0
    %2436 = vmatprep.subr.bf16.mxu0 0
    %2437 = vmatpush1.bf16.xpose.msra.mxu0 0
    %2438 = vmatprep.subr.bf16.mxu0 0
    %2439 = vmatpush1.bf16.xpose.msra.mxu0 0
    %2440 = vmatprep.subr.bf16.mxu0 0
    %2441 = vmatpush1.bf16.xpose.msra.mxu0 0
    %2442 = vmatprep.subr.bf16.mxu0 0
    %2443 = vmatpush1.bf16.xpose.msra.mxu0 0
    %2444 = vmatprep.subr.bf16.mxu0 0
    %2445 = vmatpush1.bf16.xpose.msra.mxu0 0
    %2446 = vmatprep.mubr.bf16.mxu0 0
    %2447 = vmatmul.mubr.bf16.gmra.mrb[0].mxu0 %v2409
    %v2448 = vpop.f32.mrb[0].mxu0
    %v2449 = vadd.f32 0.0, %v2448
    %v2450 = vpop.f32.mrb[0].mxu0
    %v2451 = vpop.f32.mrb[0].mxu0
    %v2452 = vpop.f32.mrb[0].mxu0
    %2453 = vdwg.mxu0
    %v2454 = vsel %vm2344, %v2449, -inf
    %2455 = vmax.xlane.f32.xlu0 %v2454
    %v2456 = vpop.xlane.xlu0 %2455
    %v2457 = vsub.f32 %v2449, %v2456
    %v2458 = vmul.f32 %v2457, 1.442695
    %v2459 = vpow.pop %v2458
    %v2460 = vsel %vm2344, %v2459, 0.0
    %2461 = vadd.xlane.f32.xlu0 %v2460
    %v2462 = vpop.xlane.xlu0 %2461
    %v2463 = vrcp.pop %v2462
    %v2464 = vmul.f32 %v2459, %v2463
    %s2465 = scalar_lea.vmem [#allocation26], 8
    %2466 = vst.msk [vmem:[%s2465] sm:$0xff] %vm2344, %v2464
    %v2467 = vpack.c.bf16 %v2464, %v2464
    %2469 = vrot.lane.b32.xlu0 %v2280, 96
    %v2470 = vpop.permute.xlu0 %2469
    %v2473 = vsel %vm2344, %v2467, 0
    %2475 = vmatprep.subr.bf16.mxu0 0
    %2476 = vmatpush1.bf16.msra.mxu0 %v2470
    %2477 = vmatprep.subr.bf16.mxu0 0
    %2478 = vmatpush1.bf16.msra.mxu0 0
    %2479 = vmatprep.subr.bf16.mxu0 0
    %2480 = vmatpush1.bf16.msra.mxu0 0
    %2481 = vmatprep.subr.bf16.mxu0 0
    %2482 = vmatpush1.bf16.msra.mxu0 0
    %2483 = vmatprep.subr.bf16.mxu0 0
    %2484 = vmatpush1.bf16.msra.mxu0 0
    %2485 = vmatprep.subr.bf16.mxu0 0
    %2486 = vmatpush1.bf16.msra.mxu0 0
    %2487 = vmatprep.subr.bf16.mxu0 0
    %2488 = vmatpush1.bf16.msra.mxu0 0
    %2489 = vmatprep.subr.bf16.mxu0 0
    %2490 = vmatpush1.bf16.msra.mxu0 0
    %2491 = vmatprep.subr.bf16.mxu0 0
    %2492 = vmatpush1.bf16.msra.mxu0 0
    %2493 = vmatprep.subr.bf16.mxu0 0
    %2494 = vmatpush1.bf16.msra.mxu0 0
    %2495 = vmatprep.subr.bf16.mxu0 0
    %2496 = vmatpush1.bf16.msra.mxu0 0
    %2497 = vmatprep.subr.bf16.mxu0 0
    %2498 = vmatpush1.bf16.msra.mxu0 0
    %2499 = vmatprep.subr.bf16.mxu0 0
    %2500 = vmatpush1.bf16.msra.mxu0 0
    %2501 = vmatprep.subr.bf16.mxu0 0
    %2502 = vmatpush1.bf16.msra.mxu0 0
    %2503 = vmatprep.subr.bf16.mxu0 0
    %2504 = vmatpush1.bf16.msra.mxu0 0
    %2505 = vmatprep.subr.bf16.mxu0 0
    %2506 = vmatpush1.bf16.msra.mxu0 0
    %2507 = vmatprep.mubr.bf16.mxu0 0
    %2508 = vmatmul.mubr.bf16.gmra.mrb[0].mxu0 %v2473
    %v2509 = vpop.f32.mrb[0].mxu0
    %v2510 = vadd.f32 0.0, %v2509
    %v2511 = vpop.f32.mrb[0].mxu0
    %v2512 = vpop.f32.mrb[0].mxu0
    %v2513 = vpop.f32.mrb[0].mxu0
    %2514 = vdwg.mxu0
    %v2515 = vpack.c.bf16 %v2510, %v2510
    %v2520 = vunpack.c.l.b16 %v2286
    %v2521 = vunpack.c.l.b16 %v2287
    %v2522 = vunpack.c.l.b16 %v2288
    %v2523 = vunpack.c.l.b16 %v2289
    %v2524 = vpack.c.b16 %v2521, %v2520
    %v2525 = vpack.c.b16 %v2523, %v2522
    %v2529 = vsel %vm578, %v2515, 0
    %2531 = vmatprep.subr.bf16.mxu0 0
    %2532 = vmatpush1.bf16.msra.mxu0 %v2524
    %2533 = vmatprep.subr.bf16.mxu0 0
    %2534 = vmatpush1.bf16.msra.mxu0 %v2525
    %2535 = vmatprep.subr.bf16.mxu0 0
    %2536 = vmatpush1.bf16.msra.mxu0 0
    %2537 = vmatprep.subr.bf16.mxu0 0
    %2538 = vmatpush1.bf16.msra.mxu0 0
    %2539 = vmatprep.subr.bf16.mxu0 0
    %2540 = vmatpush1.bf16.msra.mxu0 0
    %2541 = vmatprep.subr.bf16.mxu0 0
    %2542 = vmatpush1.bf16.msra.mxu0 0
    %2543 = vmatprep.subr.bf16.mxu0 0
    %2544 = vmatpush1.bf16.msra.mxu0 0
    %2545 = vmatprep.subr.bf16.mxu0 0
    %2546 = vmatpush1.bf16.msra.mxu0 0
    %2547 = vmatprep.subr.bf16.mxu0 0
    %2548 = vmatpush1.bf16.msra.mxu0 0
    %2549 = vmatprep.subr.bf16.mxu0 0
    %2550 = vmatpush1.bf16.msra.mxu0 0
    %2551 = vmatprep.subr.bf16.mxu0 0
    %2552 = vmatpush1.bf16.msra.mxu0 0
    %2553 = vmatprep.subr.bf16.mxu0 0
    %2554 = vmatpush1.bf16.msra.mxu0 0
    %2555 = vmatprep.subr.bf16.mxu0 0
    %2556 = vmatpush1.bf16.msra.mxu0 0
    %2557 = vmatprep.subr.bf16.mxu0 0
    %2558 = vmatpush1.bf16.msra.mxu0 0
    %2559 = vmatprep.subr.bf16.mxu0 0
    %2560 = vmatpush1.bf16.msra.mxu0 0
    %2561 = vmatprep.subr.bf16.mxu0 0
    %2562 = vmatpush1.bf16.msra.mxu0 0
    %2563 = vmatprep.mubr.bf16.mxu0 0
    %2564 = vmatmul.mubr.bf16.gmra.mrb[0].mxu0 %v2529
    %v2565 = vpop.f32.mrb[0].mxu0
    %v2566 = vadd.f32 0.0, %v2565
    %v2567 = vpop.f32.mrb[0].mxu0
    %v2568 = vpop.f32.mrb[0].mxu0
    %v2569 = vpop.f32.mrb[0].mxu0
    %2570 = vdwg.mxu0
    %v2575 = vunpack.c.l.b16 %v2282
    %v2576 = vunpack.c.l.b16 %v2283
    %v2577 = vunpack.c.l.b16 %v2284
    %v2578 = vunpack.c.l.b16 %v2285
    %v2579 = vpack.c.b16 %v2576, %v2575
    %v2580 = vpack.c.b16 %v2578, %v2577
    %v2584 = vsel %vm578, %v2401, 0
    %2586 = vmatprep.subr.bf16.mxu0 0
    %2587 = vmatpush1.bf16.msra.mxu0 %v2579
    %2588 = vmatprep.subr.bf16.mxu0 0
    %2589 = vmatpush1.bf16.msra.mxu0 %v2580
    %2590 = vmatprep.subr.bf16.mxu0 0
    %2591 = vmatpush1.bf16.msra.mxu0 0
    %2592 = vmatprep.subr.bf16.mxu0 0
    %2593 = vmatpush1.bf16.msra.mxu0 0
    %2594 = vmatprep.subr.bf16.mxu0 0
    %2595 = vmatpush1.bf16.msra.mxu0 0
    %2596 = vmatprep.subr.bf16.mxu0 0
    %2597 = vmatpush1.bf16.msra.mxu0 0
    %2598 = vmatprep.subr.bf16.mxu0 0
    %2599 = vmatpush1.bf16.msra.mxu0 0
    %2600 = vmatprep.subr.bf16.mxu0 0
    %2601 = vmatpush1.bf16.msra.mxu0 0
    %2602 = vmatprep.subr.bf16.mxu0 0
    %2603 = vmatpush1.bf16.msra.mxu0 0
    %2604 = vmatprep.subr.bf16.mxu0 0
    %2605 = vmatpush1.bf16.msra.mxu0 0
    %2606 = vmatprep.subr.bf16.mxu0 0
    %2607 = vmatpush1.bf16.msra.mxu0 0
    %2608 = vmatprep.subr.bf16.mxu0 0
    %2609 = vmatpush1.bf16.msra.mxu0 0
    %2610 = vmatprep.subr.bf16.mxu0 0
    %2611 = vmatpush1.bf16.msra.mxu0 0
    %2612 = vmatprep.subr.bf16.mxu0 0
    %2613 = vmatpush1.bf16.msra.mxu0 0
    %2614 = vmatprep.subr.bf16.mxu0 0
    %2615 = vmatpush1.bf16.msra.mxu0 0
    %2616 = vmatprep.subr.bf16.mxu0 0
    %2617 = vmatpush1.bf16.msra.mxu0 0
    %2618 = vmatprep.mubr.bf16.mxu0 0
    %2619 = vmatmul.mubr.bf16.gmra.mrb[0].mxu0 %v2584
    %v2620 = vpop.f32.mrb[0].mxu0
    %v2621 = vadd.f32 %v2566, %v2620
    %v2622 = vpop.f32.mrb[0].mxu0
    %v2623 = vpop.f32.mrb[0].mxu0
    %v2624 = vpop.f32.mrb[0].mxu0
    %2625 = vdwg.mxu0
    %2626 = vrot.lane.b32.xlu0 %v2277, 64
    %v2627 = vpop.permute.xlu0 %2626
    %2628 = vrot.lane.b32.xlu0 %v2278, 64
    %v2629 = vpop.permute.xlu0 %2628
    %v2631 = vsel %vm578, %v2627, 0
    %v2634 = vsel %vm578, %v2629, 0
    %2636 = vmatprep.subr.bf16.mxu0 0
    %2637 = vmatpush1.bf16.xpose.msra.mxu0 %v2634
    %2638 = vmatprep.subr.bf16.mxu0 0
    %2639 = vmatpush1.bf16.xpose.msra.mxu0 0
    %2640 = vmatprep.subr.bf16.mxu0 0
    %2641 = vmatpush1.bf16.xpose.msra.mxu0 0
    %2642 = vmatprep.subr.bf16.mxu0 0
    %2643 = vmatpush1.bf16.xpose.msra.mxu0 0
    %2644 = vmatprep.subr.bf16.mxu0 0
    %2645 = vmatpush1.bf16.xpose.msra.mxu0 0
    %2646 = vmatprep.subr.bf16.mxu0 0
    %2647 = vmatpush1.bf16.xpose.msra.mxu0 0
    %2648 = vmatprep.subr.bf16.mxu0 0
    %2649 = vmatpush1.bf16.xpose.msra.mxu0 0
    %2650 = vmatprep.subr.bf16.mxu0 0
    %2651 = vmatpush1.bf16.xpose.msra.mxu0 0
    %2652 = vmatprep.subr.bf16.mxu0 0
    %2653 = vmatpush1.bf16.xpose.msra.mxu0 0
    %2654 = vmatprep.subr.bf16.mxu0 0
    %2655 = vmatpush1.bf16.xpose.msra.mxu0 0
    %2656 = vmatprep.subr.bf16.mxu0 0
    %2657 = vmatpush1.bf16.xpose.msra.mxu0 0
    %2658 = vmatprep.subr.bf16.mxu0 0
    %2659 = vmatpush1.bf16.xpose.msra.mxu0 0
    %2660 = vmatprep.subr.bf16.mxu0 0
    %2661 = vmatpush1.bf16.xpose.msra.mxu0 0
    %2662 = vmatprep.subr.bf16.mxu0 0
    %2663 = vmatpush1.bf16.xpose.msra.mxu0 0
    %2664 = vmatprep.subr.bf16.mxu0 0
    %2665 = vmatpush1.bf16.xpose.msra.mxu0 0
    %2666 = vmatprep.subr.bf16.mxu0 0
    %2667 = vmatpush1.bf16.xpose.msra.mxu0 0
    %2668 = vmatprep.mubr.bf16.mxu0 0
    %2669 = vmatmul.mubr.bf16.gmra.mrb[0].mxu0 %v2631
    %v2670 = vpop.f32.mrb[0].mxu0
    %v2671 = vadd.f32 0.0, %v2670
    %v2672 = vpop.f32.mrb[0].mxu0
    %v2673 = vpop.f32.mrb[0].mxu0
    %v2674 = vpop.f32.mrb[0].mxu0
    %2675 = vdwg.mxu0
    %v2676 = vsel %vm2344, %v2671, -inf
    %2677 = vmax.xlane.f32.xlu0 %v2676
    %v2678 = vpop.xlane.xlu0 %2677
    %v2679 = vsub.f32 %v2671, %v2678
    %v2680 = vmul.f32 %v2679, 1.442695
    %v2681 = vpow.pop %v2680
    %v2682 = vsel %vm2344, %v2681, 0.0
    %2683 = vadd.xlane.f32.xlu0 %v2682
    %v2684 = vpop.xlane.xlu0 %2683
    %v2685 = vrcp.pop %v2684
    %v2686 = vmul.f32 %v2681, %v2685
    %s2687 = scalar_lea.vmem [#allocation26], 16
    %2688 = vst.msk [vmem:[%s2687] sm:$0xff] %vm2344, %v2686
    %v2689 = vpack.c.bf16 %v2686, %v2686
    %2690 = vrot.lane.b32.xlu0 %v2280, 64
    %v2691 = vpop.permute.xlu0 %2690
    %v2694 = vsel %vm2344, %v2689, 0
    %2696 = vmatprep.subr.bf16.mxu0 0
    %2697 = vmatpush1.bf16.msra.mxu0 %v2691
    %2698 = vmatprep.subr.bf16.mxu0 0
    %2699 = vmatpush1.bf16.msra.mxu0 0
    %2700 = vmatprep.subr.bf16.mxu0 0
    %2701 = vmatpush1.bf16.msra.mxu0 0
    %2702 = vmatprep.subr.bf16.mxu0 0
    %2703 = vmatpush1.bf16.msra.mxu0 0
    %2704 = vmatprep.subr.bf16.mxu0 0
    %2705 = vmatpush1.bf16.msra.mxu0 0
    %2706 = vmatprep.subr.bf16.mxu0 0
    %2707 = vmatpush1.bf16.msra.mxu0 0
    %2708 = vmatprep.subr.bf16.mxu0 0
    %2709 = vmatpush1.bf16.msra.mxu0 0
    %2710 = vmatprep.subr.bf16.mxu0 0
    %2711 = vmatpush1.bf16.msra.mxu0 0
    %2712 = vmatprep.subr.bf16.mxu0 0
    %2713 = vmatpush1.bf16.msra.mxu0 0
    %2714 = vmatprep.subr.bf16.mxu0 0
    %2715 = vmatpush1.bf16.msra.mxu0 0
    %2716 = vmatprep.subr.bf16.mxu0 0
    %2717 = vmatpush1.bf16.msra.mxu0 0
    %2718 = vmatprep.subr.bf16.mxu0 0
    %2719 = vmatpush1.bf16.msra.mxu0 0
    %2720 = vmatprep.subr.bf16.mxu0 0
    %2721 = vmatpush1.bf16.msra.mxu0 0
    %2722 = vmatprep.subr.bf16.mxu0 0
    %2723 = vmatpush1.bf16.msra.mxu0 0
    %2724 = vmatprep.subr.bf16.mxu0 0
    %2725 = vmatpush1.bf16.msra.mxu0 0
    %2726 = vmatprep.subr.bf16.mxu0 0
    %2727 = vmatpush1.bf16.msra.mxu0 0
    %2728 = vmatprep.mubr.bf16.mxu0 0
    %2729 = vmatmul.mubr.bf16.gmra.mrb[0].mxu0 %v2694
    %v2730 = vpop.f32.mrb[0].mxu0
    %v2731 = vadd.f32 0.0, %v2730
    %v2732 = vpop.f32.mrb[0].mxu0
    %v2733 = vpop.f32.mrb[0].mxu0
    %v2734 = vpop.f32.mrb[0].mxu0
    %2735 = vdwg.mxu0
    %v2736 = vpack.c.bf16 %v2731, %v2731
    %v2741 = vunpack.c.l.b16 %v2290
    %v2742 = vunpack.c.l.b16 %v2291
    %v2743 = vunpack.c.l.b16 %v2292
    %v2744 = vunpack.c.l.b16 %v2293
    %v2745 = vpack.c.b16 %v2742, %v2741
    %v2746 = vpack.c.b16 %v2744, %v2743
    %v2750 = vsel %vm578, %v2736, 0
    %2752 = vmatprep.subr.bf16.mxu0 0
    %2753 = vmatpush1.bf16.msra.mxu0 %v2745
    %2754 = vmatprep.subr.bf16.mxu0 0
    %2755 = vmatpush1.bf16.msra.mxu0 %v2746
    %2756 = vmatprep.subr.bf16.mxu0 0
    %2757 = vmatpush1.bf16.msra.mxu0 0
    %2758 = vmatprep.subr.bf16.mxu0 0
    %2759 = vmatpush1.bf16.msra.mxu0 0
    %2760 = vmatprep.subr.bf16.mxu0 0
    %2761 = vmatpush1.bf16.msra.mxu0 0
    %2762 = vmatprep.subr.bf16.mxu0 0
    %2763 = vmatpush1.bf16.msra.mxu0 0
    %2764 = vmatprep.subr.bf16.mxu0 0
    %2765 = vmatpush1.bf16.msra.mxu0 0
    %2766 = vmatprep.subr.bf16.mxu0 0
    %2767 = vmatpush1.bf16.msra.mxu0 0
    %2768 = vmatprep.subr.bf16.mxu0 0
    %2769 = vmatpush1.bf16.msra.mxu0 0
    %2770 = vmatprep.subr.bf16.mxu0 0
    %2771 = vmatpush1.bf16.msra.mxu0 0
    %2772 = vmatprep.subr.bf16.mxu0 0
    %2773 = vmatpush1.bf16.msra.mxu0 0
    %2774 = vmatprep.subr.bf16.mxu0 0
    %2775 = vmatpush1.bf16.msra.mxu0 0
    %2776 = vmatprep.subr.bf16.mxu0 0
    %2777 = vmatpush1.bf16.msra.mxu0 0
    %2778 = vmatprep.subr.bf16.mxu0 0
    %2779 = vmatpush1.bf16.msra.mxu0 0
    %2780 = vmatprep.subr.bf16.mxu0 0
    %2781 = vmatpush1.bf16.msra.mxu0 0
    %2782 = vmatprep.subr.bf16.mxu0 0
    %2783 = vmatpush1.bf16.msra.mxu0 0
    %2784 = vmatprep.mubr.bf16.mxu0 0
    %2785 = vmatmul.mubr.bf16.gmra.mrb[0].mxu0 %v2750
    %v2786 = vpop.f32.mrb[0].mxu0
    %v2787 = vadd.f32 0.0, %v2786
    %v2788 = vpop.f32.mrb[0].mxu0
    %v2789 = vpop.f32.mrb[0].mxu0
    %v2790 = vpop.f32.mrb[0].mxu0
    %2791 = vdwg.mxu0
    %v2792 = vadd.f32 %v2621, %v2787
    %2793 = vrot.lane.b32.xlu0 %v2277, 32
    %v2794 = vpop.permute.xlu0 %2793
    %2795 = vrot.lane.b32.xlu0 %v2278, 32
    %v2796 = vpop.permute.xlu0 %2795
    %v2798 = vsel %vm578, %v2794, 0
    %v2801 = vsel %vm578, %v2796, 0
    %2803 = vmatprep.subr.bf16.mxu0 0
    %2804 = vmatpush1.bf16.xpose.msra.mxu0 %v2801
    %2805 = vmatprep.subr.bf16.mxu0 0
    %2806 = vmatpush1.bf16.xpose.msra.mxu0 0
    %2807 = vmatprep.subr.bf16.mxu0 0
    %2808 = vmatpush1.bf16.xpose.msra.mxu0 0
    %2809 = vmatprep.subr.bf16.mxu0 0
    %2810 = vmatpush1.bf16.xpose.msra.mxu0 0
    %2811 = vmatprep.subr.bf16.mxu0 0
    %2812 = vmatpush1.bf16.xpose.msra.mxu0 0
    %2813 = vmatprep.subr.bf16.mxu0 0
    %2814 = vmatpush1.bf16.xpose.msra.mxu0 0
    %2815 = vmatprep.subr.bf16.mxu0 0
    %2816 = vmatpush1.bf16.xpose.msra.mxu0 0
    %2817 = vmatprep.subr.bf16.mxu0 0
    %2818 = vmatpush1.bf16.xpose.msra.mxu0 0
    %2819 = vmatprep.subr.bf16.mxu0 0
    %2820 = vmatpush1.bf16.xpose.msra.mxu0 0
    %2821 = vmatprep.subr.bf16.mxu0 0
    %2822 = vmatpush1.bf16.xpose.msra.mxu0 0
    %2823 = vmatprep.subr.bf16.mxu0 0
    %2824 = vmatpush1.bf16.xpose.msra.mxu0 0
    %2825 = vmatprep.subr.bf16.mxu0 0
    %2826 = vmatpush1.bf16.xpose.msra.mxu0 0
    %2827 = vmatprep.subr.bf16.mxu0 0
    %2828 = vmatpush1.bf16.xpose.msra.mxu0 0
    %2829 = vmatprep.subr.bf16.mxu0 0
    %2830 = vmatpush1.bf16.xpose.msra.mxu0 0
    %2831 = vmatprep.subr.bf16.mxu0 0
    %2832 = vmatpush1.bf16.xpose.msra.mxu0 0
    %2833 = vmatprep.subr.bf16.mxu0 0
    %2834 = vmatpush1.bf16.xpose.msra.mxu0 0
    %2835 = vmatprep.mubr.bf16.mxu0 0
    %2836 = vmatmul.mubr.bf16.gmra.mrb[0].mxu0 %v2798
    %v2837 = vpop.f32.mrb[0].mxu0
    %v2838 = vadd.f32 0.0, %v2837
    %v2839 = vpop.f32.mrb[0].mxu0
    %v2840 = vpop.f32.mrb[0].mxu0
    %v2841 = vpop.f32.mrb[0].mxu0
    %2842 = vdwg.mxu0
    %v2843 = vsel %vm2344, %v2838, -inf
    %2844 = vmax.xlane.f32.xlu0 %v2843
    %v2845 = vpop.xlane.xlu0 %2844
    %v2846 = vsub.f32 %v2838, %v2845
    %v2847 = vmul.f32 %v2846, 1.442695
    %v2848 = vpow.pop %v2847
    %v2849 = vsel %vm2344, %v2848, 0.0
    %2850 = vadd.xlane.f32.xlu0 %v2849
    %v2851 = vpop.xlane.xlu0 %2850
    %v2852 = vrcp.pop %v2851
    %v2853 = vmul.f32 %v2848, %v2852
    %s2854 = scalar_lea.vmem [#allocation26], 24
    %2855 = vst.msk [vmem:[%s2854] sm:$0xff] %vm2344, %v2853
    %v2856 = vpack.c.bf16 %v2853, %v2853
    %2857 = vrot.lane.b32.xlu0 %v2280, 32
    %v2858 = vpop.permute.xlu0 %2857
    %v2861 = vsel %vm2344, %v2856, 0
    %2863 = vmatprep.subr.bf16.mxu0 0
    %2864 = vmatpush1.bf16.msra.mxu0 %v2858
    %2865 = vmatprep.subr.bf16.mxu0 0
    %2866 = vmatpush1.bf16.msra.mxu0 0
    %2867 = vmatprep.subr.bf16.mxu0 0
    %2868 = vmatpush1.bf16.msra.mxu0 0
    %2869 = vmatprep.subr.bf16.mxu0 0
    %2870 = vmatpush1.bf16.msra.mxu0 0
    %2871 = vmatprep.subr.bf16.mxu0 0
    %2872 = vmatpush1.bf16.msra.mxu0 0
    %2873 = vmatprep.subr.bf16.mxu0 0
    %2874 = vmatpush1.bf16.msra.mxu0 0
    %2875 = vmatprep.subr.bf16.mxu0 0
    %2876 = vmatpush1.bf16.msra.mxu0 0
    %2877 = vmatprep.subr.bf16.mxu0 0
    %2878 = vmatpush1.bf16.msra.mxu0 0
    %2879 = vmatprep.subr.bf16.mxu0 0
    %2880 = vmatpush1.bf16.msra.mxu0 0
    %2881 = vmatprep.subr.bf16.mxu0 0
    %2882 = vmatpush1.bf16.msra.mxu0 0
    %2883 = vmatprep.subr.bf16.mxu0 0
    %2884 = vmatpush1.bf16.msra.mxu0 0
    %2885 = vmatprep.subr.bf16.mxu0 0
    %2886 = vmatpush1.bf16.msra.mxu0 0
    %2887 = vmatprep.subr.bf16.mxu0 0
    %2888 = vmatpush1.bf16.msra.mxu0 0
    %2889 = vmatprep.subr.bf16.mxu0 0
    %2890 = vmatpush1.bf16.msra.mxu0 0
    %2891 = vmatprep.subr.bf16.mxu0 0
    %2892 = vmatpush1.bf16.msra.mxu0 0
    %2893 = vmatprep.subr.bf16.mxu0 0
    %2894 = vmatpush1.bf16.msra.mxu0 0
    %2895 = vmatprep.mubr.bf16.mxu0 0
    %2896 = vmatmul.mubr.bf16.gmra.mrb[0].mxu0 %v2861
    %v2897 = vpop.f32.mrb[0].mxu0
    %v2898 = vadd.f32 0.0, %v2897
    %v2899 = vpop.f32.mrb[0].mxu0
    %v2900 = vpop.f32.mrb[0].mxu0
    %v2901 = vpop.f32.mrb[0].mxu0
    %2902 = vdwg.mxu0
    %v2903 = vpack.c.bf16 %v2898, %v2898
    %v2908 = vunpack.c.l.b16 %v2294
    %v2909 = vunpack.c.l.b16 %v2295
    %v2910 = vunpack.c.l.b16 %v2296
    %v2911 = vunpack.c.l.b16 %v2297
    %v2912 = vpack.c.b16 %v2909, %v2908
    %v2913 = vpack.c.b16 %v2911, %v2910
    %v2917 = vsel %vm578, %v2903, 0
    %2919 = vmatprep.subr.bf16.mxu0 0
    %2920 = vmatpush1.bf16.msra.mxu0 %v2912
    %2921 = vmatprep.subr.bf16.mxu0 0
    %2922 = vmatpush1.bf16.msra.mxu0 %v2913
    %2923 = vmatprep.subr.bf16.mxu0 0
    %2924 = vmatpush1.bf16.msra.mxu0 0
    %2925 = vmatprep.subr.bf16.mxu0 0
    %2926 = vmatpush1.bf16.msra.mxu0 0
    %2927 = vmatprep.subr.bf16.mxu0 0
    %2928 = vmatpush1.bf16.msra.mxu0 0
    %2929 = vmatprep.subr.bf16.mxu0 0
    %2930 = vmatpush1.bf16.msra.mxu0 0
    %2931 = vmatprep.subr.bf16.mxu0 0
    %2932 = vmatpush1.bf16.msra.mxu0 0
    %2933 = vmatprep.subr.bf16.mxu0 0
    %2934 = vmatpush1.bf16.msra.mxu0 0
    %2935 = vmatprep.subr.bf16.mxu0 0
    %2936 = vmatpush1.bf16.msra.mxu0 0
    %2937 = vmatprep.subr.bf16.mxu0 0
    %2938 = vmatpush1.bf16.msra.mxu0 0
    %2939 = vmatprep.subr.bf16.mxu0 0
    %2940 = vmatpush1.bf16.msra.mxu0 0
    %2941 = vmatprep.subr.bf16.mxu0 0
    %2942 = vmatpush1.bf16.msra.mxu0 0
    %2943 = vmatprep.subr.bf16.mxu0 0
    %2944 = vmatpush1.bf16.msra.mxu0 0
    %2945 = vmatprep.subr.bf16.mxu0 0
    %2946 = vmatpush1.bf16.msra.mxu0 0
    %2947 = vmatprep.subr.bf16.mxu0 0
    %2948 = vmatpush1.bf16.msra.mxu0 0
    %2949 = vmatprep.subr.bf16.mxu0 0
    %2950 = vmatpush1.bf16.msra.mxu0 0
    %2951 = vmatprep.mubr.bf16.mxu0 0
    %2952 = vmatmul.mubr.bf16.gmra.mrb[0].mxu0 %v2917
    %v2953 = vpop.f32.mrb[0].mxu0
    %v2954 = vadd.f32 0.0, %v2953
    %v2955 = vpop.f32.mrb[0].mxu0
    %v2956 = vpop.f32.mrb[0].mxu0
    %v2957 = vpop.f32.mrb[0].mxu0
    %2958 = vdwg.mxu0
    %v2959 = vadd.f32 %v2792, %v2954
    %2960 = vst [vmem:[#allocation2] sm:$0xff] %v2959
    %v2961 = vrot.slane %v2277, 4
    %v2963 = vsel %vm578, %v2961, 0
    %v2966 = vsel %vm578, %v2279, 0
    %2968 = vmatprep.subr.bf16.mxu0 0
    %2969 = vmatpush1.bf16.xpose.msra.mxu0 %v2966
    %2970 = vmatprep.subr.bf16.mxu0 0
    %2971 = vmatpush1.bf16.xpose.msra.mxu0 0
    %2972 = vmatprep.subr.bf16.mxu0 0
    %2973 = vmatpush1.bf16.xpose.msra.mxu0 0
    %2974 = vmatprep.subr.bf16.mxu0 0
    %2975 = vmatpush1.bf16.xpose.msra.mxu0 0
    %2976 = vmatprep.subr.bf16.mxu0 0
    %2977 = vmatpush1.bf16.xpose.msra.mxu0 0
    %2978 = vmatprep.subr.bf16.mxu0 0
    %2979 = vmatpush1.bf16.xpose.msra.mxu0 0
    %2980 = vmatprep.subr.bf16.mxu0 0
    %2981 = vmatpush1.bf16.xpose.msra.mxu0 0
    %2982 = vmatprep.subr.bf16.mxu0 0
    %2983 = vmatpush1.bf16.xpose.msra.mxu0 0
    %2984 = vmatprep.subr.bf16.mxu0 0
    %2985 = vmatpush1.bf16.xpose.msra.mxu0 0
    %2986 = vmatprep.subr.bf16.mxu0 0
    %2987 = vmatpush1.bf16.xpose.msra.mxu0 0
    %2988 = vmatprep.subr.bf16.mxu0 0
    %2989 = vmatpush1.bf16.xpose.msra.mxu0 0
    %2990 = vmatprep.subr.bf16.mxu0 0
    %2991 = vmatpush1.bf16.xpose.msra.mxu0 0
    %2992 = vmatprep.subr.bf16.mxu0 0
    %2993 = vmatpush1.bf16.xpose.msra.mxu0 0
    %2994 = vmatprep.subr.bf16.mxu0 0
    %2995 = vmatpush1.bf16.xpose.msra.mxu0 0
    %2996 = vmatprep.subr.bf16.mxu0 0
    %2997 = vmatpush1.bf16.xpose.msra.mxu0 0
    %2998 = vmatprep.subr.bf16.mxu0 0
    %2999 = vmatpush1.bf16.xpose.msra.mxu0 0
    %3000 = vmatprep.mubr.bf16.mxu0 0
    %3001 = vmatmul.mubr.bf16.gmra.mrb[0].mxu0 %v2963
    %v3002 = vpop.f32.mrb[0].mxu0
    %v3003 = vadd.f32 0.0, %v3002
    %v3004 = vpop.f32.mrb[0].mxu0
    %v3005 = vpop.f32.mrb[0].mxu0
    %v3006 = vpop.f32.mrb[0].mxu0
    %3007 = vdwg.mxu0
    %v3008 = vsel %vm2344, %v3003, -inf
    %3009 = vmax.xlane.f32.xlu0 %v3008
    %v3010 = vpop.xlane.xlu0 %3009
    %v3011 = vsub.f32 %v3003, %v3010
    %v3012 = vmul.f32 %v3011, 1.442695
    %v3013 = vpow.pop %v3012
    %v3014 = vsel %vm2344, %v3013, 0.0
    %3015 = vadd.xlane.f32.xlu0 %v3014
    %v3016 = vpop.xlane.xlu0 %3015
    %v3017 = vrcp.pop %v3016
    %v3018 = vmul.f32 %v3013, %v3017
    %s3019 = scalar_lea.vmem [#allocation26], 32
    %3020 = vst.msk [vmem:[%s3019] sm:$0xff] %vm2344, %v3018
    %v3021 = vpack.c.bf16 %v3018, %v3018
    %v3023 = vsel %vm2344, %v3021, 0
    %3025 = vmatprep.subr.bf16.mxu0 0
    %3026 = vmatpush1.bf16.msra.mxu0 %v2281
    %3027 = vmatprep.subr.bf16.mxu0 0
    %3028 = vmatpush1.bf16.msra.mxu0 0
    %3029 = vmatprep.subr.bf16.mxu0 0
    %3030 = vmatpush1.bf16.msra.mxu0 0
    %3031 = vmatprep.subr.bf16.mxu0 0
    %3032 = vmatpush1.bf16.msra.mxu0 0
    %3033 = vmatprep.subr.bf16.mxu0 0
    %3034 = vmatpush1.bf16.msra.mxu0 0
    %3035 = vmatprep.subr.bf16.mxu0 0
    %3036 = vmatpush1.bf16.msra.mxu0 0
    %3037 = vmatprep.subr.bf16.mxu0 0
    %3038 = vmatpush1.bf16.msra.mxu0 0
    %3039 = vmatprep.subr.bf16.mxu0 0
    %3040 = vmatpush1.bf16.msra.mxu0 0
    %3041 = vmatprep.subr.bf16.mxu0 0
    %3042 = vmatpush1.bf16.msra.mxu0 0
    %3043 = vmatprep.subr.bf16.mxu0 0
    %3044 = vmatpush1.bf16.msra.mxu0 0
    %3045 = vmatprep.subr.bf16.mxu0 0
    %3046 = vmatpush1.bf16.msra.mxu0 0
    %3047 = vmatprep.subr.bf16.mxu0 0
    %3048 = vmatpush1.bf16.msra.mxu0 0
    %3049 = vmatprep.subr.bf16.mxu0 0
    %3050 = vmatpush1.bf16.msra.mxu0 0
    %3051 = vmatprep.subr.bf16.mxu0 0
    %3052 = vmatpush1.bf16.msra.mxu0 0
    %3053 = vmatprep.subr.bf16.mxu0 0
    %3054 = vmatpush1.bf16.msra.mxu0 0
    %3055 = vmatprep.subr.bf16.mxu0 0
    %3056 = vmatpush1.bf16.msra.mxu0 0
    %3057 = vmatprep.mubr.bf16.mxu0 0
    %3058 = vmatmul.mubr.bf16.gmra.mrb[0].mxu0 %v3023
    %v3059 = vpop.f32.mrb[0].mxu0
    %v3060 = vadd.f32 0.0, %v3059
    %v3061 = vpop.f32.mrb[0].mxu0
    %v3062 = vpop.f32.mrb[0].mxu0
    %v3063 = vpop.f32.mrb[0].mxu0
    %3064 = vdwg.mxu0
    %v3065 = vpack.c.bf16 %v3060, %v3060
    %3066 = vrot.lane.b32.xlu0 %v2961, 96
    %v3067 = vpop.permute.xlu0 %3066
    %3069 = vrot.lane.b32.xlu0 %v2279, 96
    %v3070 = vpop.permute.xlu0 %3069
    %v3072 = vsel %vm578, %v3067, 0
    %v3075 = vsel %vm578, %v3070, 0
    %3077 = vmatprep.subr.bf16.mxu0 0
    %3078 = vmatpush1.bf16.xpose.msra.mxu0 %v3075
    %3079 = vmatprep.subr.bf16.mxu0 0
    %3080 = vmatpush1.bf16.xpose.msra.mxu0 0
    %3081 = vmatprep.subr.bf16.mxu0 0
    %3082 = vmatpush1.bf16.xpose.msra.mxu0 0
    %3083 = vmatprep.subr.bf16.mxu0 0
    %3084 = vmatpush1.bf16.xpose.msra.mxu0 0
    %3085 = vmatprep.subr.bf16.mxu0 0
    %3086 = vmatpush1.bf16.xpose.msra.mxu0 0
    %3087 = vmatprep.subr.bf16.mxu0 0
    %3088 = vmatpush1.bf16.xpose.msra.mxu0 0
    %3089 = vmatprep.subr.bf16.mxu0 0
    %3090 = vmatpush1.bf16.xpose.msra.mxu0 0
    %3091 = vmatprep.subr.bf16.mxu0 0
    %3092 = vmatpush1.bf16.xpose.msra.mxu0 0
    %3093 = vmatprep.subr.bf16.mxu0 0
    %3094 = vmatpush1.bf16.xpose.msra.mxu0 0
    %3095 = vmatprep.subr.bf16.mxu0 0
    %3096 = vmatpush1.bf16.xpose.msra.mxu0 0
    %3097 = vmatprep.subr.bf16.mxu0 0
    %3098 = vmatpush1.bf16.xpose.msra.mxu0 0
    %3099 = vmatprep.subr.bf16.mxu0 0
    %3100 = vmatpush1.bf16.xpose.msra.mxu0 0
    %3101 = vmatprep.subr.bf16.mxu0 0
    %3102 = vmatpush1.bf16.xpose.msra.mxu0 0
    %3103 = vmatprep.subr.bf16.mxu0 0
    %3104 = vmatpush1.bf16.xpose.msra.mxu0 0
    %3105 = vmatprep.subr.bf16.mxu0 0
    %3106 = vmatpush1.bf16.xpose.msra.mxu0 0
    %3107 = vmatprep.subr.bf16.mxu0 0
    %3108 = vmatpush1.bf16.xpose.msra.mxu0 0
    %3109 = vmatprep.mubr.bf16.mxu0 0
    %3110 = vmatmul.mubr.bf16.gmra.mrb[0].mxu0 %v3072
    %v3111 = vpop.f32.mrb[0].mxu0
    %v3112 = vadd.f32 0.0, %v3111
    %v3113 = vpop.f32.mrb[0].mxu0
    %v3114 = vpop.f32.mrb[0].mxu0
    %v3115 = vpop.f32.mrb[0].mxu0
    %3116 = vdwg.mxu0
    %v3117 = vsel %vm2344, %v3112, -inf
    %3118 = vmax.xlane.f32.xlu0 %v3117
    %v3119 = vpop.xlane.xlu0 %3118
    %v3120 = vsub.f32 %v3112, %v3119
    %v3121 = vmul.f32 %v3120, 1.442695
    %v3122 = vpow.pop %v3121
    %v3123 = vsel %vm2344, %v3122, 0.0
    %3124 = vadd.xlane.f32.xlu0 %v3123
    %v3125 = vpop.xlane.xlu0 %3124
    %v3126 = vrcp.pop %v3125
    %v3127 = vmul.f32 %v3122, %v3126
    %s3128 = scalar_lea.vmem [#allocation26], 40
    %3129 = vst.msk [vmem:[%s3128] sm:$0xff] %vm2344, %v3127
    %v3130 = vpack.c.bf16 %v3127, %v3127
    %3132 = vrot.lane.b32.xlu0 %v2281, 96
    %v3133 = vpop.permute.xlu0 %3132
    %v3136 = vsel %vm2344, %v3130, 0
    %3138 = vmatprep.subr.bf16.mxu0 0
    %3139 = vmatpush1.bf16.msra.mxu0 %v3133
    %3140 = vmatprep.subr.bf16.mxu0 0
    %3141 = vmatpush1.bf16.msra.mxu0 0
    %3142 = vmatprep.subr.bf16.mxu0 0
    %3143 = vmatpush1.bf16.msra.mxu0 0
    %3144 = vmatprep.subr.bf16.mxu0 0
    %3145 = vmatpush1.bf16.msra.mxu0 0
    %3146 = vmatprep.subr.bf16.mxu0 0
    %3147 = vmatpush1.bf16.msra.mxu0 0
    %3148 = vmatprep.subr.bf16.mxu0 0
    %3149 = vmatpush1.bf16.msra.mxu0 0
    %3150 = vmatprep.subr.bf16.mxu0 0
    %3151 = vmatpush1.bf16.msra.mxu0 0
    %3152 = vmatprep.subr.bf16.mxu0 0
    %3153 = vmatpush1.bf16.msra.mxu0 0
    %3154 = vmatprep.subr.bf16.mxu0 0
    %3155 = vmatpush1.bf16.msra.mxu0 0
    %3156 = vmatprep.subr.bf16.mxu0 0
    %3157 = vmatpush1.bf16.msra.mxu0 0
    %3158 = vmatprep.subr.bf16.mxu0 0
    %3159 = vmatpush1.bf16.msra.mxu0 0
    %3160 = vmatprep.subr.bf16.mxu0 0
    %3161 = vmatpush1.bf16.msra.mxu0 0
    %3162 = vmatprep.subr.bf16.mxu0 0
    %3163 = vmatpush1.bf16.msra.mxu0 0
    %3164 = vmatprep.subr.bf16.mxu0 0
    %3165 = vmatpush1.bf16.msra.mxu0 0
    %3166 = vmatprep.subr.bf16.mxu0 0
    %3167 = vmatpush1.bf16.msra.mxu0 0
    %3168 = vmatprep.subr.bf16.mxu0 0
    %3169 = vmatpush1.bf16.msra.mxu0 0
    %3170 = vmatprep.mubr.bf16.mxu0 0
    %3171 = vmatmul.mubr.bf16.gmra.mrb[0].mxu0 %v3136
    %v3172 = vpop.f32.mrb[0].mxu0
    %v3173 = vadd.f32 0.0, %v3172
    %v3174 = vpop.f32.mrb[0].mxu0
    %v3175 = vpop.f32.mrb[0].mxu0
    %v3176 = vpop.f32.mrb[0].mxu0
    %3177 = vdwg.mxu0
    %v3178 = vpack.c.bf16 %v3173, %v3173
    %v3180 = vsel %vm578, %v3178, 0
    %3182 = vmatprep.subr.bf16.mxu0 0
    %3183 = vmatpush1.bf16.msra.mxu0 %v2524
    %3184 = vmatprep.subr.bf16.mxu0 0
    %3185 = vmatpush1.bf16.msra.mxu0 %v2525
    %3186 = vmatprep.subr.bf16.mxu0 0
    %3187 = vmatpush1.bf16.msra.mxu0 0
    %3188 = vmatprep.subr.bf16.mxu0 0
    %3189 = vmatpush1.bf16.msra.mxu0 0
    %3190 = vmatprep.subr.bf16.mxu0 0
    %3191 = vmatpush1.bf16.msra.mxu0 0
    %3192 = vmatprep.subr.bf16.mxu0 0
    %3193 = vmatpush1.bf16.msra.mxu0 0
    %3194 = vmatprep.subr.bf16.mxu0 0
    %3195 = vmatpush1.bf16.msra.mxu0 0
    %3196 = vmatprep.subr.bf16.mxu0 0
    %3197 = vmatpush1.bf16.msra.mxu0 0
    %3198 = vmatprep.subr.bf16.mxu0 0
    %3199 = vmatpush1.bf16.msra.mxu0 0
    %3200 = vmatprep.subr.bf16.mxu0 0
    %3201 = vmatpush1.bf16.msra.mxu0 0
    %3202 = vmatprep.subr.bf16.mxu0 0
    %3203 = vmatpush1.bf16.msra.mxu0 0
    %3204 = vmatprep.subr.bf16.mxu0 0
    %3205 = vmatpush1.bf16.msra.mxu0 0
    %3206 = vmatprep.subr.bf16.mxu0 0
    %3207 = vmatpush1.bf16.msra.mxu0 0
    %3208 = vmatprep.subr.bf16.mxu0 0
    %3209 = vmatpush1.bf16.msra.mxu0 0
    %3210 = vmatprep.subr.bf16.mxu0 0
    %3211 = vmatpush1.bf16.msra.mxu0 0
    %3212 = vmatprep.subr.bf16.mxu0 0
    %3213 = vmatpush1.bf16.msra.mxu0 0
    %3214 = vmatprep.mubr.bf16.mxu0 0
    %3215 = vmatmul.mubr.bf16.gmra.mrb[0].mxu0 %v3180
    %v3216 = vpop.f32.mrb[0].mxu0
    %v3217 = vadd.f32 0.0, %v3216
    %v3218 = vpop.f32.mrb[0].mxu0
    %v3219 = vpop.f32.mrb[0].mxu0
    %v3220 = vpop.f32.mrb[0].mxu0
    %3221 = vdwg.mxu0
    %v3223 = vsel %vm578, %v3065, 0
    %3225 = vmatprep.subr.bf16.mxu0 0
    %3226 = vmatpush1.bf16.msra.mxu0 %v2579
    %3227 = vmatprep.subr.bf16.mxu0 0
    %3228 = vmatpush1.bf16.msra.mxu0 %v2580
    %3229 = vmatprep.subr.bf16.mxu0 0
    %3230 = vmatpush1.bf16.msra.mxu0 0
    %3231 = vmatprep.subr.bf16.mxu0 0
    %3232 = vmatpush1.bf16.msra.mxu0 0
    %3233 = vmatprep.subr.bf16.mxu0 0
    %3234 = vmatpush1.bf16.msra.mxu0 0
    %3235 = vmatprep.subr.bf16.mxu0 0
    %3236 = vmatpush1.bf16.msra.mxu0 0
    %3237 = vmatprep.subr.bf16.mxu0 0
    %3238 = vmatpush1.bf16.msra.mxu0 0
    %3239 = vmatprep.subr.bf16.mxu0 0
    %3240 = vmatpush1.bf16.msra.mxu0 0
    %3241 = vmatprep.subr.bf16.mxu0 0
    %3242 = vmatpush1.bf16.msra.mxu0 0
    %3243 = vmatprep.subr.bf16.mxu0 0
    %3244 = vmatpush1.bf16.msra.mxu0 0
    %3245 = vmatprep.subr.bf16.mxu0 0
    %3246 = vmatpush1.bf16.msra.mxu0 0
    %3247 = vmatprep.subr.bf16.mxu0 0
    %3248 = vmatpush1.bf16.msra.mxu0 0
    %3249 = vmatprep.subr.bf16.mxu0 0
    %3250 = vmatpush1.bf16.msra.mxu0 0
    %3251 = vmatprep.subr.bf16.mxu0 0
    %3252 = vmatpush1.bf16.msra.mxu0 0
    %3253 = vmatprep.subr.bf16.mxu0 0
    %3254 = vmatpush1.bf16.msra.mxu0 0
    %3255 = vmatprep.subr.bf16.mxu0 0
    %3256 = vmatpush1.bf16.msra.mxu0 0
    %3257 = vmatprep.mubr.bf16.mxu0 0
    %3258 = vmatmul.mubr.bf16.gmra.mrb[0].mxu0 %v3223
    %v3259 = vpop.f32.mrb[0].mxu0
    %v3260 = vadd.f32 %v3217, %v3259
    %v3261 = vpop.f32.mrb[0].mxu0
    %v3262 = vpop.f32.mrb[0].mxu0
    %v3263 = vpop.f32.mrb[0].mxu0
    %3264 = vdwg.mxu0
    %3265 = vrot.lane.b32.xlu0 %v2961, 64
    %v3266 = vpop.permute.xlu0 %3265
    %3267 = vrot.lane.b32.xlu0 %v2279, 64
    %v3268 = vpop.permute.xlu0 %3267
    %v3270 = vsel %vm578, %v3266, 0
    %v3273 = vsel %vm578, %v3268, 0
    %3275 = vmatprep.subr.bf16.mxu0 0
    %3276 = vmatpush1.bf16.xpose.msra.mxu0 %v3273
    %3277 = vmatprep.subr.bf16.mxu0 0
    %3278 = vmatpush1.bf16.xpose.msra.mxu0 0
    %3279 = vmatprep.subr.bf16.mxu0 0
    %3280 = vmatpush1.bf16.xpose.msra.mxu0 0
    %3281 = vmatprep.subr.bf16.mxu0 0
    %3282 = vmatpush1.bf16.xpose.msra.mxu0 0
    %3283 = vmatprep.subr.bf16.mxu0 0
    %3284 = vmatpush1.bf16.xpose.msra.mxu0 0
    %3285 = vmatprep.subr.bf16.mxu0 0
    %3286 = vmatpush1.bf16.xpose.msra.mxu0 0
    %3287 = vmatprep.subr.bf16.mxu0 0
    %3288 = vmatpush1.bf16.xpose.msra.mxu0 0
    %3289 = vmatprep.subr.bf16.mxu0 0
    %3290 = vmatpush1.bf16.xpose.msra.mxu0 0
    %3291 = vmatprep.subr.bf16.mxu0 0
    %3292 = vmatpush1.bf16.xpose.msra.mxu0 0
    %3293 = vmatprep.subr.bf16.mxu0 0
    %3294 = vmatpush1.bf16.xpose.msra.mxu0 0
    %3295 = vmatprep.subr.bf16.mxu0 0
    %3296 = vmatpush1.bf16.xpose.msra.mxu0 0
    %3297 = vmatprep.subr.bf16.mxu0 0
    %3298 = vmatpush1.bf16.xpose.msra.mxu0 0
    %3299 = vmatprep.subr.bf16.mxu0 0
    %3300 = vmatpush1.bf16.xpose.msra.mxu0 0
    %3301 = vmatprep.subr.bf16.mxu0 0
    %3302 = vmatpush1.bf16.xpose.msra.mxu0 0
    %3303 = vmatprep.subr.bf16.mxu0 0
    %3304 = vmatpush1.bf16.xpose.msra.mxu0 0
    %3305 = vmatprep.subr.bf16.mxu0 0
    %3306 = vmatpush1.bf16.xpose.msra.mxu0 0
    %3307 = vmatprep.mubr.bf16.mxu0 0
    %3308 = vmatmul.mubr.bf16.gmra.mrb[0].mxu0 %v3270
    %v3309 = vpop.f32.mrb[0].mxu0
    %v3310 = vadd.f32 0.0, %v3309
    %v3311 = vpop.f32.mrb[0].mxu0
    %v3312 = vpop.f32.mrb[0].mxu0
    %v3313 = vpop.f32.mrb[0].mxu0
    %3314 = vdwg.mxu0
    %v3315 = vsel %vm2344, %v3310, -inf
    %3316 = vmax.xlane.f32.xlu0 %v3315
    %v3317 = vpop.xlane.xlu0 %3316
    %v3318 = vsub.f32 %v3310, %v3317
    %v3319 = vmul.f32 %v3318, 1.442695
    %v3320 = vpow.pop %v3319
    %v3321 = vsel %vm2344, %v3320, 0.0
    %3322 = vadd.xlane.f32.xlu0 %v3321
    %v3323 = vpop.xlane.xlu0 %3322
    %v3324 = vrcp.pop %v3323
    %v3325 = vmul.f32 %v3320, %v3324
    %s3326 = scalar_lea.vmem [#allocation26], 48
    %3327 = vst.msk [vmem:[%s3326] sm:$0xff] %vm2344, %v3325
    %v3328 = vpack.c.bf16 %v3325, %v3325
    %3329 = vrot.lane.b32.xlu0 %v2281, 64
    %v3330 = vpop.permute.xlu0 %3329
    %v3333 = vsel %vm2344, %v3328, 0
    %3335 = vmatprep.subr.bf16.mxu0 0
    %3336 = vmatpush1.bf16.msra.mxu0 %v3330
    %3337 = vmatprep.subr.bf16.mxu0 0
    %3338 = vmatpush1.bf16.msra.mxu0 0
    %3339 = vmatprep.subr.bf16.mxu0 0
    %3340 = vmatpush1.bf16.msra.mxu0 0
    %3341 = vmatprep.subr.bf16.mxu0 0
    %3342 = vmatpush1.bf16.msra.mxu0 0
    %3343 = vmatprep.subr.bf16.mxu0 0
    %3344 = vmatpush1.bf16.msra.mxu0 0
    %3345 = vmatprep.subr.bf16.mxu0 0
    %3346 = vmatpush1.bf16.msra.mxu0 0
    %3347 = vmatprep.subr.bf16.mxu0 0
    %3348 = vmatpush1.bf16.msra.mxu0 0
    %3349 = vmatprep.subr.bf16.mxu0 0
    %3350 = vmatpush1.bf16.msra.mxu0 0
    %3351 = vmatprep.subr.bf16.mxu0 0
    %3352 = vmatpush1.bf16.msra.mxu0 0
    %3353 = vmatprep.subr.bf16.mxu0 0
    %3354 = vmatpush1.bf16.msra.mxu0 0
    %3355 = vmatprep.subr.bf16.mxu0 0
    %3356 = vmatpush1.bf16.msra.mxu0 0
    %3357 = vmatprep.subr.bf16.mxu0 0
    %3358 = vmatpush1.bf16.msra.mxu0 0
    %3359 = vmatprep.subr.bf16.mxu0 0
    %3360 = vmatpush1.bf16.msra.mxu0 0
    %3361 = vmatprep.subr.bf16.mxu0 0
    %3362 = vmatpush1.bf16.msra.mxu0 0
    %3363 = vmatprep.subr.bf16.mxu0 0
    %3364 = vmatpush1.bf16.msra.mxu0 0
    %3365 = vmatprep.subr.bf16.mxu0 0
    %3366 = vmatpush1.bf16.msra.mxu0 0
    %3367 = vmatprep.mubr.bf16.mxu0 0
    %3368 = vmatmul.mubr.bf16.gmra.mrb[0].mxu0 %v3333
    %v3369 = vpop.f32.mrb[0].mxu0
    %v3370 = vadd.f32 0.0, %v3369
    %v3371 = vpop.f32.mrb[0].mxu0
    %v3372 = vpop.f32.mrb[0].mxu0
    %v3373 = vpop.f32.mrb[0].mxu0
    %3374 = vdwg.mxu0
    %v3375 = vpack.c.bf16 %v3370, %v3370
    %v3377 = vsel %vm578, %v3375, 0
    %3379 = vmatprep.subr.bf16.mxu0 0
    %3380 = vmatpush1.bf16.msra.mxu0 %v2745
    %3381 = vmatprep.subr.bf16.mxu0 0
    %3382 = vmatpush1.bf16.msra.mxu0 %v2746
    %3383 = vmatprep.subr.bf16.mxu0 0
    %3384 = vmatpush1.bf16.msra.mxu0 0
    %3385 = vmatprep.subr.bf16.mxu0 0
    %3386 = vmatpush1.bf16.msra.mxu0 0
    %3387 = vmatprep.subr.bf16.mxu0 0
    %3388 = vmatpush1.bf16.msra.mxu0 0
    %3389 = vmatprep.subr.bf16.mxu0 0
    %3390 = vmatpush1.bf16.msra.mxu0 0
    %3391 = vmatprep.subr.bf16.mxu0 0
    %3392 = vmatpush1.bf16.msra.mxu0 0
    %3393 = vmatprep.subr.bf16.mxu0 0
    %3394 = vmatpush1.bf16.msra.mxu0 0
    %3395 = vmatprep.subr.bf16.mxu0 0
    %3396 = vmatpush1.bf16.msra.mxu0 0
    %3397 = vmatprep.subr.bf16.mxu0 0
    %3398 = vmatpush1.bf16.msra.mxu0 0
    %3399 = vmatprep.subr.bf16.mxu0 0
    %3400 = vmatpush1.bf16.msra.mxu0 0
    %3401 = vmatprep.subr.bf16.mxu0 0
    %3402 = vmatpush1.bf16.msra.mxu0 0
    %3403 = vmatprep.subr.bf16.mxu0 0
    %3404 = vmatpush1.bf16.msra.mxu0 0
    %3405 = vmatprep.subr.bf16.mxu0 0
    %3406 = vmatpush1.bf16.msra.mxu0 0
    %3407 = vmatprep.subr.bf16.mxu0 0
    %3408 = vmatpush1.bf16.msra.mxu0 0
    %3409 = vmatprep.subr.bf16.mxu0 0
    %3410 = vmatpush1.bf16.msra.mxu0 0
    %3411 = vmatprep.mubr.bf16.mxu0 0
    %3412 = vmatmul.mubr.bf16.gmra.mrb[0].mxu0 %v3377
    %v3413 = vpop.f32.mrb[0].mxu0
    %v3414 = vadd.f32 0.0, %v3413
    %v3415 = vpop.f32.mrb[0].mxu0
    %v3416 = vpop.f32.mrb[0].mxu0
    %v3417 = vpop.f32.mrb[0].mxu0
    %3418 = vdwg.mxu0
    %v3419 = vadd.f32 %v3260, %v3414
    %3420 = vrot.lane.b32.xlu0 %v2961, 32
    %v3421 = vpop.permute.xlu0 %3420
    %3422 = vrot.lane.b32.xlu0 %v2279, 32
    %v3423 = vpop.permute.xlu0 %3422
    %v3425 = vsel %vm578, %v3421, 0
    %v3428 = vsel %vm578, %v3423, 0
    %3430 = vmatprep.subr.bf16.mxu0 0
    %3431 = vmatpush1.bf16.xpose.msra.mxu0 %v3428
    %3432 = vmatprep.subr.bf16.mxu0 0
    %3433 = vmatpush1.bf16.xpose.msra.mxu0 0
    %3434 = vmatprep.subr.bf16.mxu0 0
    %3435 = vmatpush1.bf16.xpose.msra.mxu0 0
    %3436 = vmatprep.subr.bf16.mxu0 0
    %3437 = vmatpush1.bf16.xpose.msra.mxu0 0
    %3438 = vmatprep.subr.bf16.mxu0 0
    %3439 = vmatpush1.bf16.xpose.msra.mxu0 0
    %3440 = vmatprep.subr.bf16.mxu0 0
    %3441 = vmatpush1.bf16.xpose.msra.mxu0 0
    %3442 = vmatprep.subr.bf16.mxu0 0
    %3443 = vmatpush1.bf16.xpose.msra.mxu0 0
    %3444 = vmatprep.subr.bf16.mxu0 0
    %3445 = vmatpush1.bf16.xpose.msra.mxu0 0
    %3446 = vmatprep.subr.bf16.mxu0 0
    %3447 = vmatpush1.bf16.xpose.msra.mxu0 0
    %3448 = vmatprep.subr.bf16.mxu0 0
    %3449 = vmatpush1.bf16.xpose.msra.mxu0 0
    %3450 = vmatprep.subr.bf16.mxu0 0
    %3451 = vmatpush1.bf16.xpose.msra.mxu0 0
    %3452 = vmatprep.subr.bf16.mxu0 0
    %3453 = vmatpush1.bf16.xpose.msra.mxu0 0
    %3454 = vmatprep.subr.bf16.mxu0 0
    %3455 = vmatpush1.bf16.xpose.msra.mxu0 0
    %3456 = vmatprep.subr.bf16.mxu0 0
    %3457 = vmatpush1.bf16.xpose.msra.mxu0 0
    %3458 = vmatprep.subr.bf16.mxu0 0
    %3459 = vmatpush1.bf16.xpose.msra.mxu0 0
    %3460 = vmatprep.subr.bf16.mxu0 0
    %3461 = vmatpush1.bf16.xpose.msra.mxu0 0
    %3462 = vmatprep.mubr.bf16.mxu0 0
    %3463 = vmatmul.mubr.bf16.gmra.mrb[0].mxu0 %v3425
    %v3464 = vpop.f32.mrb[0].mxu0
    %v3465 = vadd.f32 0.0, %v3464
    %v3466 = vpop.f32.mrb[0].mxu0
    %v3467 = vpop.f32.mrb[0].mxu0
    %v3468 = vpop.f32.mrb[0].mxu0
    %3469 = vdwg.mxu0
    %v3470 = vsel %vm2344, %v3465, -inf
    %3471 = vmax.xlane.f32.xlu0 %v3470
    %v3472 = vpop.xlane.xlu0 %3471
    %v3473 = vsub.f32 %v3465, %v3472
    %v3474 = vmul.f32 %v3473, 1.442695
    %v3475 = vpow.pop %v3474
    %v3476 = vsel %vm2344, %v3475, 0.0
    %3477 = vadd.xlane.f32.xlu0 %v3476
    %v3478 = vpop.xlane.xlu0 %3477
    %v3479 = vrcp.pop %v3478
    %v3480 = vmul.f32 %v3475, %v3479
    %s3481 = scalar_lea.vmem [#allocation26], 56
    %3482 = vst.msk [vmem:[%s3481] sm:$0xff] %vm2344, %v3480
    %v3483 = vpack.c.bf16 %v3480, %v3480
    %3484 = vrot.lane.b32.xlu0 %v2281, 32
    %v3485 = vpop.permute.xlu0 %3484
    %v3488 = vsel %vm2344, %v3483, 0
    %3490 = vmatprep.subr.bf16.mxu0 0
    %3491 = vmatpush1.bf16.msra.mxu0 %v3485
    %3492 = vmatprep.subr.bf16.mxu0 0
    %3493 = vmatpush1.bf16.msra.mxu0 0
    %3494 = vmatprep.subr.bf16.mxu0 0
    %3495 = vmatpush1.bf16.msra.mxu0 0
    %3496 = vmatprep.subr.bf16.mxu0 0
    %3497 = vmatpush1.bf16.msra.mxu0 0
    %3498 = vmatprep.subr.bf16.mxu0 0
    %3499 = vmatpush1.bf16.msra.mxu0 0
    %3500 = vmatprep.subr.bf16.mxu0 0
    %3501 = vmatpush1.bf16.msra.mxu0 0
    %3502 = vmatprep.subr.bf16.mxu0 0
    %3503 = vmatpush1.bf16.msra.mxu0 0
    %3504 = vmatprep.subr.bf16.mxu0 0
    %3505 = vmatpush1.bf16.msra.mxu0 0
    %3506 = vmatprep.subr.bf16.mxu0 0
    %3507 = vmatpush1.bf16.msra.mxu0 0
    %3508 = vmatprep.subr.bf16.mxu0 0
    %3509 = vmatpush1.bf16.msra.mxu0 0
    %3510 = vmatprep.subr.bf16.mxu0 0
    %3511 = vmatpush1.bf16.msra.mxu0 0
    %3512 = vmatprep.subr.bf16.mxu0 0
    %3513 = vmatpush1.bf16.msra.mxu0 0
    %3514 = vmatprep.subr.bf16.mxu0 0
    %3515 = vmatpush1.bf16.msra.mxu0 0
    %3516 = vmatprep.subr.bf16.mxu0 0
    %3517 = vmatpush1.bf16.msra.mxu0 0
    %3518 = vmatprep.subr.bf16.mxu0 0
    %3519 = vmatpush1.bf16.msra.mxu0 0
    %3520 = vmatprep.subr.bf16.mxu0 0
    %3521 = vmatpush1.bf16.msra.mxu0 0
    %3522 = vmatprep.mubr.bf16.mxu0 0
    %3523 = vmatmul.mubr.bf16.gmra.mrb[0].mxu0 %v3488
    %v3524 = vpop.f32.mrb[0].mxu0
    %v3525 = vadd.f32 0.0, %v3524
    %v3526 = vpop.f32.mrb[0].mxu0
    %v3527 = vpop.f32.mrb[0].mxu0
    %v3528 = vpop.f32.mrb[0].mxu0
    %3529 = vdwg.mxu0
    %v3530 = vpack.c.bf16 %v3525, %v3525
    %v3532 = vsel %vm578, %v3530, 0
    %3534 = vmatprep.subr.bf16.mxu0 0
    %3535 = vmatpush1.bf16.msra.mxu0 %v2912
    %3536 = vmatprep.subr.bf16.mxu0 0
    %3537 = vmatpush1.bf16.msra.mxu0 %v2913
    %3538 = vmatprep.subr.bf16.mxu0 0
    %3539 = vmatpush1.bf16.msra.mxu0 0
    %3540 = vmatprep.subr.bf16.mxu0 0
    %3541 = vmatpush1.bf16.msra.mxu0 0
    %3542 = vmatprep.subr.bf16.mxu0 0
    %3543 = vmatpush1.bf16.msra.mxu0 0
    %3544 = vmatprep.subr.bf16.mxu0 0
    %3545 = vmatpush1.bf16.msra.mxu0 0
    %3546 = vmatprep.subr.bf16.mxu0 0
    %3547 = vmatpush1.bf16.msra.mxu0 0
    %3548 = vmatprep.subr.bf16.mxu0 0
    %3549 = vmatpush1.bf16.msra.mxu0 0
    %3550 = vmatprep.subr.bf16.mxu0 0
    %3551 = vmatpush1.bf16.msra.mxu0 0
    %3552 = vmatprep.subr.bf16.mxu0 0
    %3553 = vmatpush1.bf16.msra.mxu0 0
    %3554 = vmatprep.subr.bf16.mxu0 0
    %3555 = vmatpush1.bf16.msra.mxu0 0
    %3556 = vmatprep.subr.bf16.mxu0 0
    %3557 = vmatpush1.bf16.msra.mxu0 0
    %3558 = vmatprep.subr.bf16.mxu0 0
    %3559 = vmatpush1.bf16.msra.mxu0 0
    %3560 = vmatprep.subr.bf16.mxu0 0
    %3561 = vmatpush1.bf16.msra.mxu0 0
    %3562 = vmatprep.subr.bf16.mxu0 0
    %3563 = vmatpush1.bf16.msra.mxu0 0
    %3564 = vmatprep.subr.bf16.mxu0 0
    %3565 = vmatpush1.bf16.msra.mxu0 0
    %3566 = vmatprep.mubr.bf16.mxu0 0
    %3567 = vmatmul.mubr.bf16.gmra.mrb[0].mxu0 %v3532
    %v3568 = vpop.f32.mrb[0].mxu0
    %v3569 = vadd.f32 0.0, %v3568
    %v3570 = vpop.f32.mrb[0].mxu0
    %v3571 = vpop.f32.mrb[0].mxu0
    %v3572 = vpop.f32.mrb[0].mxu0
    %3573 = vdwg.mxu0
    %v3574 = vadd.f32 %v3419, %v3569
    %3575 = vst [vmem:[#allocation2 + $0x8] sm:$0xff] %v3574
    %v3576 = vld [vmem:[#allocation2] sm:$0xff]
    %v3577 = vld [vmem:[#allocation2 + $0x8] sm:$0xff]
    %v3578 = vlaneseq
    %v3579 = vshrl.u32 %v3578, 7
    %v3580 = vsub.s32 7, %v3579
    %v3581 = vrot.slane %v222, %v3580
    %v3582 = vadd.f32 %v3576, %v3581
    %v3583 = vadd.f32 %v3577, %v3581
    %v3584 = vadd.f32 %v3582, %v1927
    %v3585 = vadd.f32 %v3583, %v1928
    %3586 = vadd.xlane.f32.xlu0 %v3584
    %v3587 = vpop.xlane.xlu0 %3586
    %3588 = vadd.xlane.f32.xlu0 %v3585
    %v3589 = vpop.xlane.xlu0 %3588
    %v3590 = vmul.f32 %v3587, %v1898
    %v3591 = vmul.f32 %v3589, %v1898
    %v3592 = vsub.f32 %v3584, %v3590
    %v3593 = vsub.f32 %v3585, %v3591
    %v3594 = vmul.f32 %v3592, %v3592
    %v3595 = vmul.f32 %v3593, %v3593
    %3596 = vadd.xlane.f32.xlu0 %v3594
    %v3597 = vpop.xlane.xlu0 %3596
    %3598 = vadd.xlane.f32.xlu0 %v3595
    %v3599 = vpop.xlane.xlu0 %3598
    %v3600 = vmul.f32 %v3597, %v1898
    %v3601 = vmul.f32 %v3599, %v1898
    %v3602 = vadd.f32 %v3600, 1e-05
    %v3603 = vadd.f32 %v3601, 1e-05
    %v3604 = vrsqrt.pop %v3602
    %v3605 = vrsqrt.pop %v3603
    %v3606 = vmul.f32 %v3592, %v3604
    %v3607 = vmul.f32 %v3593, %v3605
    %v3608 = vlaneseq
    %v3609 = vshrl.u32 %v3608, 7
    %v3610 = vsub.s32 3, %v3609
    %v3611 = vrot.slane %v223, %v3610
    %v3612 = vmul.f32 %v3606, %v3611
    %v3613 = vmul.f32 %v3607, %v3611
    %v3614 = vlaneseq
    %v3615 = vshrl.u32 %v3614, 7
    %v3616 = vsub.s32 4, %v3615
    %v3617 = vrot.slane %v223, %v3616
    %v3618 = vadd.f32 %v3612, %v3617
    %v3619 = vadd.f32 %v3613, %v3617
    %v3620 = vpack.c.bf16 %v3619, %v3618
    %v3621 = vld [vmem:[#allocation20] sm:$0xff]
    %v3622 = vld [vmem:[#allocation20 + $0x8] sm:$0xff]
    %v3623 = vld [vmem:[#allocation20 + $0x10] sm:$0xff]
    %v3624 = vld [vmem:[#allocation20 + $0x18] sm:$0xff]
    %v3625 = vld [vmem:[#allocation20 + $0x20] sm:$0xff]
    %v3626 = vld [vmem:[#allocation20 + $0x28] sm:$0xff]
    %v3627 = vld [vmem:[#allocation20 + $0x30] sm:$0xff]
    %v3628 = vld [vmem:[#allocation20 + $0x38] sm:$0xff]
    %v3629 = vld [vmem:[#allocation20 + $0x40] sm:$0xff]
    %v3630 = vld [vmem:[#allocation20 + $0x48] sm:$0xff]
    %v3631 = vld [vmem:[#allocation20 + $0x50] sm:$0xff]
    %v3632 = vld [vmem:[#allocation20 + $0x58] sm:$0xff]
    %v3633 = vld [vmem:[#allocation20 + $0x60] sm:$0xff]
    %v3634 = vld [vmem:[#allocation20 + $0x68] sm:$0xff]
    %v3635 = vld [vmem:[#allocation20 + $0x70] sm:$0xff]
    %v3636 = vld [vmem:[#allocation20 + $0x78] sm:$0xff]
    %v3637 = vld [vmem:[%s13] sm:$0x3]
    %v3639 = vlaneseq
    %v3640 = vshrl.u32 %v3639, 7
    %v3641 = vsub.s32 0, %v3640
    %v3642 = vrot.slane %v3637, %v3641
    %v3643 = vlaneseq
    %v3644 = vshrl.u32 %v3643, 7
    %v3645 = vsub.s32 1, %v3644
    %v3646 = vrot.slane %v3637, %v3645
    %v3665 = vunpack.c.l.b16 %v3621
    %v3666 = vunpack.c.h.b16 %v3621
    %v3667 = vunpack.c.l.b16 %v3622
    %v3668 = vunpack.c.h.b16 %v3622
    %v3669 = vunpack.c.l.b16 %v3623
    %v3670 = vunpack.c.h.b16 %v3623
    %v3671 = vunpack.c.l.b16 %v3624
    %v3672 = vunpack.c.h.b16 %v3624
    %v3673 = vunpack.c.l.b16 %v3625
    %v3674 = vunpack.c.h.b16 %v3625
    %v3675 = vunpack.c.l.b16 %v3626
    %v3676 = vunpack.c.h.b16 %v3626
    %v3677 = vunpack.c.l.b16 %v3627
    %v3678 = vunpack.c.h.b16 %v3627
    %v3679 = vunpack.c.l.b16 %v3628
    %v3680 = vunpack.c.h.b16 %v3628
    %v3681 = vunpack.c.l.b16 %v3629
    %v3682 = vunpack.c.h.b16 %v3629
    %v3683 = vunpack.c.l.b16 %v3630
    %v3684 = vunpack.c.h.b16 %v3630
    %v3685 = vunpack.c.l.b16 %v3631
    %v3686 = vunpack.c.h.b16 %v3631
    %v3687 = vunpack.c.l.b16 %v3632
    %v3688 = vunpack.c.h.b16 %v3632
    %v3689 = vunpack.c.l.b16 %v3633
    %v3690 = vunpack.c.h.b16 %v3633
    %v3691 = vunpack.c.l.b16 %v3634
    %v3692 = vunpack.c.h.b16 %v3634
    %v3693 = vunpack.c.l.b16 %v3635
    %v3694 = vunpack.c.h.b16 %v3635
    %v3695 = vunpack.c.l.b16 %v3636
    %v3696 = vunpack.c.h.b16 %v3636
    %v3697 = vpack.c.b16 %v3667, %v3665
    %v3698 = vpack.c.b16 %v3668, %v3666
    %v3699 = vpack.c.b16 %v3671, %v3669
    %v3700 = vpack.c.b16 %v3672, %v3670
    %v3701 = vpack.c.b16 %v3675, %v3673
    %v3702 = vpack.c.b16 %v3676, %v3674
    %v3703 = vpack.c.b16 %v3679, %v3677
    %v3704 = vpack.c.b16 %v3680, %v3678
    %v3705 = vpack.c.b16 %v3683, %v3681
    %v3706 = vpack.c.b16 %v3684, %v3682
    %v3707 = vpack.c.b16 %v3687, %v3685
    %v3708 = vpack.c.b16 %v3688, %v3686
    %v3709 = vpack.c.b16 %v3691, %v3689
    %v3710 = vpack.c.b16 %v3692, %v3690
    %v3711 = vpack.c.b16 %v3695, %v3693
    %v3712 = vpack.c.b16 %v3696, %v3694
    %3729 = vmatprep.subr.bf16.mxu0 %v3698
    %3730 = vmatpush1.bf16.msra.mxu0 %v3697
    %3731 = vmatprep.subr.bf16.mxu0 %v3700
    %3732 = vmatpush1.bf16.msra.mxu0 %v3699
    %3733 = vmatprep.subr.bf16.mxu0 %v3702
    %3734 = vmatpush1.bf16.msra.mxu0 %v3701
    %3735 = vmatprep.subr.bf16.mxu0 %v3704
    %3736 = vmatpush1.bf16.msra.mxu0 %v3703
    %3737 = vmatprep.subr.bf16.mxu0 %v3706
    %3738 = vmatpush1.bf16.msra.mxu0 %v3705
    %3739 = vmatprep.subr.bf16.mxu0 %v3708
    %3740 = vmatpush1.bf16.msra.mxu0 %v3707
    %3741 = vmatprep.subr.bf16.mxu0 %v3710
    %3742 = vmatpush1.bf16.msra.mxu0 %v3709
    %3743 = vmatprep.subr.bf16.mxu0 %v3712
    %3744 = vmatpush1.bf16.msra.mxu0 %v3711
    %3745 = vmatprep.subr.bf16.mxu0 0
    %3746 = vmatpush1.bf16.msra.mxu0 0
    %3747 = vmatprep.subr.bf16.mxu0 0
    %3748 = vmatpush1.bf16.msra.mxu0 0
    %3749 = vmatprep.subr.bf16.mxu0 0
    %3750 = vmatpush1.bf16.msra.mxu0 0
    %3751 = vmatprep.subr.bf16.mxu0 0
    %3752 = vmatpush1.bf16.msra.mxu0 0
    %3753 = vmatprep.subr.bf16.mxu0 0
    %3754 = vmatpush1.bf16.msra.mxu0 0
    %3755 = vmatprep.subr.bf16.mxu0 0
    %3756 = vmatpush1.bf16.msra.mxu0 0
    %3757 = vmatprep.subr.bf16.mxu0 0
    %3758 = vmatpush1.bf16.msra.mxu0 0
    %3759 = vmatprep.subr.bf16.mxu0 0
    %3760 = vmatpush1.bf16.msra.mxu0 0
    %3761 = vmatprep.mubr.bf16.mxu0 0
    %3762 = vmatmul.mubr.bf16.gmra.mrb[0].mxu0 %v3620
    %v3763 = vpop.f32.mrb[0].mxu0
    %v3764 = vadd.f32 %v3642, %v3763
    %v3765 = vpop.f32.mrb[0].mxu0
    %v3766 = vadd.f32 %v3646, %v3765
    %v3767 = vpop.f32.mrb[0].mxu0
    %v3768 = vadd.f32 %v3642, %v3767
    %v3769 = vpop.f32.mrb[0].mxu0
    %v3770 = vadd.f32 %v3646, %v3769
    %3771 = vdwg.mxu0
    %v3772 = vmax.f32 %v3764, 0.0
    %v3773 = vmax.f32 %v3766, 0.0
    %v3774 = vmax.f32 %v3768, 0.0
    %v3775 = vmax.f32 %v3770, 0.0
    %v3776 = vpack.c.bf16 %v3774, %v3772
    %v3777 = vpack.c.bf16 %v3775, %v3773
    %v3778 = vld [vmem:[#allocation21] sm:$0xf]
    %v3779 = vld [vmem:[#allocation21 + $0x4] sm:$0xf]
    %v3780 = vld [vmem:[#allocation21 + $0x8] sm:$0xf]
    %v3781 = vld [vmem:[#allocation21 + $0xc] sm:$0xf]
    %v3782 = vld [vmem:[#allocation21 + $0x10] sm:$0xf]
    %v3783 = vld [vmem:[#allocation21 + $0x14] sm:$0xf]
    %v3784 = vld [vmem:[#allocation21 + $0x18] sm:$0xf]
    %v3785 = vld [vmem:[#allocation21 + $0x1c] sm:$0xf]
    %v3786 = vld [vmem:[#allocation21 + $0x20] sm:$0xf]
    %v3787 = vld [vmem:[#allocation21 + $0x24] sm:$0xf]
    %v3788 = vld [vmem:[#allocation21 + $0x28] sm:$0xf]
    %v3789 = vld [vmem:[#allocation21 + $0x2c] sm:$0xf]
    %v3790 = vld [vmem:[#allocation21 + $0x30] sm:$0xf]
    %v3791 = vld [vmem:[#allocation21 + $0x34] sm:$0xf]
    %v3792 = vld [vmem:[#allocation21 + $0x38] sm:$0xf]
    %v3793 = vld [vmem:[#allocation21 + $0x3c] sm:$0xf]
    %v3794 = vld [vmem:[#allocation21 + $0x40] sm:$0xf]
    %v3795 = vld [vmem:[#allocation21 + $0x44] sm:$0xf]
    %v3796 = vld [vmem:[#allocation21 + $0x48] sm:$0xf]
    %v3797 = vld [vmem:[#allocation21 + $0x4c] sm:$0xf]
    %v3798 = vld [vmem:[#allocation21 + $0x50] sm:$0xf]
    %v3799 = vld [vmem:[#allocation21 + $0x54] sm:$0xf]
    %v3800 = vld [vmem:[#allocation21 + $0x58] sm:$0xf]
    %v3801 = vld [vmem:[#allocation21 + $0x5c] sm:$0xf]
    %v3802 = vld [vmem:[#allocation21 + $0x60] sm:$0xf]
    %v3803 = vld [vmem:[#allocation21 + $0x64] sm:$0xf]
    %v3804 = vld [vmem:[#allocation21 + $0x68] sm:$0xf]
    %v3805 = vld [vmem:[#allocation21 + $0x6c] sm:$0xf]
    %v3806 = vld [vmem:[#allocation21 + $0x70] sm:$0xf]
    %v3807 = vld [vmem:[#allocation21 + $0x74] sm:$0xf]
    %v3808 = vld [vmem:[#allocation21 + $0x78] sm:$0xf]
    %v3809 = vld [vmem:[#allocation21 + $0x7c] sm:$0xf]
    %v3810 = vlaneseq
    %v3811 = vshrl.u32 %v3810, 7
    %v3812 = vsub.s32 0, %v3811
    %v3813 = vrot.slane %v223, %v3812
    %v3846 = vunpack.c.l.b16 %v3778
    %v3847 = vunpack.c.l.b16 %v3779
    %v3848 = vunpack.c.l.b16 %v3780
    %v3849 = vunpack.c.l.b16 %v3781
    %v3850 = vunpack.c.l.b16 %v3782
    %v3851 = vunpack.c.l.b16 %v3783
    %v3852 = vunpack.c.l.b16 %v3784
    %v3853 = vunpack.c.l.b16 %v3785
    %v3854 = vunpack.c.l.b16 %v3786
    %v3855 = vunpack.c.l.b16 %v3787
    %v3856 = vunpack.c.l.b16 %v3788
    %v3857 = vunpack.c.l.b16 %v3789
    %v3858 = vunpack.c.l.b16 %v3790
    %v3859 = vunpack.c.l.b16 %v3791
    %v3860 = vunpack.c.l.b16 %v3792
    %v3861 = vunpack.c.l.b16 %v3793
    %v3862 = vunpack.c.l.b16 %v3794
    %v3863 = vunpack.c.l.b16 %v3795
    %v3864 = vunpack.c.l.b16 %v3796
    %v3865 = vunpack.c.l.b16 %v3797
    %v3866 = vunpack.c.l.b16 %v3798
    %v3867 = vunpack.c.l.b16 %v3799
    %v3868 = vunpack.c.l.b16 %v3800
    %v3869 = vunpack.c.l.b16 %v3801
    %v3870 = vunpack.c.l.b16 %v3802
    %v3871 = vunpack.c.l.b16 %v3803
    %v3872 = vunpack.c.l.b16 %v3804
    %v3873 = vunpack.c.l.b16 %v3805
    %v3874 = vunpack.c.l.b16 %v3806
    %v3875 = vunpack.c.l.b16 %v3807
    %v3876 = vunpack.c.l.b16 %v3808
    %v3877 = vunpack.c.l.b16 %v3809
    %v3878 = vpack.c.b16 %v3847, %v3846
    %v3879 = vpack.c.b16 %v3849, %v3848
    %v3880 = vpack.c.b16 %v3851, %v3850
    %v3881 = vpack.c.b16 %v3853, %v3852
    %v3882 = vpack.c.b16 %v3855, %v3854
    %v3883 = vpack.c.b16 %v3857, %v3856
    %v3884 = vpack.c.b16 %v3859, %v3858
    %v3885 = vpack.c.b16 %v3861, %v3860
    %v3886 = vpack.c.b16 %v3863, %v3862
    %v3887 = vpack.c.b16 %v3865, %v3864
    %v3888 = vpack.c.b16 %v3867, %v3866
    %v3889 = vpack.c.b16 %v3869, %v3868
    %v3890 = vpack.c.b16 %v3871, %v3870
    %v3891 = vpack.c.b16 %v3873, %v3872
    %v3892 = vpack.c.b16 %v3875, %v3874
    %v3893 = vpack.c.b16 %v3877, %v3876
    %3910 = vmatprep.subr.bf16.mxu0 0
    %3911 = vmatpush1.bf16.msra.mxu0 %v3878
    %3912 = vmatprep.subr.bf16.mxu0 0
    %3913 = vmatpush1.bf16.msra.mxu0 %v3879
    %3914 = vmatprep.subr.bf16.mxu0 0
    %3915 = vmatpush1.bf16.msra.mxu0 %v3880
    %3916 = vmatprep.subr.bf16.mxu0 0
    %3917 = vmatpush1.bf16.msra.mxu0 %v3881
    %3918 = vmatprep.subr.bf16.mxu0 0
    %3919 = vmatpush1.bf16.msra.mxu0 %v3882
    %3920 = vmatprep.subr.bf16.mxu0 0
    %3921 = vmatpush1.bf16.msra.mxu0 %v3883
    %3922 = vmatprep.subr.bf16.mxu0 0
    %3923 = vmatpush1.bf16.msra.mxu0 %v3884
    %3924 = vmatprep.subr.bf16.mxu0 0
    %3925 = vmatpush1.bf16.msra.mxu0 %v3885
    %3926 = vmatprep.subr.bf16.mxu0 0
    %3927 = vmatpush1.bf16.msra.mxu0 %v3886
    %3928 = vmatprep.subr.bf16.mxu0 0
    %3929 = vmatpush1.bf16.msra.mxu0 %v3887
    %3930 = vmatprep.subr.bf16.mxu0 0
    %3931 = vmatpush1.bf16.msra.mxu0 %v3888
    %3932 = vmatprep.subr.bf16.mxu0 0
    %3933 = vmatpush1.bf16.msra.mxu0 %v3889
    %3934 = vmatprep.subr.bf16.mxu0 0
    %3935 = vmatpush1.bf16.msra.mxu0 %v3890
    %3936 = vmatprep.subr.bf16.mxu0 0
    %3937 = vmatpush1.bf16.msra.mxu0 %v3891
    %3938 = vmatprep.subr.bf16.mxu0 0
    %3939 = vmatpush1.bf16.msra.mxu0 %v3892
    %3940 = vmatprep.subr.bf16.mxu0 0
    %3941 = vmatpush1.bf16.msra.mxu0 %v3893
    %3942 = vmatprep.mubr.bf16.mxu0 %v3777
    %3943 = vmatmul.mubr.bf16.gmra.mrb[0].mxu0 %v3776
    %v3944 = vpop.f32.mrb[0].mxu0
    %v3945 = vadd.f32 %v3813, %v3944
    %v3946 = vpop.f32.mrb[0].mxu0
    %v3947 = vpop.f32.mrb[0].mxu0
    %v3948 = vadd.f32 %v3813, %v3947
    %v3949 = vpop.f32.mrb[0].mxu0
    %3950 = vdwg.mxu0
    %v3951 = vadd.f32 %v3618, %v3945
    %v3952 = vadd.f32 %v3619, %v3948
    %3953 = vadd.xlane.f32.xlu0 %v3951
    %v3954 = vpop.xlane.xlu0 %3953
    %3955 = vadd.xlane.f32.xlu0 %v3952
    %v3956 = vpop.xlane.xlu0 %3955
    %v3957 = vmul.f32 %v3954, %v1898
    %v3958 = vmul.f32 %v3956, %v1898
    %v3959 = vsub.f32 %v3951, %v3957
    %v3960 = vsub.f32 %v3952, %v3958
    %v3961 = vmul.f32 %v3959, %v3959
    %v3962 = vmul.f32 %v3960, %v3960
    %3963 = vadd.xlane.f32.xlu0 %v3961
    %v3964 = vpop.xlane.xlu0 %3963
    %3965 = vadd.xlane.f32.xlu0 %v3962
    %v3966 = vpop.xlane.xlu0 %3965
    %v3967 = vmul.f32 %v3964, %v1898
    %v3968 = vmul.f32 %v3966, %v1898
    %v3969 = vadd.f32 %v3967, 1e-05
    %v3970 = vadd.f32 %v3968, 1e-05
    %v3971 = vrsqrt.pop %v3969
    %v3972 = vrsqrt.pop %v3970
    %v3973 = vmul.f32 %v3959, %v3971
    %v3974 = vmul.f32 %v3960, %v3972
    %v3975 = vlaneseq
    %v3976 = vshrl.u32 %v3975, 7
    %v3977 = vsub.s32 5, %v3976
    %v3978 = vrot.slane %v223, %v3977
    %v3979 = vmul.f32 %v3973, %v3978
    %v3980 = vmul.f32 %v3974, %v3978
    %v3981 = vlaneseq
    %v3982 = vshrl.u32 %v3981, 7
    %v3983 = vsub.s32 6, %v3982
    %v3984 = vrot.slane %v223, %v3983
    %v3985 = vadd.f32 %v3979, %v3984
    %v3986 = vadd.f32 %v3980, %v3984
    %3987 = vst [vmem:[#allocation23] sm:$0xff] %v3985
    %3988 = vst [vmem:[#allocation23 + $0x8] sm:$0xff] %v3986
    // Predicated region
    $region106: #{tpu_custom_call.1} parent=1 // pred_check
      _
    $region107: #{tpu_custom_call.1} parent=1 // pred_check_branch
      %3990 = sbr.rel (0) target = $region109
    $region108: #{tpu_custom_call.1} parent=1 // pred_region
      %s3992 = ssub.s32 256, 256
      %3993 = vsyncadd [#allocation5], %s3992
      %s3994 = sshll.u32 [#allocation23], 4
      %s3995 = int_to_ptr.vmem [resolvable:$true] %s3994
      %4000 = dma.vmem_to_hbm [thread:$0]  %s3995, 256, %s14, [#allocation5], 128, 128, 8
    $region109: #{tpu_custom_call.1} parent=1 // pred_fallthru
      _
    // Predicated region
    $region110: #{tpu_custom_call.1} parent=1 // pred_check
      _
    $region111: #{tpu_custom_call.1} parent=1 // pred_check_branch
      %4002 = sbr.rel (0) target = $region113
    $region112: #{tpu_custom_call.1} parent=1 // pred_region
      %s4004 = ssub.s32 1024, 1024
      %4005 = vsyncadd [#allocation25], %s4004
      %s4006 = sshll.u32 [#allocation24], 4
      %s4007 = int_to_ptr.vmem [resolvable:$true] %s4006
      %4012 = dma.vmem_to_hbm [thread:$0]  %s4007, 1024, %s15, [#allocation25], 128, 128, 8
    $region113: #{tpu_custom_call.1} parent=1 // pred_fallthru
      _
    // Predicated region
    $region114: #{tpu_custom_call.1} parent=1 // pred_check
      _
    $region115: #{tpu_custom_call.1} parent=1 // pred_check_branch
      %4014 = sbr.rel (0) target = $region117
    $region116: #{tpu_custom_call.1} parent=1 // pred_region
      %s4016 = ssub.s32 1024, 1024
      %4017 = vsyncadd [#allocation25], %s4016
      %s4018 = sshll.u32 [#allocation26], 4
      %s4019 = int_to_ptr.vmem [resolvable:$true] %s4018
      %4024 = dma.vmem_to_hbm [thread:$0]  %s4019, 1024, %s16, [#allocation25], 128, 128, 8
    $region117: #{tpu_custom_call.1} parent=1 // pred_fallthru
      _
    // Predicated region
    $region118: #{tpu_custom_call.1} parent=1 // pred_check
      _
    $region119: #{tpu_custom_call.1} parent=1 // pred_check_branch
      %4026 = sbr.rel (0) target = $region121
    $region120: #{tpu_custom_call.1} parent=1 // pred_region
      %4027 = dma.done [#allocation5], 256
    $region121: #{tpu_custom_call.1} parent=1 // pred_fallthru
      _
    // Predicated region
    $region122: #{tpu_custom_call.1} parent=1 // pred_check
      _
    $region123: #{tpu_custom_call.1} parent=1 // pred_check_branch
      %4029 = sbr.rel (0) target = $region125
    $region124: #{tpu_custom_call.1} parent=1 // pred_region
      %4030 = dma.done [#allocation25], 1024
    $region125: #{tpu_custom_call.1} parent=1 // pred_fallthru
      _
    // Predicated region
    $region126: #{tpu_custom_call.1} parent=1 // pred_check
      _
    $region127: #{tpu_custom_call.1} parent=1 // pred_check_branch
      %4032 = sbr.rel (0) target = $region129
    $region128: #{tpu_custom_call.1} parent=1 // pred_region
      %4033 = dma.done [#allocation25], 1024
    $region129: #{tpu_custom_call.1} parent=1 // pred_fallthru
      _
    %4034 = vsyncpa [#allocation4], 1
    %4035 = vsyncpa [#allocation7], 1
    %4036 = vsyncpa [#allocation10], 1
    %4037 = vsyncpa [#allocation13], 1
    %4038 = vsyncpa [#allocation16], 1
    %4039 = vsyncpa [#allocation19], 1
    %4040 = vsyncpa [#allocation22], 1
    %4041 = vsyncpa [#allocation5], 1
    %4042 = vsyncpa [#allocation25], 1

</llo_original>
